<compile_context>
chip_gen: v7x
topology: tpu7x:2x2x1
jax: 0.10.0
libtpu: 0.0.40
codegen_flags: <defaults>
</compile_context>

<pallas_src>
import jax
import jax.numpy as jnp
from jax.experimental import pallas as pl
from jax.experimental.pallas import tpu as pltpu


LANE = 128    # TPU lane width; hidden/gate/output dims are padded to this
SUBLANE = 8   # f32 sublane tile; batch is padded to this


def _round_up(x, m):
    return ((x + m - 1) // m) * m


# ------------------------- fused Pallas kernel -------------------------

def _make_fused_gru_dense_kernel(T, Bp, Hp, Op, num_layers):
    """Fused (GRU stack + dense head) kernel.

    Ref order: [x, (wih, whh, bih_c, bhn) * L, bd, wd_hbm | out | gi_buf, hcat_buf, wd_vmem, wd_sem]
      x        [T*Bp, I]       time-major flattened input (row = t*Bp + b), Bp sublane-aligned
      wih_l    [in_l, 3*Hp]    gate blocks on 128-lane boundaries, zero-padded
      whh_l    [Hp, 3*Hp]
      bih_c_l  [1, 3*Hp]       b_ih with b_hh's r/z components folded in
      bhn_l    [1, Hp]         b_hh's n component (added inside r*(...) per step)
      bd       [1, Op]
      wd_hbm   [T*Hp, Op]      dense weights, left in HBM (pl.ANY) and DMA'd asynchronously
      out      [Bp, Op]        lane-dense output
      gi_buf   [T*Bp, 3*Hp]    VMEM scratch: hoisted layer-0 input projection
      hcat_buf [Bp, T*Hp]      VMEM scratch: last-layer hidden sequence (lane concat)
      wd_vmem  [T*Hp, Op]      VMEM scratch: async-DMA destination for wd
      wd_sem   DMA semaphore
    """

    def kernel(*refs):
        nl = 4 * num_layers
        x_ref = refs[0]
        layer_refs = refs[1:1 + nl]
        bd_ref = refs[1 + nl]
        wd_hbm = refs[2 + nl]
        out_ref = refs[3 + nl]
        gi_buf = refs[4 + nl]
        hcat_buf = refs[5 + nl]
        wd_vmem = refs[6 + nl]
        wd_sem = refs[7 + nl]

        # Kick off the dense-weight DMA immediately; it is only consumed after the
        # recurrence, so its HBM transfer hides behind the latency-bound GRU chain.
        wd_copy = pltpu.make_async_copy(wd_hbm, wd_vmem, wd_sem)
        wd_copy.start()

        # Hoisted layer-0 input projection: ONE matmul for the whole sequence,
        # off the recurrent critical path (bias already folded into bih_c0).
        wih0 = layer_refs[0]
        bihc0 = layer_refs[2]
        gi_buf[...] = (jnp.dot(x_ref[...], wih0[...],
                               preferred_element_type=jnp.float32)
                       + bihc0[...])

        # Hoist weight loads / bias broadcasts out of the unrolled loop
        # (JAX does not CSE broadcast_in_dim; doing it per step would emit T copies).
        wih_v, whh_v, bihc_b, bhn_b = [], [], [], []
        for l in range(num_layers):
            wih, whh, bihc, bhn = layer_refs[4 * l:4 * l + 4]
            wih_v.append(wih[...])
            whh_v.append(whh[...])
            bihc_b.append(jnp.broadcast_to(bihc[...], (Bp, 3 * Hp)))
            bhn_b.append(jnp.broadcast_to(bhn[...], (Bp, Hp)))

        # Wavefront-interleaved recurrence.  At timestep t, layer l consumes layer l-1's
        # h_t produced earlier in the same iteration; layer l's step t is independent of
        # layer l-1's step t+1, so the LLO scheduler overlaps them (chain ~ T + L - 1).
        # Invariant: padded gate/hidden lanes stay exactly 0 (zero-padded weights/biases,
        # zero initial hidden state); r=z=0.5, n=0 there -> h_pad stays 0.
        h = [jnp.zeros((Bp, Hp), jnp.float32) for _ in range(num_layers)]
        for t in range(T):                                   # fully unrolled (T static)
            for l in range(num_layers):
                if l == 0:
                    gi = gi_buf[t * Bp:(t + 1) * Bp, :]      # aligned 8-row, 384-lane slice
                else:
                    # per-step input projection from the layer below (off h[l-1]'s chain)
                    gi = jnp.dot(h[l - 1], wih_v[l],
                                 preferred_element_type=jnp.float32) + bihc_b[l]
                hp = h[l]
                gh = jnp.dot(hp, whh_v[l], preferred_element_type=jnp.float32)
                # 128-lane-aligned gate blocks -> whole-vreg slices, no relayout.
                r = jax.nn.sigmoid(gi[:, 0:Hp] + gh[:, 0:Hp])
                z = jax.nn.sigmoid(gi[:, Hp:2 * Hp] + gh[:, Hp:2 * Hp])
                n = jnp.tanh(gi[:, 2 * Hp:] + r * (gh[:, 2 * Hp:] + bhn_b[l]))
                h[l] = n + z * (hp - n)
            # lane-aligned full-tile store of the last layer's output for the dense head
            hcat_buf[:, t * Hp:(t + 1) * Hp] = h[num_layers - 1]

        # Dense head: single [Bp, T*Hp] x [T*Hp, Op] matmul, lane-dense store.
        wd_copy.wait()
        out_ref[...] = (jnp.dot(hcat_buf[...], wd_vmem[...],
                                preferred_element_type=jnp.float32)
                        + bd_ref[...])

    return kernel


def _vmem():
    return pl.BlockSpec(memory_space=pltpu.MemorySpace.VMEM)


def make_forward_fn(prepared, batch_size):
    """Builds a jitted forward: src [B, T, I] (batch_first) -> [B, output_sequence_len]."""
    T, Hp, Op, O, L = (prepared[k] for k in ("T", "Hp", "Op", "O", "num_layers"))
    Bp = max(SUBLANE, _round_up(batch_size, SUBLANE))
    kernel = _make_fused_gru_dense_kernel(T, Bp, Hp, Op, L)

    n_vmem_in = 1 + 4 * L + 1                                # x, per-layer params, bd
    in_specs = ([_vmem() for _ in range(n_vmem_in)]
                + [pl.BlockSpec(memory_space=pl.ANY)])       # wd stays in HBM, DMA'd in-kernel

    call = pl.pallas_call(
        kernel,
        out_shape=jax.ShapeDtypeStruct((Bp, Op), jnp.float32),
        in_specs=in_specs,
        out_specs=_vmem(),
        scratch_shapes=[
            pltpu.VMEM((T * Bp, 3 * Hp), jnp.float32),       # hoisted layer-0 GI
            pltpu.VMEM((Bp, T * Hp), jnp.float32),           # last-layer h sequence
            pltpu.VMEM((T * Hp, Op), jnp.float32),           # dense weights (async DMA dst)
            pltpu.SemaphoreType.DMA(()),
        ],
    )
    # TODO(synk): if batch grows, add a leading grid axis over batch blocks with
    # dimension_semantics=("parallel",) so v7x's second TensorCore runs an independent
    # recurrence; at Bp=8 a single core is the right shape (~1.7 MiB VMEM, far under limits).

    @jax.jit
    def forward(src, flat_params):
        assert src.shape[0] == batch_size, "batch size is baked in at trace time"
        assert src.shape[1] == T, "sequence length is baked in at trace time"
        B, T_in, I = src.shape
        src_p = jnp.zeros((Bp, T_in, I), jnp.float32).at[:B].set(src.astype(jnp.float32))
        x = jnp.transpose(src_p, (1, 0, 2)).reshape(T_in * Bp, I)   # row = t*Bp + b
        return call(x, *flat_params)[:batch_size, :O]

    return forward


# ------------------------- one-time parameter repack -------------------------

def prepare_params(params, seq_len):
    """Repack PyTorch-layout GRU/dense weights once into the padded, pre-transposed TPU
    layout (gate blocks on 128-lane boundaries, b_hh r/z folded into b_ih, dense slab)."""
    H = params["gru_layers"][0][1].shape[1]
    O = params["dense_w"].shape[0]
    T = seq_len
    Hp = _round_up(H, LANE)
    Op = _round_up(O, LANE)

    def gate_cols(w):                        # torch [3H, in] -> [in, 3*Hp]
        wt = jnp.asarray(w, jnp.float32).T
        out = jnp.zeros((wt.shape[0], 3 * Hp), jnp.float32)
        for g in range(3):
            out = out.at[:, g * Hp:g * Hp + H].set(wt[:, g * H:(g + 1) * H])
        return out

    def pad_rows(w, rows):
        return jnp.zeros((rows, w.shape[1]), jnp.float32).at[:w.shape[0]].set(w)

    def combined_bias(b_ih, b_hh):           # [1, 3*Hp]: r,z get b_ih+b_hh; n gets b_ih only
        b_ih = jnp.asarray(b_ih, jnp.float32)
        b_hh = jnp.asarray(b_hh, jnp.float32)
        out = jnp.zeros((1, 3 * Hp), jnp.float32)
        out = out.at[0, 0:H].set(b_ih[0:H] + b_hh[0:H])
        out = out.at[0, Hp:Hp + H].set(b_ih[H:2 * H] + b_hh[H:2 * H])
        out = out.at[0, 2 * Hp:2 * Hp + H].set(b_ih[2 * H:3 * H])
        return out

    def n_bias(b_hh):                        # [1, Hp]: b_hn (stays inside r*(...) per step)
        return jnp.zeros((1, Hp), jnp.float32).at[0, :H].set(
            jnp.asarray(b_hh, jnp.float32)[2 * H:3 * H])

    flat = []
    for layer, (w_ih, w_hh, b_ih, b_hh) in enumerate(params["gru_layers"]):
        wih = gate_cols(w_ih)
        if layer > 0:                        # hidden-sized inputs arrive Hp-padded
            wih = pad_rows(wih, Hp)
        whh = pad_rows(gate_cols(w_hh), Hp)
        flat += [wih, whh, combined_bias(b_ih, b_hh), n_bias(b_hh)]

    dense_w = jnp.asarray(params["dense_w"], jnp.float32)    # [O, T*H]
    wd = jnp.zeros((T * Hp, Op), jnp.float32)                # [T*Hp, Op] slab, one matmul
    for t in range(T):
        wd = wd.at[t * Hp:t * Hp + H, :O].set(dense_w[:, t * H:(t + 1) * H].T)
    bd = jnp.zeros((1, Op), jnp.float32).at[0, :O].set(
        jnp.asarray(params["dense_b"], jnp.float32))
    flat += [bd, wd]                                          # wd last -> matches the ANY spec

    return {"flat": tuple(flat), "T": T, "H": H, "Hp": Hp, "O": O, "Op": Op,
            "num_layers": len(params["gru_layers"])}


# ------------------------- pure-JAX reference -------------------------

def rnn_forward_ref(src, params):
    x = jnp.transpose(src, (1, 0, 2))  # [T, B, I]
    for (w_ih, w_hh, b_ih, b_hh) in params["gru_layers"]:
        H = w_hh.shape[1]
        T, B, _ = x.shape
        h = jnp.zeros((B, H), jnp.float32)
        outs = []
        for t in range(T):
            gi = x[t] @ w_ih.T + b_ih
            gh = h @ w_hh.T + b_hh
            r = jax.nn.sigmoid(gi[:, :H] + gh[:, :H])
            z = jax.nn.sigmoid(gi[:, H:2 * H] + gh[:, H:2 * H])
            n = jnp.tanh(gi[:, 2 * H:] + r * gh[:, 2 * H:])
            h = (1.0 - z) * n + z * h
            outs.append(h)
        x = jnp.stack(outs, axis=0)
    rnn_out = jnp.transpose(x, (1, 0, 2))
    flat = rnn_out.reshape(rnn_out.shape[0], -1)
    return flat @ params["dense_w"].T + params["dense_b"]


# ------------------------- parameter init (PyTorch-style) -------------------------

def init_params(key, input_size, hidden_size, num_layers, seq_len, out_len):
    bound = 1.0 / jnp.sqrt(jnp.float32(hidden_size))
    layers = []
    for layer in range(num_layers):
        in_sz = input_size if layer == 0 else hidden_size
        key, k1, k2, k3, k4 = jax.random.split(key, 5)
        w_ih = jax.random.uniform(k1, (3 * hidden_size, in_sz), jnp.float32, -bound, bound)
        w_hh = jax.random.uniform(k2, (3 * hidden_size, hidden_size), jnp.float32, -bound, bound)
        b_ih = jax.random.uniform(k3, (3 * hidden_size,), jnp.float32, -bound, bound)
        b_hh = jax.random.uniform(k4, (3 * hidden_size,), jnp.float32, -bound, bound)
        layers.append((w_ih, w_hh, b_ih, b_hh))
    dense_in = hidden_size * seq_len
    dbound = 1.0 / jnp.sqrt(jnp.float32(dense_in))
    key, k5, k6 = jax.random.split(key, 3)
    dense_w = jax.random.uniform(k5, (out_len, dense_in), jnp.float32, -dbound, dbound)
    dense_b = jax.random.uniform(k6, (out_len,), jnp.float32, -dbound, dbound)
    return {"gru_layers": layers, "dense_w": dense_w, "dense_b": dense_b}


# ------------------------- main -------------------------

if __name__ == "__main__":
    # batch, seq, input, hidden, layers, output_sequence_len
    B, T, I, H, L, O = 2, 8, 16, 32, 2, 4

    key = jax.random.PRNGKey(0)
    key, kx, kp = jax.random.split(key, 3)
    src = jax.random.normal(kx, (B, T, I), jnp.float32)      # [B, T, I] batch_first
    params = init_params(kp, I, H, L, T, O)

    prepared = prepare_params(params, T)                     # one-time repack
    forward = make_forward_fn(prepared, B)

    out = forward(src, prepared["flat"])
    out = jax.block_until_ready(out)

    ref = rnn_forward_ref(src, params)
    assert out.shape == (B, O)
    assert jnp.allclose(out, ref, rtol=1e-3, atol=1e-3), "mismatch vs pure-JAX reference"

    print("KERNEL_OK")
</pallas_src>

<mosaic_0001>
module attributes {stable_mosaic.version = 11 : i64} {
  func.func @kernel(%arg0: memref<64x16xf32, #tpu.memory_space<vmem>>, %arg1: memref<16x384xf32, #tpu.memory_space<vmem>>, %arg2: memref<128x384xf32, #tpu.memory_space<vmem>>, %arg3: memref<1x384xf32, #tpu.memory_space<vmem>>, %arg4: memref<1x128xf32, #tpu.memory_space<vmem>>, %arg5: memref<128x384xf32, #tpu.memory_space<vmem>>, %arg6: memref<128x384xf32, #tpu.memory_space<vmem>>, %arg7: memref<1x384xf32, #tpu.memory_space<vmem>>, %arg8: memref<1x128xf32, #tpu.memory_space<vmem>>, %arg9: memref<1x128xf32, #tpu.memory_space<vmem>>, %arg10: memref<1024x128xf32, #tpu.memory_space<any>>, %arg11: memref<8x128xf32, #tpu.memory_space<vmem>>, %arg12: memref<64x384xf32, #tpu.memory_space<vmem>>, %arg13: memref<8x1024xf32, #tpu.memory_space<vmem>>, %arg14: memref<1024x128xf32, #tpu.memory_space<vmem>>, %arg15: memref<!tpu.dma_semaphore, #tpu.memory_space<semaphore_mem>>) attributes {dimension_semantics = [], scalar_prefetch = 0 : i64, scratch_operands = 4 : i64, tpu.core_type = #tpu.core_type<tc>} {
    tpu.enqueue_dma source(%arg10 : memref<1024x128xf32, #tpu.memory_space<any>>) target(%arg14 : memref<1024x128xf32, #tpu.memory_space<vmem>>) target_semaphore(%arg15 : memref<!tpu.dma_semaphore, #tpu.memory_space<semaphore_mem>>)
    %c0 = arith.constant 0 : index
    %c0_0 = arith.constant 0 : index
    %0 = vector.load %arg0[%c0, %c0_0] : memref<64x16xf32, #tpu.memory_space<vmem>>, vector<64x16xf32>
    %c0_1 = arith.constant 0 : index
    %c0_2 = arith.constant 0 : index
    %1 = vector.load %arg1[%c0_1, %c0_2] : memref<16x384xf32, #tpu.memory_space<vmem>>, vector<16x384xf32>
    %cst = arith.constant dense<0.000000e+00> : vector<64x384xf32>
    %2 = tpu.matmul %0, %1, %cst {dimension_numbers = #tpu.dot_dimension_numbers<[1], [0], [0], [1], [0, 0, 1, 1], [], []>} : vector<64x16xf32>, vector<16x384xf32>, vector<64x384xf32> -> vector<64x384xf32>
    %c0_3 = arith.constant 0 : index
    %c0_4 = arith.constant 0 : index
    %3 = vector.load %arg3[%c0_3, %c0_4] : memref<1x384xf32, #tpu.memory_space<vmem>>, vector<1x384xf32>
    %4 = vector.broadcast %3 : vector<1x384xf32> to vector<64x384xf32>
    %5 = arith.addf %2, %4 : vector<64x384xf32>
    %c0_5 = arith.constant 0 : index
    %c0_6 = arith.constant 0 : index
    %6 = vector.load %arg12[%c0_5, %c0_6] : memref<64x384xf32, #tpu.memory_space<vmem>>, vector<64x384xf32>
    tpu.vector_store %arg12[%c0_5, %c0_6], %5 {strides = array<i32>} : memref<64x384xf32, #tpu.memory_space<vmem>>, vector<64x384xf32>,
    %c0_7 = arith.constant 0 : index
    %c0_8 = arith.constant 0 : index
    %7 = vector.load %arg2[%c0_7, %c0_8] : memref<128x384xf32, #tpu.memory_space<vmem>>, vector<128x384xf32>
    %c0_9 = arith.constant 0 : index
    %c0_10 = arith.constant 0 : index
    %8 = vector.load %arg4[%c0_9, %c0_10] : memref<1x128xf32, #tpu.memory_space<vmem>>, vector<1x128xf32>
    %9 = vector.shape_cast %8 : vector<1x128xf32> to vector<1x128xf32>
    %10 = vector.broadcast %9 : vector<1x128xf32> to vector<8x128xf32>
    %c0_11 = arith.constant 0 : index
    %c0_12 = arith.constant 0 : index
    %11 = vector.load %arg5[%c0_11, %c0_12] : memref<128x384xf32, #tpu.memory_space<vmem>>, vector<128x384xf32>
    %c0_13 = arith.constant 0 : index
    %c0_14 = arith.constant 0 : index
    %12 = vector.load %arg6[%c0_13, %c0_14] : memref<128x384xf32, #tpu.memory_space<vmem>>, vector<128x384xf32>
    %c0_15 = arith.constant 0 : index
    %c0_16 = arith.constant 0 : index
    %13 = vector.load %arg7[%c0_15, %c0_16] : memref<1x384xf32, #tpu.memory_space<vmem>>, vector<1x384xf32>
    %14 = vector.shape_cast %13 : vector<1x384xf32> to vector<1x384xf32>
    %15 = vector.broadcast %14 : vector<1x384xf32> to vector<8x384xf32>
    %c0_17 = arith.constant 0 : index
    %c0_18 = arith.constant 0 : index
    %16 = vector.load %arg8[%c0_17, %c0_18] : memref<1x128xf32, #tpu.memory_space<vmem>>, vector<1x128xf32>
    %17 = vector.shape_cast %16 : vector<1x128xf32> to vector<1x128xf32>
    %18 = vector.broadcast %17 : vector<1x128xf32> to vector<8x128xf32>
    %cst_19 = arith.constant 0.000000e+00 : f32
    %19 = vector.broadcast %cst_19 : f32 to vector<8x128xf32>
    %cst_20 = arith.constant 0.000000e+00 : f32
    %20 = vector.broadcast %cst_20 : f32 to vector<8x128xf32>
    %c0_21 = arith.constant 0 : index
    %c0_22 = arith.constant 0 : index
    %21 = vector.load %arg12[%c0_21, %c0_22] : memref<64x384xf32, #tpu.memory_space<vmem>>, vector<8x384xf32>
    %cst_23 = arith.constant dense<0.000000e+00> : vector<8x384xf32>
    %22 = tpu.matmul %19, %7, %cst_23 {dimension_numbers = #tpu.dot_dimension_numbers<[1], [0], [0], [1], [0, 0, 1, 1], [], []>} : vector<8x128xf32>, vector<128x384xf32>, vector<8x384xf32> -> vector<8x384xf32>
    %23 = vector.extract_strided_slice %21 {offsets = [0, 0], sizes = [8, 128], strides = [1, 1]} : vector<8x384xf32> to vector<8x128xf32>
    %24 = vector.extract_strided_slice %22 {offsets = [0, 0], sizes = [8, 128], strides = [1, 1]} : vector<8x384xf32> to vector<8x128xf32>
    %25 = arith.addf %23, %24 : vector<8x128xf32>
    %26 = arith.negf %25 : vector<8x128xf32>
    %27 = math.exp %26 : vector<8x128xf32>
    %cst_24 = arith.constant 1.000000e+00 : f32
    %28 = vector.broadcast %cst_24 : f32 to vector<8x128xf32>
    %29 = arith.addf %28, %27 : vector<8x128xf32>
    %30 = arith.divf %28, %29 : vector<8x128xf32>
    %31 = vector.extract_strided_slice %21 {offsets = [0, 128], sizes = [8, 128], strides = [1, 1]} : vector<8x384xf32> to vector<8x128xf32>
    %32 = vector.extract_strided_slice %22 {offsets = [0, 128], sizes = [8, 128], strides = [1, 1]} : vector<8x384xf32> to vector<8x128xf32>
    %33 = arith.addf %31, %32 : vector<8x128xf32>
    %34 = arith.negf %33 : vector<8x128xf32>
    %35 = math.exp %34 : vector<8x128xf32>
    %cst_25 = arith.constant 1.000000e+00 : f32
    %36 = vector.broadcast %cst_25 : f32 to vector<8x128xf32>
    %37 = arith.addf %36, %35 : vector<8x128xf32>
    %38 = arith.divf %36, %37 : vector<8x128xf32>
    %39 = vector.extract_strided_slice %21 {offsets = [0, 256], sizes = [8, 128], strides = [1, 1]} : vector<8x384xf32> to vector<8x128xf32>
    %40 = vector.extract_strided_slice %22 {offsets = [0, 256], sizes = [8, 128], strides = [1, 1]} : vector<8x384xf32> to vector<8x128xf32>
    %41 = arith.addf %40, %10 : vector<8x128xf32>
    %42 = arith.mulf %30, %41 : vector<8x128xf32>
    %43 = arith.addf %39, %42 : vector<8x128xf32>
    %44 = math.tanh %43 : vector<8x128xf32>
    %45 = arith.subf %19, %44 : vector<8x128xf32>
    %46 = arith.mulf %38, %45 : vector<8x128xf32>
    %47 = arith.addf %44, %46 : vector<8x128xf32>
    %cst_26 = arith.constant dense<0.000000e+00> : vector<8x384xf32>
    %48 = tpu.matmul %47, %11, %cst_26 {dimension_numbers = #tpu.dot_dimension_numbers<[1], [0], [0], [1], [0, 0, 1, 1], [], []>} : vector<8x128xf32>, vector<128x384xf32>, vector<8x384xf32> -> vector<8x384xf32>
    %49 = arith.addf %48, %15 : vector<8x384xf32>
    %cst_27 = arith.constant dense<0.000000e+00> : vector<8x384xf32>
    %50 = tpu.matmul %20, %12, %cst_27 {dimension_numbers = #tpu.dot_dimension_numbers<[1], [0], [0], [1], [0, 0, 1, 1], [], []>} : vector<8x128xf32>, vector<128x384xf32>, vector<8x384xf32> -> vector<8x384xf32>
    %51 = vector.extract_strided_slice %49 {offsets = [0, 0], sizes = [8, 128], strides = [1, 1]} : vector<8x384xf32> to vector<8x128xf32>
    %52 = vector.extract_strided_slice %50 {offsets = [0, 0], sizes = [8, 128], strides = [1, 1]} : vector<8x384xf32> to vector<8x128xf32>
    %53 = arith.addf %51, %52 : vector<8x128xf32>
    %54 = arith.negf %53 : vector<8x128xf32>
    %55 = math.exp %54 : vector<8x128xf32>
    %cst_28 = arith.constant 1.000000e+00 : f32
    %56 = vector.broadcast %cst_28 : f32 to vector<8x128xf32>
    %57 = arith.addf %56, %55 : vector<8x128xf32>
    %58 = arith.divf %56, %57 : vector<8x128xf32>
    %59 = vector.extract_strided_slice %49 {offsets = [0, 128], sizes = [8, 128], strides = [1, 1]} : vector<8x384xf32> to vector<8x128xf32>
    %60 = vector.extract_strided_slice %50 {offsets = [0, 128], sizes = [8, 128], strides = [1, 1]} : vector<8x384xf32> to vector<8x128xf32>
    %61 = arith.addf %59, %60 : vector<8x128xf32>
    %62 = arith.negf %61 : vector<8x128xf32>
    %63 = math.exp %62 : vector<8x128xf32>
    %cst_29 = arith.constant 1.000000e+00 : f32
    %64 = vector.broadcast %cst_29 : f32 to vector<8x128xf32>
    %65 = arith.addf %64, %63 : vector<8x128xf32>
    %66 = arith.divf %64, %65 : vector<8x128xf32>
    %67 = vector.extract_strided_slice %49 {offsets = [0, 256], sizes = [8, 128], strides = [1, 1]} : vector<8x384xf32> to vector<8x128xf32>
    %68 = vector.extract_strided_slice %50 {offsets = [0, 256], sizes = [8, 128], strides = [1, 1]} : vector<8x384xf32> to vector<8x128xf32>
    %69 = arith.addf %68, %18 : vector<8x128xf32>
    %70 = arith.mulf %58, %69 : vector<8x128xf32>
    %71 = arith.addf %67, %70 : vector<8x128xf32>
    %72 = math.tanh %71 : vector<8x128xf32>
    %73 = arith.subf %20, %72 : vector<8x128xf32>
    %74 = arith.mulf %66, %73 : vector<8x128xf32>
    %75 = arith.addf %72, %74 : vector<8x128xf32>
    %c0_30 = arith.constant 0 : index
    %c0_31 = arith.constant 0 : index
    %76 = vector.load %arg13[%c0_30, %c0_31] : memref<8x1024xf32, #tpu.memory_space<vmem>>, vector<8x128xf32>
    tpu.vector_store %arg13[%c0_30, %c0_31], %75 {strides = array<i32>} : memref<8x1024xf32, #tpu.memory_space<vmem>>, vector<8x128xf32>,
    %c8 = arith.constant 8 : index
    %c0_32 = arith.constant 0 : index
    %77 = vector.load %arg12[%c8, %c0_32] : memref<64x384xf32, #tpu.memory_space<vmem>>, vector<8x384xf32>
    %cst_33 = arith.constant dense<0.000000e+00> : vector<8x384xf32>
    %78 = tpu.matmul %47, %7, %cst_33 {dimension_numbers = #tpu.dot_dimension_numbers<[1], [0], [0], [1], [0, 0, 1, 1], [], []>} : vector<8x128xf32>, vector<128x384xf32>, vector<8x384xf32> -> vector<8x384xf32>
    %79 = vector.extract_strided_slice %77 {offsets = [0, 0], sizes = [8, 128], strides = [1, 1]} : vector<8x384xf32> to vector<8x128xf32>
    %80 = vector.extract_strided_slice %78 {offsets = [0, 0], sizes = [8, 128], strides = [1, 1]} : vector<8x384xf32> to vector<8x128xf32>
    %81 = arith.addf %79, %80 : vector<8x128xf32>
    %82 = arith.negf %81 : vector<8x128xf32>
    %83 = math.exp %82 : vector<8x128xf32>
    %cst_34 = arith.constant 1.000000e+00 : f32
    %84 = vector.broadcast %cst_34 : f32 to vector<8x128xf32>
    %85 = arith.addf %84, %83 : vector<8x128xf32>
    %86 = arith.divf %84, %85 : vector<8x128xf32>
    %87 = vector.extract_strided_slice %77 {offsets = [0, 128], sizes = [8, 128], strides = [1, 1]} : vector<8x384xf32> to vector<8x128xf32>
    %88 = vector.extract_strided_slice %78 {offsets = [0, 128], sizes = [8, 128], strides = [1, 1]} : vector<8x384xf32> to vector<8x128xf32>
    %89 = arith.addf %87, %88 : vector<8x128xf32>
    %90 = arith.negf %89 : vector<8x128xf32>
    %91 = math.exp %90 : vector<8x128xf32>
    %cst_35 = arith.constant 1.000000e+00 : f32
    %92 = vector.broadcast %cst_35 : f32 to vector<8x128xf32>
    %93 = arith.addf %92, %91 : vector<8x128xf32>
    %94 = arith.divf %92, %93 : vector<8x128xf32>
    %95 = vector.extract_strided_slice %77 {offsets = [0, 256], sizes = [8, 128], strides = [1, 1]} : vector<8x384xf32> to vector<8x128xf32>
    %96 = vector.extract_strided_slice %78 {offsets = [0, 256], sizes = [8, 128], strides = [1, 1]} : vector<8x384xf32> to vector<8x128xf32>
    %97 = arith.addf %96, %10 : vector<8x128xf32>
    %98 = arith.mulf %86, %97 : vector<8x128xf32>
    %99 = arith.addf %95, %98 : vector<8x128xf32>
    %100 = math.tanh %99 : vector<8x128xf32>
    %101 = arith.subf %47, %100 : vector<8x128xf32>
    %102 = arith.mulf %94, %101 : vector<8x128xf32>
    %103 = arith.addf %100, %102 : vector<8x128xf32>
    %cst_36 = arith.constant dense<0.000000e+00> : vector<8x384xf32>
    %104 = tpu.matmul %103, %11, %cst_36 {dimension_numbers = #tpu.dot_dimension_numbers<[1], [0], [0], [1], [0, 0, 1, 1], [], []>} : vector<8x128xf32>, vector<128x384xf32>, vector<8x384xf32> -> vector<8x384xf32>
    %105 = arith.addf %104, %15 : vector<8x384xf32>
    %cst_37 = arith.constant dense<0.000000e+00> : vector<8x384xf32>
    %106 = tpu.matmul %75, %12, %cst_37 {dimension_numbers = #tpu.dot_dimension_numbers<[1], [0], [0], [1], [0, 0, 1, 1], [], []>} : vector<8x128xf32>, vector<128x384xf32>, vector<8x384xf32> -> vector<8x384xf32>
    %107 = vector.extract_strided_slice %105 {offsets = [0, 0], sizes = [8, 128], strides = [1, 1]} : vector<8x384xf32> to vector<8x128xf32>
    %108 = vector.extract_strided_slice %106 {offsets = [0, 0], sizes = [8, 128], strides = [1, 1]} : vector<8x384xf32> to vector<8x128xf32>
    %109 = arith.addf %107, %108 : vector<8x128xf32>
    %110 = arith.negf %109 : vector<8x128xf32>
    %111 = math.exp %110 : vector<8x128xf32>
    %cst_38 = arith.constant 1.000000e+00 : f32
    %112 = vector.broadcast %cst_38 : f32 to vector<8x128xf32>
    %113 = arith.addf %112, %111 : vector<8x128xf32>
    %114 = arith.divf %112, %113 : vector<8x128xf32>
    %115 = vector.extract_strided_slice %105 {offsets = [0, 128], sizes = [8, 128], strides = [1, 1]} : vector<8x384xf32> to vector<8x128xf32>
    %116 = vector.extract_strided_slice %106 {offsets = [0, 128], sizes = [8, 128], strides = [1, 1]} : vector<8x384xf32> to vector<8x128xf32>
    %117 = arith.addf %115, %116 : vector<8x128xf32>
    %118 = arith.negf %117 : vector<8x128xf32>
    %119 = math.exp %118 : vector<8x128xf32>
    %cst_39 = arith.constant 1.000000e+00 : f32
    %120 = vector.broadcast %cst_39 : f32 to vector<8x128xf32>
    %121 = arith.addf %120, %119 : vector<8x128xf32>
    %122 = arith.divf %120, %121 : vector<8x128xf32>
    %123 = vector.extract_strided_slice %105 {offsets = [0, 256], sizes = [8, 128], strides = [1, 1]} : vector<8x384xf32> to vector<8x128xf32>
    %124 = vector.extract_strided_slice %106 {offsets = [0, 256], sizes = [8, 128], strides = [1, 1]} : vector<8x384xf32> to vector<8x128xf32>
    %125 = arith.addf %124, %18 : vector<8x128xf32>
    %126 = arith.mulf %114, %125 : vector<8x128xf32>
    %127 = arith.addf %123, %126 : vector<8x128xf32>
    %128 = math.tanh %127 : vector<8x128xf32>
    %129 = arith.subf %75, %128 : vector<8x128xf32>
    %130 = arith.mulf %122, %129 : vector<8x128xf32>
    %131 = arith.addf %128, %130 : vector<8x128xf32>
    %c0_40 = arith.constant 0 : index
    %c128 = arith.constant 128 : index
    %132 = vector.load %arg13[%c0_40, %c128] : memref<8x1024xf32, #tpu.memory_space<vmem>>, vector<8x128xf32>
    tpu.vector_store %arg13[%c0_40, %c128], %131 {strides = array<i32>} : memref<8x1024xf32, #tpu.memory_space<vmem>>, vector<8x128xf32>,
    %c16 = arith.constant 16 : index
    %c0_41 = arith.constant 0 : index
    %133 = vector.load %arg12[%c16, %c0_41] : memref<64x384xf32, #tpu.memory_space<vmem>>, vector<8x384xf32>
    %cst_42 = arith.constant dense<0.000000e+00> : vector<8x384xf32>
    %134 = tpu.matmul %103, %7, %cst_42 {dimension_numbers = #tpu.dot_dimension_numbers<[1], [0], [0], [1], [0, 0, 1, 1], [], []>} : vector<8x128xf32>, vector<128x384xf32>, vector<8x384xf32> -> vector<8x384xf32>
    %135 = vector.extract_strided_slice %133 {offsets = [0, 0], sizes = [8, 128], strides = [1, 1]} : vector<8x384xf32> to vector<8x128xf32>
    %136 = vector.extract_strided_slice %134 {offsets = [0, 0], sizes = [8, 128], strides = [1, 1]} : vector<8x384xf32> to vector<8x128xf32>
    %137 = arith.addf %135, %136 : vector<8x128xf32>
    %138 = arith.negf %137 : vector<8x128xf32>
    %139 = math.exp %138 : vector<8x128xf32>
    %cst_43 = arith.constant 1.000000e+00 : f32
    %140 = vector.broadcast %cst_43 : f32 to vector<8x128xf32>
    %141 = arith.addf %140, %139 : vector<8x128xf32>
    %142 = arith.divf %140, %141 : vector<8x128xf32>
    %143 = vector.extract_strided_slice %133 {offsets = [0, 128], sizes = [8, 128], strides = [1, 1]} : vector<8x384xf32> to vector<8x128xf32>
    %144 = vector.extract_strided_slice %134 {offsets = [0, 128], sizes = [8, 128], strides = [1, 1]} : vector<8x384xf32> to vector<8x128xf32>
    %145 = arith.addf %143, %144 : vector<8x128xf32>
    %146 = arith.negf %145 : vector<8x128xf32>
    %147 = math.exp %146 : vector<8x128xf32>
    %cst_44 = arith.constant 1.000000e+00 : f32
    %148 = vector.broadcast %cst_44 : f32 to vector<8x128xf32>
    %149 = arith.addf %148, %147 : vector<8x128xf32>
    %150 = arith.divf %148, %149 : vector<8x128xf32>
    %151 = vector.extract_strided_slice %133 {offsets = [0, 256], sizes = [8, 128], strides = [1, 1]} : vector<8x384xf32> to vector<8x128xf32>
    %152 = vector.extract_strided_slice %134 {offsets = [0, 256], sizes = [8, 128], strides = [1, 1]} : vector<8x384xf32> to vector<8x128xf32>
    %153 = arith.addf %152, %10 : vector<8x128xf32>
    %154 = arith.mulf %142, %153 : vector<8x128xf32>
    %155 = arith.addf %151, %154 : vector<8x128xf32>
    %156 = math.tanh %155 : vector<8x128xf32>
    %157 = arith.subf %103, %156 : vector<8x128xf32>
    %158 = arith.mulf %150, %157 : vector<8x128xf32>
    %159 = arith.addf %156, %158 : vector<8x128xf32>
    %cst_45 = arith.constant dense<0.000000e+00> : vector<8x384xf32>
    %160 = tpu.matmul %159, %11, %cst_45 {dimension_numbers = #tpu.dot_dimension_numbers<[1], [0], [0], [1], [0, 0, 1, 1], [], []>} : vector<8x128xf32>, vector<128x384xf32>, vector<8x384xf32> -> vector<8x384xf32>
    %161 = arith.addf %160, %15 : vector<8x384xf32>
    %cst_46 = arith.constant dense<0.000000e+00> : vector<8x384xf32>
    %162 = tpu.matmul %131, %12, %cst_46 {dimension_numbers = #tpu.dot_dimension_numbers<[1], [0], [0], [1], [0, 0, 1, 1], [], []>} : vector<8x128xf32>, vector<128x384xf32>, vector<8x384xf32> -> vector<8x384xf32>
    %163 = vector.extract_strided_slice %161 {offsets = [0, 0], sizes = [8, 128], strides = [1, 1]} : vector<8x384xf32> to vector<8x128xf32>
    %164 = vector.extract_strided_slice %162 {offsets = [0, 0], sizes = [8, 128], strides = [1, 1]} : vector<8x384xf32> to vector<8x128xf32>
    %165 = arith.addf %163, %164 : vector<8x128xf32>
    %166 = arith.negf %165 : vector<8x128xf32>
    %167 = math.exp %166 : vector<8x128xf32>
    %cst_47 = arith.constant 1.000000e+00 : f32
    %168 = vector.broadcast %cst_47 : f32 to vector<8x128xf32>
    %169 = arith.addf %168, %167 : vector<8x128xf32>
    %170 = arith.divf %168, %169 : vector<8x128xf32>
    %171 = vector.extract_strided_slice %161 {offsets = [0, 128], sizes = [8, 128], strides = [1, 1]} : vector<8x384xf32> to vector<8x128xf32>
    %172 = vector.extract_strided_slice %162 {offsets = [0, 128], sizes = [8, 128], strides = [1, 1]} : vector<8x384xf32> to vector<8x128xf32>
    %173 = arith.addf %171, %172 : vector<8x128xf32>
    %174 = arith.negf %173 : vector<8x128xf32>
    %175 = math.exp %174 : vector<8x128xf32>
    %cst_48 = arith.constant 1.000000e+00 : f32
    %176 = vector.broadcast %cst_48 : f32 to vector<8x128xf32>
    %177 = arith.addf %176, %175 : vector<8x128xf32>
    %178 = arith.divf %176, %177 : vector<8x128xf32>
    %179 = vector.extract_strided_slice %161 {offsets = [0, 256], sizes = [8, 128], strides = [1, 1]} : vector<8x384xf32> to vector<8x128xf32>
    %180 = vector.extract_strided_slice %162 {offsets = [0, 256], sizes = [8, 128], strides = [1, 1]} : vector<8x384xf32> to vector<8x128xf32>
    %181 = arith.addf %180, %18 : vector<8x128xf32>
    %182 = arith.mulf %170, %181 : vector<8x128xf32>
    %183 = arith.addf %179, %182 : vector<8x128xf32>
    %184 = math.tanh %183 : vector<8x128xf32>
    %185 = arith.subf %131, %184 : vector<8x128xf32>
    %186 = arith.mulf %178, %185 : vector<8x128xf32>
    %187 = arith.addf %184, %186 : vector<8x128xf32>
    %c0_49 = arith.constant 0 : index
    %c256 = arith.constant 256 : index
    %188 = vector.load %arg13[%c0_49, %c256] : memref<8x1024xf32, #tpu.memory_space<vmem>>, vector<8x128xf32>
    tpu.vector_store %arg13[%c0_49, %c256], %187 {strides = array<i32>} : memref<8x1024xf32, #tpu.memory_space<vmem>>, vector<8x128xf32>,
    %c24 = arith.constant 24 : index
    %c0_50 = arith.constant 0 : index
    %189 = vector.load %arg12[%c24, %c0_50] : memref<64x384xf32, #tpu.memory_space<vmem>>, vector<8x384xf32>
    %cst_51 = arith.constant dense<0.000000e+00> : vector<8x384xf32>
    %190 = tpu.matmul %159, %7, %cst_51 {dimension_numbers = #tpu.dot_dimension_numbers<[1], [0], [0], [1], [0, 0, 1, 1], [], []>} : vector<8x128xf32>, vector<128x384xf32>, vector<8x384xf32> -> vector<8x384xf32>
    %191 = vector.extract_strided_slice %189 {offsets = [0, 0], sizes = [8, 128], strides = [1, 1]} : vector<8x384xf32> to vector<8x128xf32>
    %192 = vector.extract_strided_slice %190 {offsets = [0, 0], sizes = [8, 128], strides = [1, 1]} : vector<8x384xf32> to vector<8x128xf32>
    %193 = arith.addf %191, %192 : vector<8x128xf32>
    %194 = arith.negf %193 : vector<8x128xf32>
    %195 = math.exp %194 : vector<8x128xf32>
    %cst_52 = arith.constant 1.000000e+00 : f32
    %196 = vector.broadcast %cst_52 : f32 to vector<8x128xf32>
    %197 = arith.addf %196, %195 : vector<8x128xf32>
    %198 = arith.divf %196, %197 : vector<8x128xf32>
    %199 = vector.extract_strided_slice %189 {offsets = [0, 128], sizes = [8, 128], strides = [1, 1]} : vector<8x384xf32> to vector<8x128xf32>
    %200 = vector.extract_strided_slice %190 {offsets = [0, 128], sizes = [8, 128], strides = [1, 1]} : vector<8x384xf32> to vector<8x128xf32>
    %201 = arith.addf %199, %200 : vector<8x128xf32>
    %202 = arith.negf %201 : vector<8x128xf32>
    %203 = math.exp %202 : vector<8x128xf32>
    %cst_53 = arith.constant 1.000000e+00 : f32
    %204 = vector.broadcast %cst_53 : f32 to vector<8x128xf32>
    %205 = arith.addf %204, %203 : vector<8x128xf32>
    %206 = arith.divf %204, %205 : vector<8x128xf32>
    %207 = vector.extract_strided_slice %189 {offsets = [0, 256], sizes = [8, 128], strides = [1, 1]} : vector<8x384xf32> to vector<8x128xf32>
    %208 = vector.extract_strided_slice %190 {offsets = [0, 256], sizes = [8, 128], strides = [1, 1]} : vector<8x384xf32> to vector<8x128xf32>
    %209 = arith.addf %208, %10 : vector<8x128xf32>
    %210 = arith.mulf %198, %209 : vector<8x128xf32>
    %211 = arith.addf %207, %210 : vector<8x128xf32>
    %212 = math.tanh %211 : vector<8x128xf32>
    %213 = arith.subf %159, %212 : vector<8x128xf32>
    %214 = arith.mulf %206, %213 : vector<8x128xf32>
    %215 = arith.addf %212, %214 : vector<8x128xf32>
    %cst_54 = arith.constant dense<0.000000e+00> : vector<8x384xf32>
    %216 = tpu.matmul %215, %11, %cst_54 {dimension_numbers = #tpu.dot_dimension_numbers<[1], [0], [0], [1], [0, 0, 1, 1], [], []>} : vector<8x128xf32>, vector<128x384xf32>, vector<8x384xf32> -> vector<8x384xf32>
    %217 = arith.addf %216, %15 : vector<8x384xf32>
    %cst_55 = arith.constant dense<0.000000e+00> : vector<8x384xf32>
    %218 = tpu.matmul %187, %12, %cst_55 {dimension_numbers = #tpu.dot_dimension_numbers<[1], [0], [0], [1], [0, 0, 1, 1], [], []>} : vector<8x128xf32>, vector<128x384xf32>, vector<8x384xf32> -> vector<8x384xf32>
    %219 = vector.extract_strided_slice %217 {offsets = [0, 0], sizes = [8, 128], strides = [1, 1]} : vector<8x384xf32> to vector<8x128xf32>
    %220 = vector.extract_strided_slice %218 {offsets = [0, 0], sizes = [8, 128], strides = [1, 1]} : vector<8x384xf32> to vector<8x128xf32>
    %221 = arith.addf %219, %220 : vector<8x128xf32>
    %222 = arith.negf %221 : vector<8x128xf32>
    %223 = math.exp %222 : vector<8x128xf32>
    %cst_56 = arith.constant 1.000000e+00 : f32
    %224 = vector.broadcast %cst_56 : f32 to vector<8x128xf32>
    %225 = arith.addf %224, %223 : vector<8x128xf32>
    %226 = arith.divf %224, %225 : vector<8x128xf32>
    %227 = vector.extract_strided_slice %217 {offsets = [0, 128], sizes = [8, 128], strides = [1, 1]} : vector<8x384xf32> to vector<8x128xf32>
    %228 = vector.extract_strided_slice %218 {offsets = [0, 128], sizes = [8, 128], strides = [1, 1]} : vector<8x384xf32> to vector<8x128xf32>
    %229 = arith.addf %227, %228 : vector<8x128xf32>
    %230 = arith.negf %229 : vector<8x128xf32>
    %231 = math.exp %230 : vector<8x128xf32>
    %cst_57 = arith.constant 1.000000e+00 : f32
    %232 = vector.broadcast %cst_57 : f32 to vector<8x128xf32>
    %233 = arith.addf %232, %231 : vector<8x128xf32>
    %234 = arith.divf %232, %233 : vector<8x128xf32>
    %235 = vector.extract_strided_slice %217 {offsets = [0, 256], sizes = [8, 128], strides = [1, 1]} : vector<8x384xf32> to vector<8x128xf32>
    %236 = vector.extract_strided_slice %218 {offsets = [0, 256], sizes = [8, 128], strides = [1, 1]} : vector<8x384xf32> to vector<8x128xf32>
    %237 = arith.addf %236, %18 : vector<8x128xf32>
    %238 = arith.mulf %226, %237 : vector<8x128xf32>
    %239 = arith.addf %235, %238 : vector<8x128xf32>
    %240 = math.tanh %239 : vector<8x128xf32>
    %241 = arith.subf %187, %240 : vector<8x128xf32>
    %242 = arith.mulf %234, %241 : vector<8x128xf32>
    %243 = arith.addf %240, %242 : vector<8x128xf32>
    %c0_58 = arith.constant 0 : index
    %c384 = arith.constant 384 : index
    %244 = vector.load %arg13[%c0_58, %c384] : memref<8x1024xf32, #tpu.memory_space<vmem>>, vector<8x128xf32>
    tpu.vector_store %arg13[%c0_58, %c384], %243 {strides = array<i32>} : memref<8x1024xf32, #tpu.memory_space<vmem>>, vector<8x128xf32>,
    %c32 = arith.constant 32 : index
    %c0_59 = arith.constant 0 : index
    %245 = vector.load %arg12[%c32, %c0_59] : memref<64x384xf32, #tpu.memory_space<vmem>>, vector<8x384xf32>
    %cst_60 = arith.constant dense<0.000000e+00> : vector<8x384xf32>
    %246 = tpu.matmul %215, %7, %cst_60 {dimension_numbers = #tpu.dot_dimension_numbers<[1], [0], [0], [1], [0, 0, 1, 1], [], []>} : vector<8x128xf32>, vector<128x384xf32>, vector<8x384xf32> -> vector<8x384xf32>
    %247 = vector.extract_strided_slice %245 {offsets = [0, 0], sizes = [8, 128], strides = [1, 1]} : vector<8x384xf32> to vector<8x128xf32>
    %248 = vector.extract_strided_slice %246 {offsets = [0, 0], sizes = [8, 128], strides = [1, 1]} : vector<8x384xf32> to vector<8x128xf32>
    %249 = arith.addf %247, %248 : vector<8x128xf32>
    %250 = arith.negf %249 : vector<8x128xf32>
    %251 = math.exp %250 : vector<8x128xf32>
    %cst_61 = arith.constant 1.000000e+00 : f32
    %252 = vector.broadcast %cst_61 : f32 to vector<8x128xf32>
    %253 = arith.addf %252, %251 : vector<8x128xf32>
    %254 = arith.divf %252, %253 : vector<8x128xf32>
    %255 = vector.extract_strided_slice %245 {offsets = [0, 128], sizes = [8, 128], strides = [1, 1]} : vector<8x384xf32> to vector<8x128xf32>
    %256 = vector.extract_strided_slice %246 {offsets = [0, 128], sizes = [8, 128], strides = [1, 1]} : vector<8x384xf32> to vector<8x128xf32>
    %257 = arith.addf %255, %256 : vector<8x128xf32>
    %258 = arith.negf %257 : vector<8x128xf32>
    %259 = math.exp %258 : vector<8x128xf32>
    %cst_62 = arith.constant 1.000000e+00 : f32
    %260 = vector.broadcast %cst_62 : f32 to vector<8x128xf32>
    %261 = arith.addf %260, %259 : vector<8x128xf32>
    %262 = arith.divf %260, %261 : vector<8x128xf32>
    %263 = vector.extract_strided_slice %245 {offsets = [0, 256], sizes = [8, 128], strides = [1, 1]} : vector<8x384xf32> to vector<8x128xf32>
    %264 = vector.extract_strided_slice %246 {offsets = [0, 256], sizes = [8, 128], strides = [1, 1]} : vector<8x384xf32> to vector<8x128xf32>
    %265 = arith.addf %264, %10 : vector<8x128xf32>
    %266 = arith.mulf %254, %265 : vector<8x128xf32>
    %267 = arith.addf %263, %266 : vector<8x128xf32>
    %268 = math.tanh %267 : vector<8x128xf32>
    %269 = arith.subf %215, %268 : vector<8x128xf32>
    %270 = arith.mulf %262, %269 : vector<8x128xf32>
    %271 = arith.addf %268, %270 : vector<8x128xf32>
    %cst_63 = arith.constant dense<0.000000e+00> : vector<8x384xf32>
    %272 = tpu.matmul %271, %11, %cst_63 {dimension_numbers = #tpu.dot_dimension_numbers<[1], [0], [0], [1], [0, 0, 1, 1], [], []>} : vector<8x128xf32>, vector<128x384xf32>, vector<8x384xf32> -> vector<8x384xf32>
    %273 = arith.addf %272, %15 : vector<8x384xf32>
    %cst_64 = arith.constant dense<0.000000e+00> : vector<8x384xf32>
    %274 = tpu.matmul %243, %12, %cst_64 {dimension_numbers = #tpu.dot_dimension_numbers<[1], [0], [0], [1], [0, 0, 1, 1], [], []>} : vector<8x128xf32>, vector<128x384xf32>, vector<8x384xf32> -> vector<8x384xf32>
    %275 = vector.extract_strided_slice %273 {offsets = [0, 0], sizes = [8, 128], strides = [1, 1]} : vector<8x384xf32> to vector<8x128xf32>
    %276 = vector.extract_strided_slice %274 {offsets = [0, 0], sizes = [8, 128], strides = [1, 1]} : vector<8x384xf32> to vector<8x128xf32>
    %277 = arith.addf %275, %276 : vector<8x128xf32>
    %278 = arith.negf %277 : vector<8x128xf32>
    %279 = math.exp %278 : vector<8x128xf32>
    %cst_65 = arith.constant 1.000000e+00 : f32
    %280 = vector.broadcast %cst_65 : f32 to vector<8x128xf32>
    %281 = arith.addf %280, %279 : vector<8x128xf32>
    %282 = arith.divf %280, %281 : vector<8x128xf32>
    %283 = vector.extract_strided_slice %273 {offsets = [0, 128], sizes = [8, 128], strides = [1, 1]} : vector<8x384xf32> to vector<8x128xf32>
    %284 = vector.extract_strided_slice %274 {offsets = [0, 128], sizes = [8, 128], strides = [1, 1]} : vector<8x384xf32> to vector<8x128xf32>
    %285 = arith.addf %283, %284 : vector<8x128xf32>
    %286 = arith.negf %285 : vector<8x128xf32>
    %287 = math.exp %286 : vector<8x128xf32>
    %cst_66 = arith.constant 1.000000e+00 : f32
    %288 = vector.broadcast %cst_66 : f32 to vector<8x128xf32>
    %289 = arith.addf %288, %287 : vector<8x128xf32>
    %290 = arith.divf %288, %289 : vector<8x128xf32>
    %291 = vector.extract_strided_slice %273 {offsets = [0, 256], sizes = [8, 128], strides = [1, 1]} : vector<8x384xf32> to vector<8x128xf32>
    %292 = vector.extract_strided_slice %274 {offsets = [0, 256], sizes = [8, 128], strides = [1, 1]} : vector<8x384xf32> to vector<8x128xf32>
    %293 = arith.addf %292, %18 : vector<8x128xf32>
    %294 = arith.mulf %282, %293 : vector<8x128xf32>
    %295 = arith.addf %291, %294 : vector<8x128xf32>
    %296 = math.tanh %295 : vector<8x128xf32>
    %297 = arith.subf %243, %296 : vector<8x128xf32>
    %298 = arith.mulf %290, %297 : vector<8x128xf32>
    %299 = arith.addf %296, %298 : vector<8x128xf32>
    %c0_67 = arith.constant 0 : index
    %c512 = arith.constant 512 : index
    %300 = vector.load %arg13[%c0_67, %c512] : memref<8x1024xf32, #tpu.memory_space<vmem>>, vector<8x128xf32>
    tpu.vector_store %arg13[%c0_67, %c512], %299 {strides = array<i32>} : memref<8x1024xf32, #tpu.memory_space<vmem>>, vector<8x128xf32>,
    %c40 = arith.constant 40 : index
    %c0_68 = arith.constant 0 : index
    %301 = vector.load %arg12[%c40, %c0_68] : memref<64x384xf32, #tpu.memory_space<vmem>>, vector<8x384xf32>
    %cst_69 = arith.constant dense<0.000000e+00> : vector<8x384xf32>
    %302 = tpu.matmul %271, %7, %cst_69 {dimension_numbers = #tpu.dot_dimension_numbers<[1], [0], [0], [1], [0, 0, 1, 1], [], []>} : vector<8x128xf32>, vector<128x384xf32>, vector<8x384xf32> -> vector<8x384xf32>
    %303 = vector.extract_strided_slice %301 {offsets = [0, 0], sizes = [8, 128], strides = [1, 1]} : vector<8x384xf32> to vector<8x128xf32>
    %304 = vector.extract_strided_slice %302 {offsets = [0, 0], sizes = [8, 128], strides = [1, 1]} : vector<8x384xf32> to vector<8x128xf32>
    %305 = arith.addf %303, %304 : vector<8x128xf32>
    %306 = arith.negf %305 : vector<8x128xf32>
    %307 = math.exp %306 : vector<8x128xf32>
    %cst_70 = arith.constant 1.000000e+00 : f32
    %308 = vector.broadcast %cst_70 : f32 to vector<8x128xf32>
    %309 = arith.addf %308, %307 : vector<8x128xf32>
    %310 = arith.divf %308, %309 : vector<8x128xf32>
    %311 = vector.extract_strided_slice %301 {offsets = [0, 128], sizes = [8, 128], strides = [1, 1]} : vector<8x384xf32> to vector<8x128xf32>
    %312 = vector.extract_strided_slice %302 {offsets = [0, 128], sizes = [8, 128], strides = [1, 1]} : vector<8x384xf32> to vector<8x128xf32>
    %313 = arith.addf %311, %312 : vector<8x128xf32>
    %314 = arith.negf %313 : vector<8x128xf32>
    %315 = math.exp %314 : vector<8x128xf32>
    %cst_71 = arith.constant 1.000000e+00 : f32
    %316 = vector.broadcast %cst_71 : f32 to vector<8x128xf32>
    %317 = arith.addf %316, %315 : vector<8x128xf32>
    %318 = arith.divf %316, %317 : vector<8x128xf32>
    %319 = vector.extract_strided_slice %301 {offsets = [0, 256], sizes = [8, 128], strides = [1, 1]} : vector<8x384xf32> to vector<8x128xf32>
    %320 = vector.extract_strided_slice %302 {offsets = [0, 256], sizes = [8, 128], strides = [1, 1]} : vector<8x384xf32> to vector<8x128xf32>
    %321 = arith.addf %320, %10 : vector<8x128xf32>
    %322 = arith.mulf %310, %321 : vector<8x128xf32>
    %323 = arith.addf %319, %322 : vector<8x128xf32>
    %324 = math.tanh %323 : vector<8x128xf32>
    %325 = arith.subf %271, %324 : vector<8x128xf32>
    %326 = arith.mulf %318, %325 : vector<8x128xf32>
    %327 = arith.addf %324, %326 : vector<8x128xf32>
    %cst_72 = arith.constant dense<0.000000e+00> : vector<8x384xf32>
    %328 = tpu.matmul %327, %11, %cst_72 {dimension_numbers = #tpu.dot_dimension_numbers<[1], [0], [0], [1], [0, 0, 1, 1], [], []>} : vector<8x128xf32>, vector<128x384xf32>, vector<8x384xf32> -> vector<8x384xf32>
    %329 = arith.addf %328, %15 : vector<8x384xf32>
    %cst_73 = arith.constant dense<0.000000e+00> : vector<8x384xf32>
    %330 = tpu.matmul %299, %12, %cst_73 {dimension_numbers = #tpu.dot_dimension_numbers<[1], [0], [0], [1], [0, 0, 1, 1], [], []>} : vector<8x128xf32>, vector<128x384xf32>, vector<8x384xf32> -> vector<8x384xf32>
    %331 = vector.extract_strided_slice %329 {offsets = [0, 0], sizes = [8, 128], strides = [1, 1]} : vector<8x384xf32> to vector<8x128xf32>
    %332 = vector.extract_strided_slice %330 {offsets = [0, 0], sizes = [8, 128], strides = [1, 1]} : vector<8x384xf32> to vector<8x128xf32>
    %333 = arith.addf %331, %332 : vector<8x128xf32>
    %334 = arith.negf %333 : vector<8x128xf32>
    %335 = math.exp %334 : vector<8x128xf32>
    %cst_74 = arith.constant 1.000000e+00 : f32
    %336 = vector.broadcast %cst_74 : f32 to vector<8x128xf32>
    %337 = arith.addf %336, %335 : vector<8x128xf32>
    %338 = arith.divf %336, %337 : vector<8x128xf32>
    %339 = vector.extract_strided_slice %329 {offsets = [0, 128], sizes = [8, 128], strides = [1, 1]} : vector<8x384xf32> to vector<8x128xf32>
    %340 = vector.extract_strided_slice %330 {offsets = [0, 128], sizes = [8, 128], strides = [1, 1]} : vector<8x384xf32> to vector<8x128xf32>
    %341 = arith.addf %339, %340 : vector<8x128xf32>
    %342 = arith.negf %341 : vector<8x128xf32>
    %343 = math.exp %342 : vector<8x128xf32>
    %cst_75 = arith.constant 1.000000e+00 : f32
    %344 = vector.broadcast %cst_75 : f32 to vector<8x128xf32>
    %345 = arith.addf %344, %343 : vector<8x128xf32>
    %346 = arith.divf %344, %345 : vector<8x128xf32>
    %347 = vector.extract_strided_slice %329 {offsets = [0, 256], sizes = [8, 128], strides = [1, 1]} : vector<8x384xf32> to vector<8x128xf32>
    %348 = vector.extract_strided_slice %330 {offsets = [0, 256], sizes = [8, 128], strides = [1, 1]} : vector<8x384xf32> to vector<8x128xf32>
    %349 = arith.addf %348, %18 : vector<8x128xf32>
    %350 = arith.mulf %338, %349 : vector<8x128xf32>
    %351 = arith.addf %347, %350 : vector<8x128xf32>
    %352 = math.tanh %351 : vector<8x128xf32>
    %353 = arith.subf %299, %352 : vector<8x128xf32>
    %354 = arith.mulf %346, %353 : vector<8x128xf32>
    %355 = arith.addf %352, %354 : vector<8x128xf32>
    %c0_76 = arith.constant 0 : index
    %c640 = arith.constant 640 : index
    %356 = vector.load %arg13[%c0_76, %c640] : memref<8x1024xf32, #tpu.memory_space<vmem>>, vector<8x128xf32>
    tpu.vector_store %arg13[%c0_76, %c640], %355 {strides = array<i32>} : memref<8x1024xf32, #tpu.memory_space<vmem>>, vector<8x128xf32>,
    %c48 = arith.constant 48 : index
    %c0_77 = arith.constant 0 : index
    %357 = vector.load %arg12[%c48, %c0_77] : memref<64x384xf32, #tpu.memory_space<vmem>>, vector<8x384xf32>
    %cst_78 = arith.constant dense<0.000000e+00> : vector<8x384xf32>
    %358 = tpu.matmul %327, %7, %cst_78 {dimension_numbers = #tpu.dot_dimension_numbers<[1], [0], [0], [1], [0, 0, 1, 1], [], []>} : vector<8x128xf32>, vector<128x384xf32>, vector<8x384xf32> -> vector<8x384xf32>
    %359 = vector.extract_strided_slice %357 {offsets = [0, 0], sizes = [8, 128], strides = [1, 1]} : vector<8x384xf32> to vector<8x128xf32>
    %360 = vector.extract_strided_slice %358 {offsets = [0, 0], sizes = [8, 128], strides = [1, 1]} : vector<8x384xf32> to vector<8x128xf32>
    %361 = arith.addf %359, %360 : vector<8x128xf32>
    %362 = arith.negf %361 : vector<8x128xf32>
    %363 = math.exp %362 : vector<8x128xf32>
    %cst_79 = arith.constant 1.000000e+00 : f32
    %364 = vector.broadcast %cst_79 : f32 to vector<8x128xf32>
    %365 = arith.addf %364, %363 : vector<8x128xf32>
    %366 = arith.divf %364, %365 : vector<8x128xf32>
    %367 = vector.extract_strided_slice %357 {offsets = [0, 128], sizes = [8, 128], strides = [1, 1]} : vector<8x384xf32> to vector<8x128xf32>
    %368 = vector.extract_strided_slice %358 {offsets = [0, 128], sizes = [8, 128], strides = [1, 1]} : vector<8x384xf32> to vector<8x128xf32>
    %369 = arith.addf %367, %368 : vector<8x128xf32>
    %370 = arith.negf %369 : vector<8x128xf32>
    %371 = math.exp %370 : vector<8x128xf32>
    %cst_80 = arith.constant 1.000000e+00 : f32
    %372 = vector.broadcast %cst_80 : f32 to vector<8x128xf32>
    %373 = arith.addf %372, %371 : vector<8x128xf32>
    %374 = arith.divf %372, %373 : vector<8x128xf32>
    %375 = vector.extract_strided_slice %357 {offsets = [0, 256], sizes = [8, 128], strides = [1, 1]} : vector<8x384xf32> to vector<8x128xf32>
    %376 = vector.extract_strided_slice %358 {offsets = [0, 256], sizes = [8, 128], strides = [1, 1]} : vector<8x384xf32> to vector<8x128xf32>
    %377 = arith.addf %376, %10 : vector<8x128xf32>
    %378 = arith.mulf %366, %377 : vector<8x128xf32>
    %379 = arith.addf %375, %378 : vector<8x128xf32>
    %380 = math.tanh %379 : vector<8x128xf32>
    %381 = arith.subf %327, %380 : vector<8x128xf32>
    %382 = arith.mulf %374, %381 : vector<8x128xf32>
    %383 = arith.addf %380, %382 : vector<8x128xf32>
    %cst_81 = arith.constant dense<0.000000e+00> : vector<8x384xf32>
    %384 = tpu.matmul %383, %11, %cst_81 {dimension_numbers = #tpu.dot_dimension_numbers<[1], [0], [0], [1], [0, 0, 1, 1], [], []>} : vector<8x128xf32>, vector<128x384xf32>, vector<8x384xf32> -> vector<8x384xf32>
    %385 = arith.addf %384, %15 : vector<8x384xf32>
    %cst_82 = arith.constant dense<0.000000e+00> : vector<8x384xf32>
    %386 = tpu.matmul %355, %12, %cst_82 {dimension_numbers = #tpu.dot_dimension_numbers<[1], [0], [0], [1], [0, 0, 1, 1], [], []>} : vector<8x128xf32>, vector<128x384xf32>, vector<8x384xf32> -> vector<8x384xf32>
    %387 = vector.extract_strided_slice %385 {offsets = [0, 0], sizes = [8, 128], strides = [1, 1]} : vector<8x384xf32> to vector<8x128xf32>
    %388 = vector.extract_strided_slice %386 {offsets = [0, 0], sizes = [8, 128], strides = [1, 1]} : vector<8x384xf32> to vector<8x128xf32>
    %389 = arith.addf %387, %388 : vector<8x128xf32>
    %390 = arith.negf %389 : vector<8x128xf32>
    %391 = math.exp %390 : vector<8x128xf32>
    %cst_83 = arith.constant 1.000000e+00 : f32
    %392 = vector.broadcast %cst_83 : f32 to vector<8x128xf32>
    %393 = arith.addf %392, %391 : vector<8x128xf32>
    %394 = arith.divf %392, %393 : vector<8x128xf32>
    %395 = vector.extract_strided_slice %385 {offsets = [0, 128], sizes = [8, 128], strides = [1, 1]} : vector<8x384xf32> to vector<8x128xf32>
    %396 = vector.extract_strided_slice %386 {offsets = [0, 128], sizes = [8, 128], strides = [1, 1]} : vector<8x384xf32> to vector<8x128xf32>
    %397 = arith.addf %395, %396 : vector<8x128xf32>
    %398 = arith.negf %397 : vector<8x128xf32>
    %399 = math.exp %398 : vector<8x128xf32>
    %cst_84 = arith.constant 1.000000e+00 : f32
    %400 = vector.broadcast %cst_84 : f32 to vector<8x128xf32>
    %401 = arith.addf %400, %399 : vector<8x128xf32>
    %402 = arith.divf %400, %401 : vector<8x128xf32>
    %403 = vector.extract_strided_slice %385 {offsets = [0, 256], sizes = [8, 128], strides = [1, 1]} : vector<8x384xf32> to vector<8x128xf32>
    %404 = vector.extract_strided_slice %386 {offsets = [0, 256], sizes = [8, 128], strides = [1, 1]} : vector<8x384xf32> to vector<8x128xf32>
    %405 = arith.addf %404, %18 : vector<8x128xf32>
    %406 = arith.mulf %394, %405 : vector<8x128xf32>
    %407 = arith.addf %403, %406 : vector<8x128xf32>
    %408 = math.tanh %407 : vector<8x128xf32>
    %409 = arith.subf %355, %408 : vector<8x128xf32>
    %410 = arith.mulf %402, %409 : vector<8x128xf32>
    %411 = arith.addf %408, %410 : vector<8x128xf32>
    %c0_85 = arith.constant 0 : index
    %c768 = arith.constant 768 : index
    %412 = vector.load %arg13[%c0_85, %c768] : memref<8x1024xf32, #tpu.memory_space<vmem>>, vector<8x128xf32>
    tpu.vector_store %arg13[%c0_85, %c768], %411 {strides = array<i32>} : memref<8x1024xf32, #tpu.memory_space<vmem>>, vector<8x128xf32>,
    %c56 = arith.constant 56 : index
    %c0_86 = arith.constant 0 : index
    %413 = vector.load %arg12[%c56, %c0_86] : memref<64x384xf32, #tpu.memory_space<vmem>>, vector<8x384xf32>
    %cst_87 = arith.constant dense<0.000000e+00> : vector<8x384xf32>
    %414 = tpu.matmul %383, %7, %cst_87 {dimension_numbers = #tpu.dot_dimension_numbers<[1], [0], [0], [1], [0, 0, 1, 1], [], []>} : vector<8x128xf32>, vector<128x384xf32>, vector<8x384xf32> -> vector<8x384xf32>
    %415 = vector.extract_strided_slice %413 {offsets = [0, 0], sizes = [8, 128], strides = [1, 1]} : vector<8x384xf32> to vector<8x128xf32>
    %416 = vector.extract_strided_slice %414 {offsets = [0, 0], sizes = [8, 128], strides = [1, 1]} : vector<8x384xf32> to vector<8x128xf32>
    %417 = arith.addf %415, %416 : vector<8x128xf32>
    %418 = arith.negf %417 : vector<8x128xf32>
    %419 = math.exp %418 : vector<8x128xf32>
    %cst_88 = arith.constant 1.000000e+00 : f32
    %420 = vector.broadcast %cst_88 : f32 to vector<8x128xf32>
    %421 = arith.addf %420, %419 : vector<8x128xf32>
    %422 = arith.divf %420, %421 : vector<8x128xf32>
    %423 = vector.extract_strided_slice %413 {offsets = [0, 128], sizes = [8, 128], strides = [1, 1]} : vector<8x384xf32> to vector<8x128xf32>
    %424 = vector.extract_strided_slice %414 {offsets = [0, 128], sizes = [8, 128], strides = [1, 1]} : vector<8x384xf32> to vector<8x128xf32>
    %425 = arith.addf %423, %424 : vector<8x128xf32>
    %426 = arith.negf %425 : vector<8x128xf32>
    %427 = math.exp %426 : vector<8x128xf32>
    %cst_89 = arith.constant 1.000000e+00 : f32
    %428 = vector.broadcast %cst_89 : f32 to vector<8x128xf32>
    %429 = arith.addf %428, %427 : vector<8x128xf32>
    %430 = arith.divf %428, %429 : vector<8x128xf32>
    %431 = vector.extract_strided_slice %413 {offsets = [0, 256], sizes = [8, 128], strides = [1, 1]} : vector<8x384xf32> to vector<8x128xf32>
    %432 = vector.extract_strided_slice %414 {offsets = [0, 256], sizes = [8, 128], strides = [1, 1]} : vector<8x384xf32> to vector<8x128xf32>
    %433 = arith.addf %432, %10 : vector<8x128xf32>
    %434 = arith.mulf %422, %433 : vector<8x128xf32>
    %435 = arith.addf %431, %434 : vector<8x128xf32>
    %436 = math.tanh %435 : vector<8x128xf32>
    %437 = arith.subf %383, %436 : vector<8x128xf32>
    %438 = arith.mulf %430, %437 : vector<8x128xf32>
    %439 = arith.addf %436, %438 : vector<8x128xf32>
    %cst_90 = arith.constant dense<0.000000e+00> : vector<8x384xf32>
    %440 = tpu.matmul %439, %11, %cst_90 {dimension_numbers = #tpu.dot_dimension_numbers<[1], [0], [0], [1], [0, 0, 1, 1], [], []>} : vector<8x128xf32>, vector<128x384xf32>, vector<8x384xf32> -> vector<8x384xf32>
    %441 = arith.addf %440, %15 : vector<8x384xf32>
    %cst_91 = arith.constant dense<0.000000e+00> : vector<8x384xf32>
    %442 = tpu.matmul %411, %12, %cst_91 {dimension_numbers = #tpu.dot_dimension_numbers<[1], [0], [0], [1], [0, 0, 1, 1], [], []>} : vector<8x128xf32>, vector<128x384xf32>, vector<8x384xf32> -> vector<8x384xf32>
    %443 = vector.extract_strided_slice %441 {offsets = [0, 0], sizes = [8, 128], strides = [1, 1]} : vector<8x384xf32> to vector<8x128xf32>
    %444 = vector.extract_strided_slice %442 {offsets = [0, 0], sizes = [8, 128], strides = [1, 1]} : vector<8x384xf32> to vector<8x128xf32>
    %445 = arith.addf %443, %444 : vector<8x128xf32>
    %446 = arith.negf %445 : vector<8x128xf32>
    %447 = math.exp %446 : vector<8x128xf32>
    %cst_92 = arith.constant 1.000000e+00 : f32
    %448 = vector.broadcast %cst_92 : f32 to vector<8x128xf32>
    %449 = arith.addf %448, %447 : vector<8x128xf32>
    %450 = arith.divf %448, %449 : vector<8x128xf32>
    %451 = vector.extract_strided_slice %441 {offsets = [0, 128], sizes = [8, 128], strides = [1, 1]} : vector<8x384xf32> to vector<8x128xf32>
    %452 = vector.extract_strided_slice %442 {offsets = [0, 128], sizes = [8, 128], strides = [1, 1]} : vector<8x384xf32> to vector<8x128xf32>
    %453 = arith.addf %451, %452 : vector<8x128xf32>
    %454 = arith.negf %453 : vector<8x128xf32>
    %455 = math.exp %454 : vector<8x128xf32>
    %cst_93 = arith.constant 1.000000e+00 : f32
    %456 = vector.broadcast %cst_93 : f32 to vector<8x128xf32>
    %457 = arith.addf %456, %455 : vector<8x128xf32>
    %458 = arith.divf %456, %457 : vector<8x128xf32>
    %459 = vector.extract_strided_slice %441 {offsets = [0, 256], sizes = [8, 128], strides = [1, 1]} : vector<8x384xf32> to vector<8x128xf32>
    %460 = vector.extract_strided_slice %442 {offsets = [0, 256], sizes = [8, 128], strides = [1, 1]} : vector<8x384xf32> to vector<8x128xf32>
    %461 = arith.addf %460, %18 : vector<8x128xf32>
    %462 = arith.mulf %450, %461 : vector<8x128xf32>
    %463 = arith.addf %459, %462 : vector<8x128xf32>
    %464 = math.tanh %463 : vector<8x128xf32>
    %465 = arith.subf %411, %464 : vector<8x128xf32>
    %466 = arith.mulf %458, %465 : vector<8x128xf32>
    %467 = arith.addf %464, %466 : vector<8x128xf32>
    %c0_94 = arith.constant 0 : index
    %c896 = arith.constant 896 : index
    %468 = vector.load %arg13[%c0_94, %c896] : memref<8x1024xf32, #tpu.memory_space<vmem>>, vector<8x128xf32>
    tpu.vector_store %arg13[%c0_94, %c896], %467 {strides = array<i32>} : memref<8x1024xf32, #tpu.memory_space<vmem>>, vector<8x128xf32>,
    tpu.wait_dma2 semaphore(%arg15 : memref<!tpu.dma_semaphore, #tpu.memory_space<semaphore_mem>>) src(%arg10 : memref<1024x128xf32, #tpu.memory_space<any>>) dst(%arg14 : memref<1024x128xf32, #tpu.memory_space<vmem>>)
    %c0_95 = arith.constant 0 : index
    %c0_96 = arith.constant 0 : index
    %469 = vector.load %arg13[%c0_95, %c0_96] : memref<8x1024xf32, #tpu.memory_space<vmem>>, vector<8x1024xf32>
    %c0_97 = arith.constant 0 : index
    %c0_98 = arith.constant 0 : index
    %470 = vector.load %arg14[%c0_97, %c0_98] : memref<1024x128xf32, #tpu.memory_space<vmem>>, vector<1024x128xf32>
    %cst_99 = arith.constant dense<0.000000e+00> : vector<8x128xf32>
    %471 = tpu.matmul %469, %470, %cst_99 {dimension_numbers = #tpu.dot_dimension_numbers<[1], [0], [0], [1], [0, 0, 1, 1], [], []>} : vector<8x1024xf32>, vector<1024x128xf32>, vector<8x128xf32> -> vector<8x128xf32>
    %c0_100 = arith.constant 0 : index
    %c0_101 = arith.constant 0 : index
    %472 = vector.load %arg9[%c0_100, %c0_101] : memref<1x128xf32, #tpu.memory_space<vmem>>, vector<1x128xf32>
    %473 = vector.broadcast %472 : vector<1x128xf32> to vector<8x128xf32>
    %474 = arith.addf %471, %473 : vector<8x128xf32>
    %c0_102 = arith.constant 0 : index
    %c0_103 = arith.constant 0 : index
    %475 = vector.load %arg11[%c0_102, %c0_103] : memref<8x128xf32, #tpu.memory_space<vmem>>, vector<8x128xf32>
    tpu.vector_store %arg11[%c0_102, %c0_103], %474 {strides = array<i32>} : memref<8x128xf32, #tpu.memory_space<vmem>>, vector<8x128xf32>,
    return
  }
}

</mosaic_0001>

<llo_original>
// kernel: forward.1
$region0: #{forward.1}
  #allocation0 [shape = 'u32[]', space=smem, size = 0x4, offset = 0x4, fixed_abs, tag = 'smem constant byte address 0x4 - core index']
  #allocation1 [shape = 'u32[144,128]{1,0:T(1,128)}', space=vmem, size = 0x12000, scoped, tag = 'internal scratch']
  #allocation2 [shape = 'f32[64,384]{1,0:T(8,128)}', space=vmem, size = 0x18000, scoped, tag = 'scratch operand']
  #allocation3 [shape = 'f32[8,1024]{1,0:T(8,128)}', space=vmem, size = 0x8000, scoped, tag = 'scratch operand']
  #allocation4 [shape = 'f32[1024,128]{1,0:T(8,128)}', space=vmem, size = 0x80000, scoped, tag = 'scratch operand']
  #allocation5 [shape = 's32[1]{0}', space=sflag, size = 0x4, scoped, tag = 'scratch operand']
  #allocation11 [shape = 's32[]', space=sflag, size = 0x4, offset = 0, fixed_abs, tag = 'sflag constant byte address 0x0 - dummy sync flag']
  #allocation12 [shape = 's32[]', space=sflag, size = 0x4, offset = 0, fixed_abs, tag = 'sflag constant byte address 0x0 - dummy sync flag']
  #allocation13 [shape = 'u32[]', space=smem, size = 0x4, offset = 0x44, fixed_abs, tag = 'smem constant byte address 0x44 - assertion arg 0']
  #allocation14 [shape = 'u32[]', space=smem, size = 0x4, offset = 0x48, fixed_abs, tag = 'smem constant byte address 0x48 - assertion arg 1']
  %s0 = inlined_call_operand.vmem [shape: f32[64,16], index: 0, kind: input, shape index: {}]
  %s1 = inlined_call_operand.vmem [shape: f32[16,384], index: 1, kind: input, shape index: {}]
  %s2 = inlined_call_operand.hbm [shape: f32[128,384], index: 2, kind: input, shape index: {}]
  %s3 = inlined_call_operand.vmem [shape: f32[1,384], index: 3, kind: input, shape index: {}]
  %s4 = inlined_call_operand.vmem [shape: f32[1,128], index: 4, kind: input, shape index: {}]
  %s5 = inlined_call_operand.hbm [shape: f32[128,384], index: 5, kind: input, shape index: {}]
  %s6 = inlined_call_operand.hbm [shape: f32[128,384], index: 6, kind: input, shape index: {}]
  %s7 = inlined_call_operand.vmem [shape: f32[1,384], index: 7, kind: input, shape index: {}]
  %s8 = inlined_call_operand.vmem [shape: f32[1,128], index: 8, kind: input, shape index: {}]
  %s9 = inlined_call_operand.vmem [shape: f32[1,128], index: 9, kind: input, shape index: {}]
  %s10 = inlined_call_operand.hbm [shape: f32[1024,128], index: 10, kind: input, shape index: {}]
  %s11 = inlined_call_operand.vmem [shape: f32[8,128], index: 11, kind: output, shape index: {}]
  %s12 = sld [smem:[#allocation0]]
  $region66: #{forward.1} parent=0
    _
  %s14 = ssub.s32 1, %s12
  %s15 = scalar_select 0, %s14, %s12
  $region1: #{forward.1} parent=0
    #allocation6 [shape = 'u8[196608]{0}', space=vmem, size = 0x30000, scoped, tag = 'input window, operand 2, single buffered']
    #allocation7 [shape = 's32[1]{0}', space=sflag, size = 0x4, scoped, tag = 'scoped memory for forward.1']
    #allocation8 [shape = 'u8[196608]{0}', space=vmem, size = 0x30000, scoped, tag = 'input window, operand 5, single buffered']
    #allocation9 [shape = 's32[1]{0}', space=sflag, size = 0x4, scoped, tag = 'scoped memory for forward.1']
    #allocation10 [shape = 'u8[196608]{0}', space=vmem, size = 0x30000, scoped, tag = 'input window, operand 6, single buffered']
    %16 = vsyncpa [#allocation7], 0
    %17 = vsyncpa [#allocation9], 0
    // Predicated region
    $region2: #{forward.1} parent=1 // pred_check
      _
    $region3: #{forward.1} parent=1 // pred_check_branch
      %19 = sbr.rel (0) target = $region5
    $region4: #{forward.1} parent=1 // pred_region
      _
    $region5: #{forward.1} parent=1 // pred_fallthru
      _
    // Predicated region
    $region6: #{forward.1} parent=1 // pred_check
      _
    $region7: #{forward.1} parent=1 // pred_check_branch
      %21 = sbr.rel (0) target = $region9
    $region8: #{forward.1} parent=1 // pred_region
      _
    $region9: #{forward.1} parent=1 // pred_fallthru
      _
    // Predicated region
    $region10: #{forward.1} parent=1 // pred_check
      _
    $region11: #{forward.1} parent=1 // pred_check_branch
      %23 = sbr.rel (0) target = $region13
    $region12: #{forward.1} parent=1 // pred_region
      %s25 = ssub.s32 6144, 6144
      %26 = vsyncadd [#allocation7], %s25
      %s27 = sshll.u32 [#allocation6], 4
      %s28 = int_to_ptr.vmem [resolvable:$true] %s27
      %33 = dma.hbm_to_vmem [thread:$0]  %s2, 6144, %s28, [#allocation7], 384, 384, 24
    $region13: #{forward.1} parent=1 // pred_fallthru
      _
    // Predicated region
    $region14: #{forward.1} parent=1 // pred_check
      _
    $region15: #{forward.1} parent=1 // pred_check_branch
      %35 = sbr.rel (0) target = $region17
    $region16: #{forward.1} parent=1 // pred_region
      _
    $region17: #{forward.1} parent=1 // pred_fallthru
      _
    // Predicated region
    $region18: #{forward.1} parent=1 // pred_check
      _
    $region19: #{forward.1} parent=1 // pred_check_branch
      %37 = sbr.rel (0) target = $region21
    $region20: #{forward.1} parent=1 // pred_region
      _
    $region21: #{forward.1} parent=1 // pred_fallthru
      _
    // Predicated region
    $region22: #{forward.1} parent=1 // pred_check
      _
    $region23: #{forward.1} parent=1 // pred_check_branch
      %39 = sbr.rel (0) target = $region25
    $region24: #{forward.1} parent=1 // pred_region
      %s41 = ssub.s32 6144, 6144
      %42 = vsyncadd [#allocation9], %s41
      %s43 = sshll.u32 [#allocation8], 4
      %s44 = int_to_ptr.vmem [resolvable:$true] %s43
      %49 = dma.hbm_to_vmem [thread:$0]  %s5, 6144, %s44, [#allocation9], 384, 384, 24
    $region25: #{forward.1} parent=1 // pred_fallthru
      _
    // Predicated region
    $region26: #{forward.1} parent=1 // pred_check
      _
    $region27: #{forward.1} parent=1 // pred_check_branch
      %51 = sbr.rel (0) target = $region29
    $region28: #{forward.1} parent=1 // pred_region
      %s53 = ssub.s32 6144, 6144
      %54 = vsyncadd [#allocation9], %s53
      %s55 = sshll.u32 [#allocation10], 4
      %s56 = int_to_ptr.vmem [resolvable:$true] %s55
      %61 = dma.hbm_to_vmem [thread:$0]  %s6, 6144, %s56, [#allocation9], 384, 384, 24
    $region29: #{forward.1} parent=1 // pred_fallthru
      _
    // Predicated region
    $region30: #{forward.1} parent=1 // pred_check
      _
    $region31: #{forward.1} parent=1 // pred_check_branch
      %63 = sbr.rel (0) target = $region33
    $region32: #{forward.1} parent=1 // pred_region
      _
    $region33: #{forward.1} parent=1 // pred_fallthru
      _
    // Predicated region
    $region34: #{forward.1} parent=1 // pred_check
      _
    $region35: #{forward.1} parent=1 // pred_check_branch
      %65 = sbr.rel (0) target = $region37
    $region36: #{forward.1} parent=1 // pred_region
      _
    $region37: #{forward.1} parent=1 // pred_fallthru
      _
    // Predicated region
    $region38: #{forward.1} parent=1 // pred_check
      _
    $region39: #{forward.1} parent=1 // pred_check_branch
      %67 = sbr.rel (0) target = $region41
    $region40: #{forward.1} parent=1 // pred_region
      _
    $region41: #{forward.1} parent=1 // pred_fallthru
      _
    // Predicated region
    $region42: #{forward.1} parent=1 // pred_check
      _
    $region43: #{forward.1} parent=1 // pred_check_branch
      %69 = sbr.rel (0) target = $region45
    $region44: #{forward.1} parent=1 // pred_region
      %70 = dma.done [#allocation7], 6144
    $region45: #{forward.1} parent=1 // pred_fallthru
      _
    // Predicated region
    $region46: #{forward.1} parent=1 // pred_check
      _
    $region47: #{forward.1} parent=1 // pred_check_branch
      %72 = sbr.rel (0) target = $region49
    $region48: #{forward.1} parent=1 // pred_region
      %73 = dma.done [#allocation9], 6144
    $region49: #{forward.1} parent=1 // pred_fallthru
      _
    // Predicated region
    $region50: #{forward.1} parent=1 // pred_check
      _
    $region51: #{forward.1} parent=1 // pred_check_branch
      %75 = sbr.rel (0) target = $region53
    $region52: #{forward.1} parent=1 // pred_region
      %76 = dma.done [#allocation9], 6144
    $region53: #{forward.1} parent=1 // pred_fallthru
      _
    // Predicated region
    $region54: #{forward.1} parent=1 // pred_check
      _
    $region55: #{forward.1} parent=1 // pred_check_branch
      %78 = sbr.rel target = $region57
    $region56: #{forward.1} parent=1 // pred_region
      %79 = sst [smem:[#allocation13]] [#allocation12]
      %80 = sst [smem:[#allocation14]] [#allocation11]
    $region57: #{forward.1} parent=1 // pred_fallthru
      _
    %82 = shalt.err (0)
    %s84 = sshll.u32 [#allocation4], 4
    %s85 = int_to_ptr.vmem [resolvable:$true] %s84
    %87 = dma.hbm_to_vmem [thread:$0]  %s10, 16384, %s85, [#allocation5]
    %v88 = vld [vmem:[%s0] sm:$0xff]
    %v89 = vld [vmem:[%s0 + $0x8] sm:$0xff]
    %v90 = vld [vmem:[%s0 + $0x10] sm:$0xff]
    %v91 = vld [vmem:[%s0 + $0x18] sm:$0xff]
    %v92 = vld [vmem:[%s0 + $0x20] sm:$0xff]
    %v93 = vld [vmem:[%s0 + $0x28] sm:$0xff]
    %v94 = vld [vmem:[%s0 + $0x30] sm:$0xff]
    %v95 = vld [vmem:[%s0 + $0x38] sm:$0xff]
    %v96 = vld [vmem:[%s1] sm:$0xff]
    %v97 = vld [vmem:[%s1 + $0x8] sm:$0xff]
    %v98 = vld [vmem:[%s1 + $0x10] sm:$0xff]
    %v99 = vld [vmem:[%s1 + $0x18] sm:$0xff]
    %v100 = vld [vmem:[%s1 + $0x20] sm:$0xff]
    %v101 = vld [vmem:[%s1 + $0x28] sm:$0xff]
    %v102 = vld [vmem:[%s3] sm:$0x7]
    %v104 = vlaneseq
    %v105 = vshrl.u32 %v104, 7
    %v106 = vsub.s32 0, %v105
    %v107 = vrot.slane %v102, %v106
    %v108 = vlaneseq
    %v109 = vshrl.u32 %v108, 7
    %v110 = vsub.s32 1, %v109
    %v111 = vrot.slane %v102, %v110
    %v112 = vlaneseq
    %v113 = vshrl.u32 %v112, 7
    %v114 = vsub.s32 2, %v113
    %v115 = vrot.slane %v102, %v114
    %vm119 = vcmask 130048
    %v121 = vsel %vm119, %v88, 0
    %v124 = vsel %vm119, %v89, 0
    %v127 = vsel %vm119, %v90, 0
    %v130 = vsel %vm119, %v91, 0
    %v133 = vsel %vm119, %v92, 0
    %v136 = vsel %vm119, %v93, 0
    %v139 = vsel %vm119, %v94, 0
    %v142 = vsel %vm119, %v95, 0
    %144 = vmatprep.subr.mxu0 %v97
    %145 = vmatpush1.msra.mxu0 %v96
    %146 = vmatprep.subr.mxu0 %v100
    %147 = vmatpush1.msra.mxu0 %v99
    %148 = vmatprep.subr.mxu0 0.0
    %149 = vmatpush1.msra.mxu0 0.0
    %150 = vmatprep.subr.mxu0 0.0
    %151 = vmatpush1.msra.mxu0 0.0
    %152 = vmatprep.subr.mxu0 0.0
    %153 = vmatpush1.msra.mxu0 0.0
    %154 = vmatprep.subr.mxu0 0.0
    %155 = vmatpush1.msra.mxu0 0.0
    %156 = vmatprep.subr.mxu0 0.0
    %157 = vmatpush1.msra.mxu0 0.0
    %158 = vmatprep.subr.mxu0 0.0
    %159 = vmatpush1.msra.mxu0 0.0
    %160 = vmatprep.subr.mxu0 0.0
    %161 = vmatpush1.msra.mxu0 0.0
    %162 = vmatprep.subr.mxu0 0.0
    %163 = vmatpush1.msra.mxu0 0.0
    %164 = vmatprep.subr.mxu0 0.0
    %165 = vmatpush1.msra.mxu0 0.0
    %166 = vmatprep.subr.mxu0 0.0
    %167 = vmatpush1.msra.mxu0 0.0
    %168 = vmatprep.subr.mxu0 0.0
    %169 = vmatpush1.msra.mxu0 0.0
    %170 = vmatprep.subr.mxu0 0.0
    %171 = vmatpush1.msra.mxu0 0.0
    %172 = vmatprep.subr.mxu0 0.0
    %173 = vmatpush1.msra.mxu0 0.0
    %174 = vmatprep.subr.mxu0 0.0
    %175 = vmatpush1.msra.mxu0 0.0
    %176 = vmatprep.subr.mxu0 0.0
    %177 = vmatpush1.msra.mxu0 0.0
    %178 = vmatprep.subr.mxu0 0.0
    %179 = vmatpush1.msra.mxu0 0.0
    %180 = vmatprep.subr.mxu0 0.0
    %181 = vmatpush1.msra.mxu0 0.0
    %182 = vmatprep.subr.mxu0 0.0
    %183 = vmatpush1.msra.mxu0 0.0
    %184 = vmatprep.subr.mxu0 0.0
    %185 = vmatpush1.msra.mxu0 0.0
    %186 = vmatprep.subr.mxu0 0.0
    %187 = vmatpush1.msra.mxu0 0.0
    %188 = vmatprep.subr.mxu0 0.0
    %189 = vmatpush1.msra.mxu0 0.0
    %190 = vmatprep.subr.mxu0 0.0
    %191 = vmatpush1.msra.mxu0 0.0
    %192 = vmatprep.subr.mxu0 0.0
    %193 = vmatpush1.msra.mxu0 0.0
    %194 = vmatprep.subr.mxu0 0.0
    %195 = vmatpush1.msra.mxu0 0.0
    %196 = vmatprep.subr.mxu0 0.0
    %197 = vmatpush1.msra.mxu0 0.0
    %198 = vmatprep.subr.mxu0 0.0
    %199 = vmatpush1.msra.mxu0 0.0
    %200 = vmatprep.subr.mxu0 0.0
    %201 = vmatpush1.msra.mxu0 0.0
    %202 = vmatprep.subr.mxu0 0.0
    %203 = vmatpush1.msra.mxu0 0.0
    %204 = vmatprep.subr.mxu0 0.0
    %205 = vmatpush1.msra.mxu0 0.0
    %206 = vmatprep.subr.mxu0 0.0
    %207 = vmatpush1.msra.mxu0 0.0
    %208 = vmatprep.mubr.f32.mxu0 0.0
    %209 = vmatmul.mubr.f32.gmra.mrb[0].mxu0 %v121
    %v210 = vpop.f32.mrb[0].mxu0
    %v211 = vadd.f32 %v107, %v210
    %v212 = vpop.f32.mrb[0].mxu0
    %v213 = vadd.f32 %v111, %v212
    %214 = vmatprep.mubr.f32.mxu0 0.0
    %215 = vmatmul.mubr.f32.gmra.mrb[0].mxu0 %v124
    %v216 = vpop.f32.mrb[0].mxu0
    %v217 = vadd.f32 %v107, %v216
    %v218 = vpop.f32.mrb[0].mxu0
    %v219 = vadd.f32 %v111, %v218
    %220 = vmatprep.mubr.f32.mxu0 0.0
    %221 = vmatmul.mubr.f32.gmra.mrb[0].mxu0 %v127
    %v222 = vpop.f32.mrb[0].mxu0
    %v223 = vadd.f32 %v107, %v222
    %v224 = vpop.f32.mrb[0].mxu0
    %v225 = vadd.f32 %v111, %v224
    %226 = vmatprep.mubr.f32.mxu0 0.0
    %227 = vmatmul.mubr.f32.gmra.mrb[0].mxu0 %v130
    %v228 = vpop.f32.mrb[0].mxu0
    %v229 = vadd.f32 %v107, %v228
    %v230 = vpop.f32.mrb[0].mxu0
    %v231 = vadd.f32 %v111, %v230
    %232 = vmatprep.mubr.f32.mxu0 0.0
    %233 = vmatmul.mubr.f32.gmra.mrb[0].mxu0 %v133
    %v234 = vpop.f32.mrb[0].mxu0
    %v235 = vadd.f32 %v107, %v234
    %v236 = vpop.f32.mrb[0].mxu0
    %v237 = vadd.f32 %v111, %v236
    %238 = vmatprep.mubr.f32.mxu0 0.0
    %239 = vmatmul.mubr.f32.gmra.mrb[0].mxu0 %v136
    %v240 = vpop.f32.mrb[0].mxu0
    %v241 = vadd.f32 %v107, %v240
    %v242 = vpop.f32.mrb[0].mxu0
    %v243 = vadd.f32 %v111, %v242
    %244 = vmatprep.mubr.f32.mxu0 0.0
    %245 = vmatmul.mubr.f32.gmra.mrb[0].mxu0 %v139
    %v246 = vpop.f32.mrb[0].mxu0
    %v247 = vadd.f32 %v107, %v246
    %v248 = vpop.f32.mrb[0].mxu0
    %v249 = vadd.f32 %v111, %v248
    %250 = vmatprep.mubr.f32.mxu0 0.0
    %251 = vmatmul.mubr.f32.gmra.mrb[0].mxu0 %v142
    %v252 = vpop.f32.mrb[0].mxu0
    %v253 = vadd.f32 %v107, %v252
    %v254 = vpop.f32.mrb[0].mxu0
    %v255 = vadd.f32 %v111, %v254
    %256 = vdwg.mxu0
    %257 = vmatprep.subr.mxu0 0.0
    %258 = vmatpush1.msra.mxu0 %v98
    %259 = vmatprep.subr.mxu0 0.0
    %260 = vmatpush1.msra.mxu0 %v101
    %261 = vmatprep.subr.mxu0 0.0
    %262 = vmatpush1.msra.mxu0 0.0
    %263 = vmatprep.subr.mxu0 0.0
    %264 = vmatpush1.msra.mxu0 0.0
    %265 = vmatprep.subr.mxu0 0.0
    %266 = vmatpush1.msra.mxu0 0.0
    %267 = vmatprep.subr.mxu0 0.0
    %268 = vmatpush1.msra.mxu0 0.0
    %269 = vmatprep.subr.mxu0 0.0
    %270 = vmatpush1.msra.mxu0 0.0
    %271 = vmatprep.subr.mxu0 0.0
    %272 = vmatpush1.msra.mxu0 0.0
    %273 = vmatprep.subr.mxu0 0.0
    %274 = vmatpush1.msra.mxu0 0.0
    %275 = vmatprep.subr.mxu0 0.0
    %276 = vmatpush1.msra.mxu0 0.0
    %277 = vmatprep.subr.mxu0 0.0
    %278 = vmatpush1.msra.mxu0 0.0
    %279 = vmatprep.subr.mxu0 0.0
    %280 = vmatpush1.msra.mxu0 0.0
    %281 = vmatprep.subr.mxu0 0.0
    %282 = vmatpush1.msra.mxu0 0.0
    %283 = vmatprep.subr.mxu0 0.0
    %284 = vmatpush1.msra.mxu0 0.0
    %285 = vmatprep.subr.mxu0 0.0
    %286 = vmatpush1.msra.mxu0 0.0
    %287 = vmatprep.subr.mxu0 0.0
    %288 = vmatpush1.msra.mxu0 0.0
    %289 = vmatprep.subr.mxu0 0.0
    %290 = vmatpush1.msra.mxu0 0.0
    %291 = vmatprep.subr.mxu0 0.0
    %292 = vmatpush1.msra.mxu0 0.0
    %293 = vmatprep.subr.mxu0 0.0
    %294 = vmatpush1.msra.mxu0 0.0
    %295 = vmatprep.subr.mxu0 0.0
    %296 = vmatpush1.msra.mxu0 0.0
    %297 = vmatprep.subr.mxu0 0.0
    %298 = vmatpush1.msra.mxu0 0.0
    %299 = vmatprep.subr.mxu0 0.0
    %300 = vmatpush1.msra.mxu0 0.0
    %301 = vmatprep.subr.mxu0 0.0
    %302 = vmatpush1.msra.mxu0 0.0
    %303 = vmatprep.subr.mxu0 0.0
    %304 = vmatpush1.msra.mxu0 0.0
    %305 = vmatprep.subr.mxu0 0.0
    %306 = vmatpush1.msra.mxu0 0.0
    %307 = vmatprep.subr.mxu0 0.0
    %308 = vmatpush1.msra.mxu0 0.0
    %309 = vmatprep.subr.mxu0 0.0
    %310 = vmatpush1.msra.mxu0 0.0
    %311 = vmatprep.subr.mxu0 0.0
    %312 = vmatpush1.msra.mxu0 0.0
    %313 = vmatprep.subr.mxu0 0.0
    %314 = vmatpush1.msra.mxu0 0.0
    %315 = vmatprep.subr.mxu0 0.0
    %316 = vmatpush1.msra.mxu0 0.0
    %317 = vmatprep.subr.mxu0 0.0
    %318 = vmatpush1.msra.mxu0 0.0
    %319 = vmatprep.subr.mxu0 0.0
    %320 = vmatpush1.msra.mxu0 0.0
    %321 = vmatprep.mubr.f32.mxu0 0.0
    %322 = vmatmul.mubr.f32.gmra.mrb[0].mxu0 %v121
    %v323 = vpop.f32.mrb[0].mxu0
    %v324 = vadd.f32 %v115, %v323
    %v325 = vpop.f32.mrb[0].mxu0
    %326 = vmatprep.mubr.f32.mxu0 0.0
    %327 = vmatmul.mubr.f32.gmra.mrb[0].mxu0 %v124
    %v328 = vpop.f32.mrb[0].mxu0
    %v329 = vadd.f32 %v115, %v328
    %v330 = vpop.f32.mrb[0].mxu0
    %331 = vmatprep.mubr.f32.mxu0 0.0
    %332 = vmatmul.mubr.f32.gmra.mrb[0].mxu0 %v127
    %v333 = vpop.f32.mrb[0].mxu0
    %v334 = vadd.f32 %v115, %v333
    %v335 = vpop.f32.mrb[0].mxu0
    %336 = vmatprep.mubr.f32.mxu0 0.0
    %337 = vmatmul.mubr.f32.gmra.mrb[0].mxu0 %v130
    %v338 = vpop.f32.mrb[0].mxu0
    %v339 = vadd.f32 %v115, %v338
    %v340 = vpop.f32.mrb[0].mxu0
    %341 = vmatprep.mubr.f32.mxu0 0.0
    %342 = vmatmul.mubr.f32.gmra.mrb[0].mxu0 %v133
    %v343 = vpop.f32.mrb[0].mxu0
    %v344 = vadd.f32 %v115, %v343
    %v345 = vpop.f32.mrb[0].mxu0
    %346 = vmatprep.mubr.f32.mxu0 0.0
    %347 = vmatmul.mubr.f32.gmra.mrb[0].mxu0 %v136
    %v348 = vpop.f32.mrb[0].mxu0
    %v349 = vadd.f32 %v115, %v348
    %v350 = vpop.f32.mrb[0].mxu0
    %351 = vmatprep.mubr.f32.mxu0 0.0
    %352 = vmatmul.mubr.f32.gmra.mrb[0].mxu0 %v139
    %v353 = vpop.f32.mrb[0].mxu0
    %v354 = vadd.f32 %v115, %v353
    %v355 = vpop.f32.mrb[0].mxu0
    %356 = vmatprep.mubr.f32.mxu0 0.0
    %357 = vmatmul.mubr.f32.gmra.mrb[0].mxu0 %v142
    %v358 = vpop.f32.mrb[0].mxu0
    %v359 = vadd.f32 %v115, %v358
    %v360 = vpop.f32.mrb[0].mxu0
    %361 = vdwg.mxu0
    %362 = vst [vmem:[#allocation2] sm:$0xff] %v211
    %363 = vst [vmem:[#allocation2 + $0x8] sm:$0xff] %v213
    %364 = vst [vmem:[#allocation2 + $0x10] sm:$0xff] %v324
    %365 = vst [vmem:[#allocation2 + $0x18] sm:$0xff] %v217
    %366 = vst [vmem:[#allocation2 + $0x20] sm:$0xff] %v219
    %367 = vst [vmem:[#allocation2 + $0x28] sm:$0xff] %v329
    %368 = vst [vmem:[#allocation2 + $0x30] sm:$0xff] %v223
    %369 = vst [vmem:[#allocation2 + $0x38] sm:$0xff] %v225
    %370 = vst [vmem:[#allocation2 + $0x40] sm:$0xff] %v334
    %371 = vst [vmem:[#allocation2 + $0x48] sm:$0xff] %v229
    %372 = vst [vmem:[#allocation2 + $0x50] sm:$0xff] %v231
    %373 = vst [vmem:[#allocation2 + $0x58] sm:$0xff] %v339
    %374 = vst [vmem:[#allocation2 + $0x60] sm:$0xff] %v235
    %375 = vst [vmem:[#allocation2 + $0x68] sm:$0xff] %v237
    %376 = vst [vmem:[#allocation2 + $0x70] sm:$0xff] %v344
    %377 = vst [vmem:[#allocation2 + $0x78] sm:$0xff] %v241
    %378 = vst [vmem:[#allocation2 + $0x80] sm:$0xff] %v243
    %379 = vst [vmem:[#allocation2 + $0x88] sm:$0xff] %v349
    %380 = vst [vmem:[#allocation2 + $0x90] sm:$0xff] %v247
    %381 = vst [vmem:[#allocation2 + $0x98] sm:$0xff] %v249
    %382 = vst [vmem:[#allocation2 + $0xa0] sm:$0xff] %v354
    %383 = vst [vmem:[#allocation2 + $0xa8] sm:$0xff] %v253
    %384 = vst [vmem:[#allocation2 + $0xb0] sm:$0xff] %v255
    %385 = vst [vmem:[#allocation2 + $0xb8] sm:$0xff] %v359
    %v386 = vld [vmem:[#allocation6] sm:$0xff]
    %v387 = vld [vmem:[#allocation6 + $0x8] sm:$0xff]
    %v388 = vld [vmem:[#allocation6 + $0x10] sm:$0xff]
    %v389 = vld [vmem:[#allocation6 + $0x18] sm:$0xff]
    %v390 = vld [vmem:[#allocation6 + $0x20] sm:$0xff]
    %v391 = vld [vmem:[#allocation6 + $0x28] sm:$0xff]
    %v392 = vld [vmem:[#allocation6 + $0x30] sm:$0xff]
    %v393 = vld [vmem:[#allocation6 + $0x38] sm:$0xff]
    %v394 = vld [vmem:[#allocation6 + $0x40] sm:$0xff]
    %v395 = vld [vmem:[#allocation6 + $0x48] sm:$0xff]
    %v396 = vld [vmem:[#allocation6 + $0x50] sm:$0xff]
    %v397 = vld [vmem:[#allocation6 + $0x58] sm:$0xff]
    %v398 = vld [vmem:[#allocation6 + $0x60] sm:$0xff]
    %v399 = vld [vmem:[#allocation6 + $0x68] sm:$0xff]
    %v400 = vld [vmem:[#allocation6 + $0x70] sm:$0xff]
    %v401 = vld [vmem:[#allocation6 + $0x78] sm:$0xff]
    %v402 = vld [vmem:[#allocation6 + $0x80] sm:$0xff]
    %v403 = vld [vmem:[#allocation6 + $0x88] sm:$0xff]
    %v404 = vld [vmem:[#allocation6 + $0x90] sm:$0xff]
    %v405 = vld [vmem:[#allocation6 + $0x98] sm:$0xff]
    %v406 = vld [vmem:[#allocation6 + $0xa0] sm:$0xff]
    %v407 = vld [vmem:[#allocation6 + $0xa8] sm:$0xff]
    %v408 = vld [vmem:[#allocation6 + $0xb0] sm:$0xff]
    %v409 = vld [vmem:[#allocation6 + $0xb8] sm:$0xff]
    %v410 = vld [vmem:[#allocation6 + $0xc0] sm:$0xff]
    %v411 = vld [vmem:[#allocation6 + $0xc8] sm:$0xff]
    %v412 = vld [vmem:[#allocation6 + $0xd0] sm:$0xff]
    %v413 = vld [vmem:[#allocation6 + $0xd8] sm:$0xff]
    %v414 = vld [vmem:[#allocation6 + $0xe0] sm:$0xff]
    %v415 = vld [vmem:[#allocation6 + $0xe8] sm:$0xff]
    %v416 = vld [vmem:[#allocation6 + $0xf0] sm:$0xff]
    %v417 = vld [vmem:[#allocation6 + $0xf8] sm:$0xff]
    %v418 = vld [vmem:[#allocation6 + $0x100] sm:$0xff]
    %v419 = vld [vmem:[#allocation6 + $0x108] sm:$0xff]
    %v420 = vld [vmem:[#allocation6 + $0x110] sm:$0xff]
    %v421 = vld [vmem:[#allocation6 + $0x118] sm:$0xff]
    %v422 = vld [vmem:[#allocation6 + $0x120] sm:$0xff]
    %v423 = vld [vmem:[#allocation6 + $0x128] sm:$0xff]
    %v424 = vld [vmem:[#allocation6 + $0x130] sm:$0xff]
    %v425 = vld [vmem:[#allocation6 + $0x138] sm:$0xff]
    %v426 = vld [vmem:[#allocation6 + $0x140] sm:$0xff]
    %v427 = vld [vmem:[#allocation6 + $0x148] sm:$0xff]
    %v428 = vld [vmem:[#allocation6 + $0x150] sm:$0xff]
    %v429 = vld [vmem:[#allocation6 + $0x158] sm:$0xff]
    %v430 = vld [vmem:[#allocation6 + $0x160] sm:$0xff]
    %v431 = vld [vmem:[#allocation6 + $0x168] sm:$0xff]
    %v432 = vld [vmem:[#allocation6 + $0x170] sm:$0xff]
    %v433 = vld [vmem:[#allocation6 + $0x178] sm:$0xff]
    %v434 = vld [vmem:[%s4] sm:$0x1]
    %v436 = vlaneseq
    %v437 = vshrl.u32 %v436, 7
    %v438 = vsub.s32 0, %v437
    %v439 = vrot.slane %v434, %v438
    %v441 = vld [vmem:[#allocation8] sm:$0xff]
    %v442 = vld [vmem:[#allocation8 + $0x8] sm:$0xff]
    %v443 = vld [vmem:[#allocation8 + $0x10] sm:$0xff]
    %v444 = vld [vmem:[#allocation8 + $0x18] sm:$0xff]
    %v445 = vld [vmem:[#allocation8 + $0x20] sm:$0xff]
    %v446 = vld [vmem:[#allocation8 + $0x28] sm:$0xff]
    %v447 = vld [vmem:[#allocation8 + $0x30] sm:$0xff]
    %v448 = vld [vmem:[#allocation8 + $0x38] sm:$0xff]
    %v449 = vld [vmem:[#allocation8 + $0x40] sm:$0xff]
    %v450 = vld [vmem:[#allocation8 + $0x48] sm:$0xff]
    %v451 = vld [vmem:[#allocation8 + $0x50] sm:$0xff]
    %v452 = vld [vmem:[#allocation8 + $0x58] sm:$0xff]
    %v453 = vld [vmem:[#allocation8 + $0x60] sm:$0xff]
    %v454 = vld [vmem:[#allocation8 + $0x68] sm:$0xff]
    %v455 = vld [vmem:[#allocation8 + $0x70] sm:$0xff]
    %v456 = vld [vmem:[#allocation8 + $0x78] sm:$0xff]
    %v457 = vld [vmem:[#allocation8 + $0x80] sm:$0xff]
    %v458 = vld [vmem:[#allocation8 + $0x88] sm:$0xff]
    %v459 = vld [vmem:[#allocation8 + $0x90] sm:$0xff]
    %v460 = vld [vmem:[#allocation8 + $0x98] sm:$0xff]
    %v461 = vld [vmem:[#allocation8 + $0xa0] sm:$0xff]
    %v462 = vld [vmem:[#allocation8 + $0xa8] sm:$0xff]
    %v463 = vld [vmem:[#allocation8 + $0xb0] sm:$0xff]
    %v464 = vld [vmem:[#allocation8 + $0xb8] sm:$0xff]
    %v465 = vld [vmem:[#allocation8 + $0xc0] sm:$0xff]
    %v466 = vld [vmem:[#allocation8 + $0xc8] sm:$0xff]
    %v467 = vld [vmem:[#allocation8 + $0xd0] sm:$0xff]
    %v468 = vld [vmem:[#allocation8 + $0xd8] sm:$0xff]
    %v469 = vld [vmem:[#allocation8 + $0xe0] sm:$0xff]
    %v470 = vld [vmem:[#allocation8 + $0xe8] sm:$0xff]
    %v471 = vld [vmem:[#allocation8 + $0xf0] sm:$0xff]
    %v472 = vld [vmem:[#allocation8 + $0xf8] sm:$0xff]
    %v473 = vld [vmem:[#allocation8 + $0x100] sm:$0xff]
    %v474 = vld [vmem:[#allocation8 + $0x108] sm:$0xff]
    %v475 = vld [vmem:[#allocation8 + $0x110] sm:$0xff]
    %v476 = vld [vmem:[#allocation8 + $0x118] sm:$0xff]
    %v477 = vld [vmem:[#allocation8 + $0x120] sm:$0xff]
    %v478 = vld [vmem:[#allocation8 + $0x128] sm:$0xff]
    %v479 = vld [vmem:[#allocation8 + $0x130] sm:$0xff]
    %v480 = vld [vmem:[#allocation8 + $0x138] sm:$0xff]
    %v481 = vld [vmem:[#allocation8 + $0x140] sm:$0xff]
    %v482 = vld [vmem:[#allocation8 + $0x148] sm:$0xff]
    %v483 = vld [vmem:[#allocation8 + $0x150] sm:$0xff]
    %v484 = vld [vmem:[#allocation8 + $0x158] sm:$0xff]
    %v485 = vld [vmem:[#allocation8 + $0x160] sm:$0xff]
    %v486 = vld [vmem:[#allocation8 + $0x168] sm:$0xff]
    %v487 = vld [vmem:[#allocation8 + $0x170] sm:$0xff]
    %v488 = vld [vmem:[#allocation8 + $0x178] sm:$0xff]
    %v489 = vld [vmem:[#allocation10] sm:$0xff]
    %v490 = vld [vmem:[#allocation10 + $0x8] sm:$0xff]
    %v491 = vld [vmem:[#allocation10 + $0x10] sm:$0xff]
    %v492 = vld [vmem:[#allocation10 + $0x18] sm:$0xff]
    %v493 = vld [vmem:[#allocation10 + $0x20] sm:$0xff]
    %v494 = vld [vmem:[#allocation10 + $0x28] sm:$0xff]
    %v495 = vld [vmem:[#allocation10 + $0x30] sm:$0xff]
    %v496 = vld [vmem:[#allocation10 + $0x38] sm:$0xff]
    %v497 = vld [vmem:[#allocation10 + $0x40] sm:$0xff]
    %v498 = vld [vmem:[#allocation10 + $0x48] sm:$0xff]
    %v499 = vld [vmem:[#allocation10 + $0x50] sm:$0xff]
    %v500 = vld [vmem:[#allocation10 + $0x58] sm:$0xff]
    %v501 = vld [vmem:[#allocation10 + $0x60] sm:$0xff]
    %v502 = vld [vmem:[#allocation10 + $0x68] sm:$0xff]
    %v503 = vld [vmem:[#allocation10 + $0x70] sm:$0xff]
    %v504 = vld [vmem:[#allocation10 + $0x78] sm:$0xff]
    %v505 = vld [vmem:[#allocation10 + $0x80] sm:$0xff]
    %v506 = vld [vmem:[#allocation10 + $0x88] sm:$0xff]
    %v507 = vld [vmem:[#allocation10 + $0x90] sm:$0xff]
    %v508 = vld [vmem:[#allocation10 + $0x98] sm:$0xff]
    %v509 = vld [vmem:[#allocation10 + $0xa0] sm:$0xff]
    %v510 = vld [vmem:[#allocation10 + $0xa8] sm:$0xff]
    %v511 = vld [vmem:[#allocation10 + $0xb0] sm:$0xff]
    %v512 = vld [vmem:[#allocation10 + $0xb8] sm:$0xff]
    %v513 = vld [vmem:[#allocation10 + $0xc0] sm:$0xff]
    %v514 = vld [vmem:[#allocation10 + $0xc8] sm:$0xff]
    %v515 = vld [vmem:[#allocation10 + $0xd0] sm:$0xff]
    %v516 = vld [vmem:[#allocation10 + $0xd8] sm:$0xff]
    %v517 = vld [vmem:[#allocation10 + $0xe0] sm:$0xff]
    %v518 = vld [vmem:[#allocation10 + $0xe8] sm:$0xff]
    %v519 = vld [vmem:[#allocation10 + $0xf0] sm:$0xff]
    %v520 = vld [vmem:[#allocation10 + $0xf8] sm:$0xff]
    %v521 = vld [vmem:[#allocation10 + $0x100] sm:$0xff]
    %v522 = vld [vmem:[#allocation10 + $0x108] sm:$0xff]
    %v523 = vld [vmem:[#allocation10 + $0x110] sm:$0xff]
    %v524 = vld [vmem:[#allocation10 + $0x118] sm:$0xff]
    %v525 = vld [vmem:[#allocation10 + $0x120] sm:$0xff]
    %v526 = vld [vmem:[#allocation10 + $0x128] sm:$0xff]
    %v527 = vld [vmem:[#allocation10 + $0x130] sm:$0xff]
    %v528 = vld [vmem:[#allocation10 + $0x138] sm:$0xff]
    %v529 = vld [vmem:[#allocation10 + $0x140] sm:$0xff]
    %v530 = vld [vmem:[#allocation10 + $0x148] sm:$0xff]
    %v531 = vld [vmem:[#allocation10 + $0x150] sm:$0xff]
    %v532 = vld [vmem:[#allocation10 + $0x158] sm:$0xff]
    %v533 = vld [vmem:[#allocation10 + $0x160] sm:$0xff]
    %v534 = vld [vmem:[#allocation10 + $0x168] sm:$0xff]
    %v535 = vld [vmem:[#allocation10 + $0x170] sm:$0xff]
    %v536 = vld [vmem:[#allocation10 + $0x178] sm:$0xff]
    %v537 = vld [vmem:[%s7] sm:$0x7]
    %v539 = vlaneseq
    %v540 = vshrl.u32 %v539, 7
    %v541 = vsub.s32 0, %v540
    %v542 = vrot.slane %v537, %v541
    %v543 = vlaneseq
    %v544 = vshrl.u32 %v543, 7
    %v545 = vsub.s32 1, %v544
    %v546 = vrot.slane %v537, %v545
    %v547 = vlaneseq
    %v548 = vshrl.u32 %v547, 7
    %v549 = vsub.s32 2, %v548
    %v550 = vrot.slane %v537, %v549
    %v554 = vld [vmem:[%s8] sm:$0x1]
    %v556 = vlaneseq
    %v557 = vshrl.u32 %v556, 7
    %v558 = vsub.s32 0, %v557
    %v559 = vrot.slane %v554, %v558
    %v561 = vld [vmem:[#allocation2] sm:$0xff]
    %v562 = vld [vmem:[#allocation2 + $0x8] sm:$0xff]
    %v563 = vld [vmem:[#allocation2 + $0x10] sm:$0xff]
    %564 = vmatprep.subr.mxu0 %v387
    %565 = vmatpush1.msra.mxu0 %v386
    %566 = vmatprep.subr.mxu0 %v390
    %567 = vmatpush1.msra.mxu0 %v389
    %568 = vmatprep.subr.mxu0 %v393
    %569 = vmatpush1.msra.mxu0 %v392
    %570 = vmatprep.subr.mxu0 %v396
    %571 = vmatpush1.msra.mxu0 %v395
    %572 = vmatprep.subr.mxu0 %v399
    %573 = vmatpush1.msra.mxu0 %v398
    %574 = vmatprep.subr.mxu0 %v402
    %575 = vmatpush1.msra.mxu0 %v401
    %576 = vmatprep.subr.mxu0 %v405
    %577 = vmatpush1.msra.mxu0 %v404
    %578 = vmatprep.subr.mxu0 %v408
    %579 = vmatpush1.msra.mxu0 %v407
    %580 = vmatprep.subr.mxu0 %v411
    %581 = vmatpush1.msra.mxu0 %v410
    %582 = vmatprep.subr.mxu0 %v414
    %583 = vmatpush1.msra.mxu0 %v413
    %584 = vmatprep.subr.mxu0 %v417
    %585 = vmatpush1.msra.mxu0 %v416
    %586 = vmatprep.subr.mxu0 %v420
    %587 = vmatpush1.msra.mxu0 %v419
    %588 = vmatprep.subr.mxu0 %v423
    %589 = vmatpush1.msra.mxu0 %v422
    %590 = vmatprep.subr.mxu0 %v426
    %591 = vmatpush1.msra.mxu0 %v425
    %592 = vmatprep.subr.mxu0 %v429
    %593 = vmatpush1.msra.mxu0 %v428
    %594 = vmatprep.subr.mxu0 %v432
    %595 = vmatpush1.msra.mxu0 %v431
    %596 = vmatprep.subr.mxu0 0.0
    %597 = vmatpush1.msra.mxu0 0.0
    %598 = vmatprep.subr.mxu0 0.0
    %599 = vmatpush1.msra.mxu0 0.0
    %600 = vmatprep.subr.mxu0 0.0
    %601 = vmatpush1.msra.mxu0 0.0
    %602 = vmatprep.subr.mxu0 0.0
    %603 = vmatpush1.msra.mxu0 0.0
    %604 = vmatprep.subr.mxu0 0.0
    %605 = vmatpush1.msra.mxu0 0.0
    %606 = vmatprep.subr.mxu0 0.0
    %607 = vmatpush1.msra.mxu0 0.0
    %608 = vmatprep.subr.mxu0 0.0
    %609 = vmatpush1.msra.mxu0 0.0
    %610 = vmatprep.subr.mxu0 0.0
    %611 = vmatpush1.msra.mxu0 0.0
    %612 = vmatprep.subr.mxu0 0.0
    %613 = vmatpush1.msra.mxu0 0.0
    %614 = vmatprep.subr.mxu0 0.0
    %615 = vmatpush1.msra.mxu0 0.0
    %616 = vmatprep.subr.mxu0 0.0
    %617 = vmatpush1.msra.mxu0 0.0
    %618 = vmatprep.subr.mxu0 0.0
    %619 = vmatpush1.msra.mxu0 0.0
    %620 = vmatprep.subr.mxu0 0.0
    %621 = vmatpush1.msra.mxu0 0.0
    %622 = vmatprep.subr.mxu0 0.0
    %623 = vmatpush1.msra.mxu0 0.0
    %624 = vmatprep.subr.mxu0 0.0
    %625 = vmatpush1.msra.mxu0 0.0
    %626 = vmatprep.subr.mxu0 0.0
    %627 = vmatpush1.msra.mxu0 0.0
    %628 = vmatprep.mubr.f32.mxu0 0.0
    %629 = vmatmul.mubr.f32.gmra.mrb[0].mxu0 0.0
    %v630 = vpop.f32.mrb[0].mxu0
    %v631 = vadd.f32 0.0, %v630
    %v632 = vpop.f32.mrb[0].mxu0
    %v633 = vadd.f32 0.0, %v632
    %634 = vdwg.mxu0
    %635 = vmatprep.subr.mxu0 0.0
    %636 = vmatpush1.msra.mxu0 %v388
    %637 = vmatprep.subr.mxu0 0.0
    %638 = vmatpush1.msra.mxu0 %v391
    %639 = vmatprep.subr.mxu0 0.0
    %640 = vmatpush1.msra.mxu0 %v394
    %641 = vmatprep.subr.mxu0 0.0
    %642 = vmatpush1.msra.mxu0 %v397
    %643 = vmatprep.subr.mxu0 0.0
    %644 = vmatpush1.msra.mxu0 %v400
    %645 = vmatprep.subr.mxu0 0.0
    %646 = vmatpush1.msra.mxu0 %v403
    %647 = vmatprep.subr.mxu0 0.0
    %648 = vmatpush1.msra.mxu0 %v406
    %649 = vmatprep.subr.mxu0 0.0
    %650 = vmatpush1.msra.mxu0 %v409
    %651 = vmatprep.subr.mxu0 0.0
    %652 = vmatpush1.msra.mxu0 %v412
    %653 = vmatprep.subr.mxu0 0.0
    %654 = vmatpush1.msra.mxu0 %v415
    %655 = vmatprep.subr.mxu0 0.0
    %656 = vmatpush1.msra.mxu0 %v418
    %657 = vmatprep.subr.mxu0 0.0
    %658 = vmatpush1.msra.mxu0 %v421
    %659 = vmatprep.subr.mxu0 0.0
    %660 = vmatpush1.msra.mxu0 %v424
    %661 = vmatprep.subr.mxu0 0.0
    %662 = vmatpush1.msra.mxu0 %v427
    %663 = vmatprep.subr.mxu0 0.0
    %664 = vmatpush1.msra.mxu0 %v430
    %665 = vmatprep.subr.mxu0 0.0
    %666 = vmatpush1.msra.mxu0 %v433
    %667 = vmatprep.subr.mxu0 0.0
    %668 = vmatpush1.msra.mxu0 0.0
    %669 = vmatprep.subr.mxu0 0.0
    %670 = vmatpush1.msra.mxu0 0.0
    %671 = vmatprep.subr.mxu0 0.0
    %672 = vmatpush1.msra.mxu0 0.0
    %673 = vmatprep.subr.mxu0 0.0
    %674 = vmatpush1.msra.mxu0 0.0
    %675 = vmatprep.subr.mxu0 0.0
    %676 = vmatpush1.msra.mxu0 0.0
    %677 = vmatprep.subr.mxu0 0.0
    %678 = vmatpush1.msra.mxu0 0.0
    %679 = vmatprep.subr.mxu0 0.0
    %680 = vmatpush1.msra.mxu0 0.0
    %681 = vmatprep.subr.mxu0 0.0
    %682 = vmatpush1.msra.mxu0 0.0
    %683 = vmatprep.subr.mxu0 0.0
    %684 = vmatpush1.msra.mxu0 0.0
    %685 = vmatprep.subr.mxu0 0.0
    %686 = vmatpush1.msra.mxu0 0.0
    %687 = vmatprep.subr.mxu0 0.0
    %688 = vmatpush1.msra.mxu0 0.0
    %689 = vmatprep.subr.mxu0 0.0
    %690 = vmatpush1.msra.mxu0 0.0
    %691 = vmatprep.subr.mxu0 0.0
    %692 = vmatpush1.msra.mxu0 0.0
    %693 = vmatprep.subr.mxu0 0.0
    %694 = vmatpush1.msra.mxu0 0.0
    %695 = vmatprep.subr.mxu0 0.0
    %696 = vmatpush1.msra.mxu0 0.0
    %697 = vmatprep.subr.mxu0 0.0
    %698 = vmatpush1.msra.mxu0 0.0
    %699 = vmatprep.mubr.f32.mxu0 0.0
    %700 = vmatmul.mubr.f32.gmra.mrb[0].mxu0 0.0
    %v701 = vpop.f32.mrb[0].mxu0
    %v702 = vadd.f32 0.0, %v701
    %v703 = vpop.f32.mrb[0].mxu0
    %704 = vdwg.mxu0
    %v705 = vadd.f32 %v561, %v631
    %v706 = vxor.u32 %v705, 2147483648
    %v707 = vmul.f32 %v706, 1.442695
    %v708 = vpow.pop %v707
    %v709 = vadd.f32 %v708, 1.0
    %v710 = vrcp.pop %v709
    %v711 = vmul.f32 1.0, %v710
    %v712 = vadd.f32 %v562, %v633
    %v713 = vxor.u32 %v712, 2147483648
    %v714 = vmul.f32 %v713, 1.442695
    %v715 = vpow.pop %v714
    %v716 = vadd.f32 %v715, 1.0
    %v717 = vrcp.pop %v716
    %v718 = vmul.f32 1.0, %v717
    %v719 = vadd.f32 %v702, %v439
    %v720 = vmul.f32 %v711, %v719
    %v721 = vadd.f32 %v563, %v720
    %v722 = vtanh.pop %v721
    %v723 = vsub.f32 0.0, %v722
    %v724 = vmul.f32 %v718, %v723
    %v725 = vadd.f32 %v722, %v724
    %726 = vmatprep.subr.mxu0 %v442
    %727 = vmatpush1.msra.mxu0 %v441
    %728 = vmatprep.subr.mxu0 %v445
    %729 = vmatpush1.msra.mxu0 %v444
    %730 = vmatprep.subr.mxu0 %v448
    %731 = vmatpush1.msra.mxu0 %v447
    %732 = vmatprep.subr.mxu0 %v451
    %733 = vmatpush1.msra.mxu0 %v450
    %734 = vmatprep.subr.mxu0 %v454
    %735 = vmatpush1.msra.mxu0 %v453
    %736 = vmatprep.subr.mxu0 %v457
    %737 = vmatpush1.msra.mxu0 %v456
    %738 = vmatprep.subr.mxu0 %v460
    %739 = vmatpush1.msra.mxu0 %v459
    %740 = vmatprep.subr.mxu0 %v463
    %741 = vmatpush1.msra.mxu0 %v462
    %742 = vmatprep.subr.mxu0 %v466
    %743 = vmatpush1.msra.mxu0 %v465
    %744 = vmatprep.subr.mxu0 %v469
    %745 = vmatpush1.msra.mxu0 %v468
    %746 = vmatprep.subr.mxu0 %v472
    %747 = vmatpush1.msra.mxu0 %v471
    %748 = vmatprep.subr.mxu0 %v475
    %749 = vmatpush1.msra.mxu0 %v474
    %750 = vmatprep.subr.mxu0 %v478
    %751 = vmatpush1.msra.mxu0 %v477
    %752 = vmatprep.subr.mxu0 %v481
    %753 = vmatpush1.msra.mxu0 %v480
    %754 = vmatprep.subr.mxu0 %v484
    %755 = vmatpush1.msra.mxu0 %v483
    %756 = vmatprep.subr.mxu0 %v487
    %757 = vmatpush1.msra.mxu0 %v486
    %758 = vmatprep.subr.mxu0 0.0
    %759 = vmatpush1.msra.mxu0 0.0
    %760 = vmatprep.subr.mxu0 0.0
    %761 = vmatpush1.msra.mxu0 0.0
    %762 = vmatprep.subr.mxu0 0.0
    %763 = vmatpush1.msra.mxu0 0.0
    %764 = vmatprep.subr.mxu0 0.0
    %765 = vmatpush1.msra.mxu0 0.0
    %766 = vmatprep.subr.mxu0 0.0
    %767 = vmatpush1.msra.mxu0 0.0
    %768 = vmatprep.subr.mxu0 0.0
    %769 = vmatpush1.msra.mxu0 0.0
    %770 = vmatprep.subr.mxu0 0.0
    %771 = vmatpush1.msra.mxu0 0.0
    %772 = vmatprep.subr.mxu0 0.0
    %773 = vmatpush1.msra.mxu0 0.0
    %774 = vmatprep.subr.mxu0 0.0
    %775 = vmatpush1.msra.mxu0 0.0
    %776 = vmatprep.subr.mxu0 0.0
    %777 = vmatpush1.msra.mxu0 0.0
    %778 = vmatprep.subr.mxu0 0.0
    %779 = vmatpush1.msra.mxu0 0.0
    %780 = vmatprep.subr.mxu0 0.0
    %781 = vmatpush1.msra.mxu0 0.0
    %782 = vmatprep.subr.mxu0 0.0
    %783 = vmatpush1.msra.mxu0 0.0
    %784 = vmatprep.subr.mxu0 0.0
    %785 = vmatpush1.msra.mxu0 0.0
    %786 = vmatprep.subr.mxu0 0.0
    %787 = vmatpush1.msra.mxu0 0.0
    %788 = vmatprep.subr.mxu0 0.0
    %789 = vmatpush1.msra.mxu0 0.0
    %790 = vmatprep.mubr.f32.mxu0 0.0
    %791 = vmatmul.mubr.f32.gmra.mrb[0].mxu0 %v725
    %v792 = vpop.f32.mrb[0].mxu0
    %v793 = vadd.f32 %v542, %v792
    %v794 = vpop.f32.mrb[0].mxu0
    %v795 = vadd.f32 %v546, %v794
    %796 = vdwg.mxu0
    %797 = vmatprep.subr.mxu0 0.0
    %798 = vmatpush1.msra.mxu0 %v443
    %799 = vmatprep.subr.mxu0 0.0
    %800 = vmatpush1.msra.mxu0 %v446
    %801 = vmatprep.subr.mxu0 0.0
    %802 = vmatpush1.msra.mxu0 %v449
    %803 = vmatprep.subr.mxu0 0.0
    %804 = vmatpush1.msra.mxu0 %v452
    %805 = vmatprep.subr.mxu0 0.0
    %806 = vmatpush1.msra.mxu0 %v455
    %807 = vmatprep.subr.mxu0 0.0
    %808 = vmatpush1.msra.mxu0 %v458
    %809 = vmatprep.subr.mxu0 0.0
    %810 = vmatpush1.msra.mxu0 %v461
    %811 = vmatprep.subr.mxu0 0.0
    %812 = vmatpush1.msra.mxu0 %v464
    %813 = vmatprep.subr.mxu0 0.0
    %814 = vmatpush1.msra.mxu0 %v467
    %815 = vmatprep.subr.mxu0 0.0
    %816 = vmatpush1.msra.mxu0 %v470
    %817 = vmatprep.subr.mxu0 0.0
    %818 = vmatpush1.msra.mxu0 %v473
    %819 = vmatprep.subr.mxu0 0.0
    %820 = vmatpush1.msra.mxu0 %v476
    %821 = vmatprep.subr.mxu0 0.0
    %822 = vmatpush1.msra.mxu0 %v479
    %823 = vmatprep.subr.mxu0 0.0
    %824 = vmatpush1.msra.mxu0 %v482
    %825 = vmatprep.subr.mxu0 0.0
    %826 = vmatpush1.msra.mxu0 %v485
    %827 = vmatprep.subr.mxu0 0.0
    %828 = vmatpush1.msra.mxu0 %v488
    %829 = vmatprep.subr.mxu0 0.0
    %830 = vmatpush1.msra.mxu0 0.0
    %831 = vmatprep.subr.mxu0 0.0
    %832 = vmatpush1.msra.mxu0 0.0
    %833 = vmatprep.subr.mxu0 0.0
    %834 = vmatpush1.msra.mxu0 0.0
    %835 = vmatprep.subr.mxu0 0.0
    %836 = vmatpush1.msra.mxu0 0.0
    %837 = vmatprep.subr.mxu0 0.0
    %838 = vmatpush1.msra.mxu0 0.0
    %839 = vmatprep.subr.mxu0 0.0
    %840 = vmatpush1.msra.mxu0 0.0
    %841 = vmatprep.subr.mxu0 0.0
    %842 = vmatpush1.msra.mxu0 0.0
    %843 = vmatprep.subr.mxu0 0.0
    %844 = vmatpush1.msra.mxu0 0.0
    %845 = vmatprep.subr.mxu0 0.0
    %846 = vmatpush1.msra.mxu0 0.0
    %847 = vmatprep.subr.mxu0 0.0
    %848 = vmatpush1.msra.mxu0 0.0
    %849 = vmatprep.subr.mxu0 0.0
    %850 = vmatpush1.msra.mxu0 0.0
    %851 = vmatprep.subr.mxu0 0.0
    %852 = vmatpush1.msra.mxu0 0.0
    %853 = vmatprep.subr.mxu0 0.0
    %854 = vmatpush1.msra.mxu0 0.0
    %855 = vmatprep.subr.mxu0 0.0
    %856 = vmatpush1.msra.mxu0 0.0
    %857 = vmatprep.subr.mxu0 0.0
    %858 = vmatpush1.msra.mxu0 0.0
    %859 = vmatprep.subr.mxu0 0.0
    %860 = vmatpush1.msra.mxu0 0.0
    %861 = vmatprep.mubr.f32.mxu0 0.0
    %862 = vmatmul.mubr.f32.gmra.mrb[0].mxu0 %v725
    %v863 = vpop.f32.mrb[0].mxu0
    %v864 = vadd.f32 %v550, %v863
    %v865 = vpop.f32.mrb[0].mxu0
    %866 = vdwg.mxu0
    %867 = vmatprep.subr.mxu0 %v490
    %868 = vmatpush1.msra.mxu0 %v489
    %869 = vmatprep.subr.mxu0 %v493
    %870 = vmatpush1.msra.mxu0 %v492
    %871 = vmatprep.subr.mxu0 %v496
    %872 = vmatpush1.msra.mxu0 %v495
    %873 = vmatprep.subr.mxu0 %v499
    %874 = vmatpush1.msra.mxu0 %v498
    %875 = vmatprep.subr.mxu0 %v502
    %876 = vmatpush1.msra.mxu0 %v501
    %877 = vmatprep.subr.mxu0 %v505
    %878 = vmatpush1.msra.mxu0 %v504
    %879 = vmatprep.subr.mxu0 %v508
    %880 = vmatpush1.msra.mxu0 %v507
    %881 = vmatprep.subr.mxu0 %v511
    %882 = vmatpush1.msra.mxu0 %v510
    %883 = vmatprep.subr.mxu0 %v514
    %884 = vmatpush1.msra.mxu0 %v513
    %885 = vmatprep.subr.mxu0 %v517
    %886 = vmatpush1.msra.mxu0 %v516
    %887 = vmatprep.subr.mxu0 %v520
    %888 = vmatpush1.msra.mxu0 %v519
    %889 = vmatprep.subr.mxu0 %v523
    %890 = vmatpush1.msra.mxu0 %v522
    %891 = vmatprep.subr.mxu0 %v526
    %892 = vmatpush1.msra.mxu0 %v525
    %893 = vmatprep.subr.mxu0 %v529
    %894 = vmatpush1.msra.mxu0 %v528
    %895 = vmatprep.subr.mxu0 %v532
    %896 = vmatpush1.msra.mxu0 %v531
    %897 = vmatprep.subr.mxu0 %v535
    %898 = vmatpush1.msra.mxu0 %v534
    %899 = vmatprep.subr.mxu0 0.0
    %900 = vmatpush1.msra.mxu0 0.0
    %901 = vmatprep.subr.mxu0 0.0
    %902 = vmatpush1.msra.mxu0 0.0
    %903 = vmatprep.subr.mxu0 0.0
    %904 = vmatpush1.msra.mxu0 0.0
    %905 = vmatprep.subr.mxu0 0.0
    %906 = vmatpush1.msra.mxu0 0.0
    %907 = vmatprep.subr.mxu0 0.0
    %908 = vmatpush1.msra.mxu0 0.0
    %909 = vmatprep.subr.mxu0 0.0
    %910 = vmatpush1.msra.mxu0 0.0
    %911 = vmatprep.subr.mxu0 0.0
    %912 = vmatpush1.msra.mxu0 0.0
    %913 = vmatprep.subr.mxu0 0.0
    %914 = vmatpush1.msra.mxu0 0.0
    %915 = vmatprep.subr.mxu0 0.0
    %916 = vmatpush1.msra.mxu0 0.0
    %917 = vmatprep.subr.mxu0 0.0
    %918 = vmatpush1.msra.mxu0 0.0
    %919 = vmatprep.subr.mxu0 0.0
    %920 = vmatpush1.msra.mxu0 0.0
    %921 = vmatprep.subr.mxu0 0.0
    %922 = vmatpush1.msra.mxu0 0.0
    %923 = vmatprep.subr.mxu0 0.0
    %924 = vmatpush1.msra.mxu0 0.0
    %925 = vmatprep.subr.mxu0 0.0
    %926 = vmatpush1.msra.mxu0 0.0
    %927 = vmatprep.subr.mxu0 0.0
    %928 = vmatpush1.msra.mxu0 0.0
    %929 = vmatprep.subr.mxu0 0.0
    %930 = vmatpush1.msra.mxu0 0.0
    %931 = vmatprep.mubr.f32.mxu0 0.0
    %932 = vmatmul.mubr.f32.gmra.mrb[0].mxu0 0.0
    %v933 = vpop.f32.mrb[0].mxu0
    %v934 = vadd.f32 0.0, %v933
    %v935 = vpop.f32.mrb[0].mxu0
    %v936 = vadd.f32 0.0, %v935
    %937 = vdwg.mxu0
    %938 = vmatprep.subr.mxu0 0.0
    %939 = vmatpush1.msra.mxu0 %v491
    %940 = vmatprep.subr.mxu0 0.0
    %941 = vmatpush1.msra.mxu0 %v494
    %942 = vmatprep.subr.mxu0 0.0
    %943 = vmatpush1.msra.mxu0 %v497
    %944 = vmatprep.subr.mxu0 0.0
    %945 = vmatpush1.msra.mxu0 %v500
    %946 = vmatprep.subr.mxu0 0.0
    %947 = vmatpush1.msra.mxu0 %v503
    %948 = vmatprep.subr.mxu0 0.0
    %949 = vmatpush1.msra.mxu0 %v506
    %950 = vmatprep.subr.mxu0 0.0
    %951 = vmatpush1.msra.mxu0 %v509
    %952 = vmatprep.subr.mxu0 0.0
    %953 = vmatpush1.msra.mxu0 %v512
    %954 = vmatprep.subr.mxu0 0.0
    %955 = vmatpush1.msra.mxu0 %v515
    %956 = vmatprep.subr.mxu0 0.0
    %957 = vmatpush1.msra.mxu0 %v518
    %958 = vmatprep.subr.mxu0 0.0
    %959 = vmatpush1.msra.mxu0 %v521
    %960 = vmatprep.subr.mxu0 0.0
    %961 = vmatpush1.msra.mxu0 %v524
    %962 = vmatprep.subr.mxu0 0.0
    %963 = vmatpush1.msra.mxu0 %v527
    %964 = vmatprep.subr.mxu0 0.0
    %965 = vmatpush1.msra.mxu0 %v530
    %966 = vmatprep.subr.mxu0 0.0
    %967 = vmatpush1.msra.mxu0 %v533
    %968 = vmatprep.subr.mxu0 0.0
    %969 = vmatpush1.msra.mxu0 %v536
    %970 = vmatprep.subr.mxu0 0.0
    %971 = vmatpush1.msra.mxu0 0.0
    %972 = vmatprep.subr.mxu0 0.0
    %973 = vmatpush1.msra.mxu0 0.0
    %974 = vmatprep.subr.mxu0 0.0
    %975 = vmatpush1.msra.mxu0 0.0
    %976 = vmatprep.subr.mxu0 0.0
    %977 = vmatpush1.msra.mxu0 0.0
    %978 = vmatprep.subr.mxu0 0.0
    %979 = vmatpush1.msra.mxu0 0.0
    %980 = vmatprep.subr.mxu0 0.0
    %981 = vmatpush1.msra.mxu0 0.0
    %982 = vmatprep.subr.mxu0 0.0
    %983 = vmatpush1.msra.mxu0 0.0
    %984 = vmatprep.subr.mxu0 0.0
    %985 = vmatpush1.msra.mxu0 0.0
    %986 = vmatprep.subr.mxu0 0.0
    %987 = vmatpush1.msra.mxu0 0.0
    %988 = vmatprep.subr.mxu0 0.0
    %989 = vmatpush1.msra.mxu0 0.0
    %990 = vmatprep.subr.mxu0 0.0
    %991 = vmatpush1.msra.mxu0 0.0
    %992 = vmatprep.subr.mxu0 0.0
    %993 = vmatpush1.msra.mxu0 0.0
    %994 = vmatprep.subr.mxu0 0.0
    %995 = vmatpush1.msra.mxu0 0.0
    %996 = vmatprep.subr.mxu0 0.0
    %997 = vmatpush1.msra.mxu0 0.0
    %998 = vmatprep.subr.mxu0 0.0
    %999 = vmatpush1.msra.mxu0 0.0
    %1000 = vmatprep.subr.mxu0 0.0
    %1001 = vmatpush1.msra.mxu0 0.0
    %1002 = vmatprep.mubr.f32.mxu0 0.0
    %1003 = vmatmul.mubr.f32.gmra.mrb[0].mxu0 0.0
    %v1004 = vpop.f32.mrb[0].mxu0
    %v1005 = vadd.f32 0.0, %v1004
    %v1006 = vpop.f32.mrb[0].mxu0
    %1007 = vdwg.mxu0
    %v1008 = vadd.f32 %v793, %v934
    %v1009 = vxor.u32 %v1008, 2147483648
    %v1010 = vmul.f32 %v1009, 1.442695
    %v1011 = vpow.pop %v1010
    %v1012 = vadd.f32 %v1011, 1.0
    %v1013 = vrcp.pop %v1012
    %v1014 = vmul.f32 1.0, %v1013
    %v1015 = vadd.f32 %v795, %v936
    %v1016 = vxor.u32 %v1015, 2147483648
    %v1017 = vmul.f32 %v1016, 1.442695
    %v1018 = vpow.pop %v1017
    %v1019 = vadd.f32 %v1018, 1.0
    %v1020 = vrcp.pop %v1019
    %v1021 = vmul.f32 1.0, %v1020
    %v1022 = vadd.f32 %v1005, %v559
    %v1023 = vmul.f32 %v1014, %v1022
    %v1024 = vadd.f32 %v864, %v1023
    %v1025 = vtanh.pop %v1024
    %v1026 = vsub.f32 0.0, %v1025
    %v1027 = vmul.f32 %v1021, %v1026
    %v1028 = vadd.f32 %v1025, %v1027
    %1029 = vst [vmem:[#allocation3] sm:$0xff] %v1028
    %v1030 = vld [vmem:[#allocation2 + $0x18] sm:$0xff]
    %v1031 = vld [vmem:[#allocation2 + $0x20] sm:$0xff]
    %v1032 = vld [vmem:[#allocation2 + $0x28] sm:$0xff]
    %1033 = vmatprep.subr.mxu0 %v387
    %1034 = vmatpush1.msra.mxu0 %v386
    %1035 = vmatprep.subr.mxu0 %v390
    %1036 = vmatpush1.msra.mxu0 %v389
    %1037 = vmatprep.subr.mxu0 %v393
    %1038 = vmatpush1.msra.mxu0 %v392
    %1039 = vmatprep.subr.mxu0 %v396
    %1040 = vmatpush1.msra.mxu0 %v395
    %1041 = vmatprep.subr.mxu0 %v399
    %1042 = vmatpush1.msra.mxu0 %v398
    %1043 = vmatprep.subr.mxu0 %v402
    %1044 = vmatpush1.msra.mxu0 %v401
    %1045 = vmatprep.subr.mxu0 %v405
    %1046 = vmatpush1.msra.mxu0 %v404
    %1047 = vmatprep.subr.mxu0 %v408
    %1048 = vmatpush1.msra.mxu0 %v407
    %1049 = vmatprep.subr.mxu0 %v411
    %1050 = vmatpush1.msra.mxu0 %v410
    %1051 = vmatprep.subr.mxu0 %v414
    %1052 = vmatpush1.msra.mxu0 %v413
    %1053 = vmatprep.subr.mxu0 %v417
    %1054 = vmatpush1.msra.mxu0 %v416
    %1055 = vmatprep.subr.mxu0 %v420
    %1056 = vmatpush1.msra.mxu0 %v419
    %1057 = vmatprep.subr.mxu0 %v423
    %1058 = vmatpush1.msra.mxu0 %v422
    %1059 = vmatprep.subr.mxu0 %v426
    %1060 = vmatpush1.msra.mxu0 %v425
    %1061 = vmatprep.subr.mxu0 %v429
    %1062 = vmatpush1.msra.mxu0 %v428
    %1063 = vmatprep.subr.mxu0 %v432
    %1064 = vmatpush1.msra.mxu0 %v431
    %1065 = vmatprep.subr.mxu0 0.0
    %1066 = vmatpush1.msra.mxu0 0.0
    %1067 = vmatprep.subr.mxu0 0.0
    %1068 = vmatpush1.msra.mxu0 0.0
    %1069 = vmatprep.subr.mxu0 0.0
    %1070 = vmatpush1.msra.mxu0 0.0
    %1071 = vmatprep.subr.mxu0 0.0
    %1072 = vmatpush1.msra.mxu0 0.0
    %1073 = vmatprep.subr.mxu0 0.0
    %1074 = vmatpush1.msra.mxu0 0.0
    %1075 = vmatprep.subr.mxu0 0.0
    %1076 = vmatpush1.msra.mxu0 0.0
    %1077 = vmatprep.subr.mxu0 0.0
    %1078 = vmatpush1.msra.mxu0 0.0
    %1079 = vmatprep.subr.mxu0 0.0
    %1080 = vmatpush1.msra.mxu0 0.0
    %1081 = vmatprep.subr.mxu0 0.0
    %1082 = vmatpush1.msra.mxu0 0.0
    %1083 = vmatprep.subr.mxu0 0.0
    %1084 = vmatpush1.msra.mxu0 0.0
    %1085 = vmatprep.subr.mxu0 0.0
    %1086 = vmatpush1.msra.mxu0 0.0
    %1087 = vmatprep.subr.mxu0 0.0
    %1088 = vmatpush1.msra.mxu0 0.0
    %1089 = vmatprep.subr.mxu0 0.0
    %1090 = vmatpush1.msra.mxu0 0.0
    %1091 = vmatprep.subr.mxu0 0.0
    %1092 = vmatpush1.msra.mxu0 0.0
    %1093 = vmatprep.subr.mxu0 0.0
    %1094 = vmatpush1.msra.mxu0 0.0
    %1095 = vmatprep.subr.mxu0 0.0
    %1096 = vmatpush1.msra.mxu0 0.0
    %1097 = vmatprep.mubr.f32.mxu0 0.0
    %1098 = vmatmul.mubr.f32.gmra.mrb[0].mxu0 %v725
    %v1099 = vpop.f32.mrb[0].mxu0
    %v1100 = vadd.f32 0.0, %v1099
    %v1101 = vpop.f32.mrb[0].mxu0
    %v1102 = vadd.f32 0.0, %v1101
    %1103 = vdwg.mxu0
    %1104 = vmatprep.subr.mxu0 0.0
    %1105 = vmatpush1.msra.mxu0 %v388
    %1106 = vmatprep.subr.mxu0 0.0
    %1107 = vmatpush1.msra.mxu0 %v391
    %1108 = vmatprep.subr.mxu0 0.0
    %1109 = vmatpush1.msra.mxu0 %v394
    %1110 = vmatprep.subr.mxu0 0.0
    %1111 = vmatpush1.msra.mxu0 %v397
    %1112 = vmatprep.subr.mxu0 0.0
    %1113 = vmatpush1.msra.mxu0 %v400
    %1114 = vmatprep.subr.mxu0 0.0
    %1115 = vmatpush1.msra.mxu0 %v403
    %1116 = vmatprep.subr.mxu0 0.0
    %1117 = vmatpush1.msra.mxu0 %v406
    %1118 = vmatprep.subr.mxu0 0.0
    %1119 = vmatpush1.msra.mxu0 %v409
    %1120 = vmatprep.subr.mxu0 0.0
    %1121 = vmatpush1.msra.mxu0 %v412
    %1122 = vmatprep.subr.mxu0 0.0
    %1123 = vmatpush1.msra.mxu0 %v415
    %1124 = vmatprep.subr.mxu0 0.0
    %1125 = vmatpush1.msra.mxu0 %v418
    %1126 = vmatprep.subr.mxu0 0.0
    %1127 = vmatpush1.msra.mxu0 %v421
    %1128 = vmatprep.subr.mxu0 0.0
    %1129 = vmatpush1.msra.mxu0 %v424
    %1130 = vmatprep.subr.mxu0 0.0
    %1131 = vmatpush1.msra.mxu0 %v427
    %1132 = vmatprep.subr.mxu0 0.0
    %1133 = vmatpush1.msra.mxu0 %v430
    %1134 = vmatprep.subr.mxu0 0.0
    %1135 = vmatpush1.msra.mxu0 %v433
    %1136 = vmatprep.subr.mxu0 0.0
    %1137 = vmatpush1.msra.mxu0 0.0
    %1138 = vmatprep.subr.mxu0 0.0
    %1139 = vmatpush1.msra.mxu0 0.0
    %1140 = vmatprep.subr.mxu0 0.0
    %1141 = vmatpush1.msra.mxu0 0.0
    %1142 = vmatprep.subr.mxu0 0.0
    %1143 = vmatpush1.msra.mxu0 0.0
    %1144 = vmatprep.subr.mxu0 0.0
    %1145 = vmatpush1.msra.mxu0 0.0
    %1146 = vmatprep.subr.mxu0 0.0
    %1147 = vmatpush1.msra.mxu0 0.0
    %1148 = vmatprep.subr.mxu0 0.0
    %1149 = vmatpush1.msra.mxu0 0.0
    %1150 = vmatprep.subr.mxu0 0.0
    %1151 = vmatpush1.msra.mxu0 0.0
    %1152 = vmatprep.subr.mxu0 0.0
    %1153 = vmatpush1.msra.mxu0 0.0
    %1154 = vmatprep.subr.mxu0 0.0
    %1155 = vmatpush1.msra.mxu0 0.0
    %1156 = vmatprep.subr.mxu0 0.0
    %1157 = vmatpush1.msra.mxu0 0.0
    %1158 = vmatprep.subr.mxu0 0.0
    %1159 = vmatpush1.msra.mxu0 0.0
    %1160 = vmatprep.subr.mxu0 0.0
    %1161 = vmatpush1.msra.mxu0 0.0
    %1162 = vmatprep.subr.mxu0 0.0
    %1163 = vmatpush1.msra.mxu0 0.0
    %1164 = vmatprep.subr.mxu0 0.0
    %1165 = vmatpush1.msra.mxu0 0.0
    %1166 = vmatprep.subr.mxu0 0.0
    %1167 = vmatpush1.msra.mxu0 0.0
    %1168 = vmatprep.mubr.f32.mxu0 0.0
    %1169 = vmatmul.mubr.f32.gmra.mrb[0].mxu0 %v725
    %v1170 = vpop.f32.mrb[0].mxu0
    %v1171 = vadd.f32 0.0, %v1170
    %v1172 = vpop.f32.mrb[0].mxu0
    %1173 = vdwg.mxu0
    %v1174 = vadd.f32 %v1030, %v1100
    %v1175 = vxor.u32 %v1174, 2147483648
    %v1176 = vmul.f32 %v1175, 1.442695
    %v1177 = vpow.pop %v1176
    %v1178 = vadd.f32 %v1177, 1.0
    %v1179 = vrcp.pop %v1178
    %v1180 = vmul.f32 1.0, %v1179
    %v1181 = vadd.f32 %v1031, %v1102
    %v1182 = vxor.u32 %v1181, 2147483648
    %v1183 = vmul.f32 %v1182, 1.442695
    %v1184 = vpow.pop %v1183
    %v1185 = vadd.f32 %v1184, 1.0
    %v1186 = vrcp.pop %v1185
    %v1187 = vmul.f32 1.0, %v1186
    %v1188 = vadd.f32 %v1171, %v439
    %v1189 = vmul.f32 %v1180, %v1188
    %v1190 = vadd.f32 %v1032, %v1189
    %v1191 = vtanh.pop %v1190
    %v1192 = vsub.f32 %v725, %v1191
    %v1193 = vmul.f32 %v1187, %v1192
    %v1194 = vadd.f32 %v1191, %v1193
    %1195 = vmatprep.subr.mxu0 %v442
    %1196 = vmatpush1.msra.mxu0 %v441
    %1197 = vmatprep.subr.mxu0 %v445
    %1198 = vmatpush1.msra.mxu0 %v444
    %1199 = vmatprep.subr.mxu0 %v448
    %1200 = vmatpush1.msra.mxu0 %v447
    %1201 = vmatprep.subr.mxu0 %v451
    %1202 = vmatpush1.msra.mxu0 %v450
    %1203 = vmatprep.subr.mxu0 %v454
    %1204 = vmatpush1.msra.mxu0 %v453
    %1205 = vmatprep.subr.mxu0 %v457
    %1206 = vmatpush1.msra.mxu0 %v456
    %1207 = vmatprep.subr.mxu0 %v460
    %1208 = vmatpush1.msra.mxu0 %v459
    %1209 = vmatprep.subr.mxu0 %v463
    %1210 = vmatpush1.msra.mxu0 %v462
    %1211 = vmatprep.subr.mxu0 %v466
    %1212 = vmatpush1.msra.mxu0 %v465
    %1213 = vmatprep.subr.mxu0 %v469
    %1214 = vmatpush1.msra.mxu0 %v468
    %1215 = vmatprep.subr.mxu0 %v472
    %1216 = vmatpush1.msra.mxu0 %v471
    %1217 = vmatprep.subr.mxu0 %v475
    %1218 = vmatpush1.msra.mxu0 %v474
    %1219 = vmatprep.subr.mxu0 %v478
    %1220 = vmatpush1.msra.mxu0 %v477
    %1221 = vmatprep.subr.mxu0 %v481
    %1222 = vmatpush1.msra.mxu0 %v480
    %1223 = vmatprep.subr.mxu0 %v484
    %1224 = vmatpush1.msra.mxu0 %v483
    %1225 = vmatprep.subr.mxu0 %v487
    %1226 = vmatpush1.msra.mxu0 %v486
    %1227 = vmatprep.subr.mxu0 0.0
    %1228 = vmatpush1.msra.mxu0 0.0
    %1229 = vmatprep.subr.mxu0 0.0
    %1230 = vmatpush1.msra.mxu0 0.0
    %1231 = vmatprep.subr.mxu0 0.0
    %1232 = vmatpush1.msra.mxu0 0.0
    %1233 = vmatprep.subr.mxu0 0.0
    %1234 = vmatpush1.msra.mxu0 0.0
    %1235 = vmatprep.subr.mxu0 0.0
    %1236 = vmatpush1.msra.mxu0 0.0
    %1237 = vmatprep.subr.mxu0 0.0
    %1238 = vmatpush1.msra.mxu0 0.0
    %1239 = vmatprep.subr.mxu0 0.0
    %1240 = vmatpush1.msra.mxu0 0.0
    %1241 = vmatprep.subr.mxu0 0.0
    %1242 = vmatpush1.msra.mxu0 0.0
    %1243 = vmatprep.subr.mxu0 0.0
    %1244 = vmatpush1.msra.mxu0 0.0
    %1245 = vmatprep.subr.mxu0 0.0
    %1246 = vmatpush1.msra.mxu0 0.0
    %1247 = vmatprep.subr.mxu0 0.0
    %1248 = vmatpush1.msra.mxu0 0.0
    %1249 = vmatprep.subr.mxu0 0.0
    %1250 = vmatpush1.msra.mxu0 0.0
    %1251 = vmatprep.subr.mxu0 0.0
    %1252 = vmatpush1.msra.mxu0 0.0
    %1253 = vmatprep.subr.mxu0 0.0
    %1254 = vmatpush1.msra.mxu0 0.0
    %1255 = vmatprep.subr.mxu0 0.0
    %1256 = vmatpush1.msra.mxu0 0.0
    %1257 = vmatprep.subr.mxu0 0.0
    %1258 = vmatpush1.msra.mxu0 0.0
    %1259 = vmatprep.mubr.f32.mxu0 0.0
    %1260 = vmatmul.mubr.f32.gmra.mrb[0].mxu0 %v1194
    %v1261 = vpop.f32.mrb[0].mxu0
    %v1262 = vadd.f32 %v542, %v1261
    %v1263 = vpop.f32.mrb[0].mxu0
    %v1264 = vadd.f32 %v546, %v1263
    %1265 = vdwg.mxu0
    %1266 = vmatprep.subr.mxu0 0.0
    %1267 = vmatpush1.msra.mxu0 %v443
    %1268 = vmatprep.subr.mxu0 0.0
    %1269 = vmatpush1.msra.mxu0 %v446
    %1270 = vmatprep.subr.mxu0 0.0
    %1271 = vmatpush1.msra.mxu0 %v449
    %1272 = vmatprep.subr.mxu0 0.0
    %1273 = vmatpush1.msra.mxu0 %v452
    %1274 = vmatprep.subr.mxu0 0.0
    %1275 = vmatpush1.msra.mxu0 %v455
    %1276 = vmatprep.subr.mxu0 0.0
    %1277 = vmatpush1.msra.mxu0 %v458
    %1278 = vmatprep.subr.mxu0 0.0
    %1279 = vmatpush1.msra.mxu0 %v461
    %1280 = vmatprep.subr.mxu0 0.0
    %1281 = vmatpush1.msra.mxu0 %v464
    %1282 = vmatprep.subr.mxu0 0.0
    %1283 = vmatpush1.msra.mxu0 %v467
    %1284 = vmatprep.subr.mxu0 0.0
    %1285 = vmatpush1.msra.mxu0 %v470
    %1286 = vmatprep.subr.mxu0 0.0
    %1287 = vmatpush1.msra.mxu0 %v473
    %1288 = vmatprep.subr.mxu0 0.0
    %1289 = vmatpush1.msra.mxu0 %v476
    %1290 = vmatprep.subr.mxu0 0.0
    %1291 = vmatpush1.msra.mxu0 %v479
    %1292 = vmatprep.subr.mxu0 0.0
    %1293 = vmatpush1.msra.mxu0 %v482
    %1294 = vmatprep.subr.mxu0 0.0
    %1295 = vmatpush1.msra.mxu0 %v485
    %1296 = vmatprep.subr.mxu0 0.0
    %1297 = vmatpush1.msra.mxu0 %v488
    %1298 = vmatprep.subr.mxu0 0.0
    %1299 = vmatpush1.msra.mxu0 0.0
    %1300 = vmatprep.subr.mxu0 0.0
    %1301 = vmatpush1.msra.mxu0 0.0
    %1302 = vmatprep.subr.mxu0 0.0
    %1303 = vmatpush1.msra.mxu0 0.0
    %1304 = vmatprep.subr.mxu0 0.0
    %1305 = vmatpush1.msra.mxu0 0.0
    %1306 = vmatprep.subr.mxu0 0.0
    %1307 = vmatpush1.msra.mxu0 0.0
    %1308 = vmatprep.subr.mxu0 0.0
    %1309 = vmatpush1.msra.mxu0 0.0
    %1310 = vmatprep.subr.mxu0 0.0
    %1311 = vmatpush1.msra.mxu0 0.0
    %1312 = vmatprep.subr.mxu0 0.0
    %1313 = vmatpush1.msra.mxu0 0.0
    %1314 = vmatprep.subr.mxu0 0.0
    %1315 = vmatpush1.msra.mxu0 0.0
    %1316 = vmatprep.subr.mxu0 0.0
    %1317 = vmatpush1.msra.mxu0 0.0
    %1318 = vmatprep.subr.mxu0 0.0
    %1319 = vmatpush1.msra.mxu0 0.0
    %1320 = vmatprep.subr.mxu0 0.0
    %1321 = vmatpush1.msra.mxu0 0.0
    %1322 = vmatprep.subr.mxu0 0.0
    %1323 = vmatpush1.msra.mxu0 0.0
    %1324 = vmatprep.subr.mxu0 0.0
    %1325 = vmatpush1.msra.mxu0 0.0
    %1326 = vmatprep.subr.mxu0 0.0
    %1327 = vmatpush1.msra.mxu0 0.0
    %1328 = vmatprep.subr.mxu0 0.0
    %1329 = vmatpush1.msra.mxu0 0.0
    %1330 = vmatprep.mubr.f32.mxu0 0.0
    %1331 = vmatmul.mubr.f32.gmra.mrb[0].mxu0 %v1194
    %v1332 = vpop.f32.mrb[0].mxu0
    %v1333 = vadd.f32 %v550, %v1332
    %v1334 = vpop.f32.mrb[0].mxu0
    %1335 = vdwg.mxu0
    %1336 = vmatprep.subr.mxu0 %v490
    %1337 = vmatpush1.msra.mxu0 %v489
    %1338 = vmatprep.subr.mxu0 %v493
    %1339 = vmatpush1.msra.mxu0 %v492
    %1340 = vmatprep.subr.mxu0 %v496
    %1341 = vmatpush1.msra.mxu0 %v495
    %1342 = vmatprep.subr.mxu0 %v499
    %1343 = vmatpush1.msra.mxu0 %v498
    %1344 = vmatprep.subr.mxu0 %v502
    %1345 = vmatpush1.msra.mxu0 %v501
    %1346 = vmatprep.subr.mxu0 %v505
    %1347 = vmatpush1.msra.mxu0 %v504
    %1348 = vmatprep.subr.mxu0 %v508
    %1349 = vmatpush1.msra.mxu0 %v507
    %1350 = vmatprep.subr.mxu0 %v511
    %1351 = vmatpush1.msra.mxu0 %v510
    %1352 = vmatprep.subr.mxu0 %v514
    %1353 = vmatpush1.msra.mxu0 %v513
    %1354 = vmatprep.subr.mxu0 %v517
    %1355 = vmatpush1.msra.mxu0 %v516
    %1356 = vmatprep.subr.mxu0 %v520
    %1357 = vmatpush1.msra.mxu0 %v519
    %1358 = vmatprep.subr.mxu0 %v523
    %1359 = vmatpush1.msra.mxu0 %v522
    %1360 = vmatprep.subr.mxu0 %v526
    %1361 = vmatpush1.msra.mxu0 %v525
    %1362 = vmatprep.subr.mxu0 %v529
    %1363 = vmatpush1.msra.mxu0 %v528
    %1364 = vmatprep.subr.mxu0 %v532
    %1365 = vmatpush1.msra.mxu0 %v531
    %1366 = vmatprep.subr.mxu0 %v535
    %1367 = vmatpush1.msra.mxu0 %v534
    %1368 = vmatprep.subr.mxu0 0.0
    %1369 = vmatpush1.msra.mxu0 0.0
    %1370 = vmatprep.subr.mxu0 0.0
    %1371 = vmatpush1.msra.mxu0 0.0
    %1372 = vmatprep.subr.mxu0 0.0
    %1373 = vmatpush1.msra.mxu0 0.0
    %1374 = vmatprep.subr.mxu0 0.0
    %1375 = vmatpush1.msra.mxu0 0.0
    %1376 = vmatprep.subr.mxu0 0.0
    %1377 = vmatpush1.msra.mxu0 0.0
    %1378 = vmatprep.subr.mxu0 0.0
    %1379 = vmatpush1.msra.mxu0 0.0
    %1380 = vmatprep.subr.mxu0 0.0
    %1381 = vmatpush1.msra.mxu0 0.0
    %1382 = vmatprep.subr.mxu0 0.0
    %1383 = vmatpush1.msra.mxu0 0.0
    %1384 = vmatprep.subr.mxu0 0.0
    %1385 = vmatpush1.msra.mxu0 0.0
    %1386 = vmatprep.subr.mxu0 0.0
    %1387 = vmatpush1.msra.mxu0 0.0
    %1388 = vmatprep.subr.mxu0 0.0
    %1389 = vmatpush1.msra.mxu0 0.0
    %1390 = vmatprep.subr.mxu0 0.0
    %1391 = vmatpush1.msra.mxu0 0.0
    %1392 = vmatprep.subr.mxu0 0.0
    %1393 = vmatpush1.msra.mxu0 0.0
    %1394 = vmatprep.subr.mxu0 0.0
    %1395 = vmatpush1.msra.mxu0 0.0
    %1396 = vmatprep.subr.mxu0 0.0
    %1397 = vmatpush1.msra.mxu0 0.0
    %1398 = vmatprep.subr.mxu0 0.0
    %1399 = vmatpush1.msra.mxu0 0.0
    %1400 = vmatprep.mubr.f32.mxu0 0.0
    %1401 = vmatmul.mubr.f32.gmra.mrb[0].mxu0 %v1028
    %v1402 = vpop.f32.mrb[0].mxu0
    %v1403 = vadd.f32 0.0, %v1402
    %v1404 = vpop.f32.mrb[0].mxu0
    %v1405 = vadd.f32 0.0, %v1404
    %1406 = vdwg.mxu0
    %1407 = vmatprep.subr.mxu0 0.0
    %1408 = vmatpush1.msra.mxu0 %v491
    %1409 = vmatprep.subr.mxu0 0.0
    %1410 = vmatpush1.msra.mxu0 %v494
    %1411 = vmatprep.subr.mxu0 0.0
    %1412 = vmatpush1.msra.mxu0 %v497
    %1413 = vmatprep.subr.mxu0 0.0
    %1414 = vmatpush1.msra.mxu0 %v500
    %1415 = vmatprep.subr.mxu0 0.0
    %1416 = vmatpush1.msra.mxu0 %v503
    %1417 = vmatprep.subr.mxu0 0.0
    %1418 = vmatpush1.msra.mxu0 %v506
    %1419 = vmatprep.subr.mxu0 0.0
    %1420 = vmatpush1.msra.mxu0 %v509
    %1421 = vmatprep.subr.mxu0 0.0
    %1422 = vmatpush1.msra.mxu0 %v512
    %1423 = vmatprep.subr.mxu0 0.0
    %1424 = vmatpush1.msra.mxu0 %v515
    %1425 = vmatprep.subr.mxu0 0.0
    %1426 = vmatpush1.msra.mxu0 %v518
    %1427 = vmatprep.subr.mxu0 0.0
    %1428 = vmatpush1.msra.mxu0 %v521
    %1429 = vmatprep.subr.mxu0 0.0
    %1430 = vmatpush1.msra.mxu0 %v524
    %1431 = vmatprep.subr.mxu0 0.0
    %1432 = vmatpush1.msra.mxu0 %v527
    %1433 = vmatprep.subr.mxu0 0.0
    %1434 = vmatpush1.msra.mxu0 %v530
    %1435 = vmatprep.subr.mxu0 0.0
    %1436 = vmatpush1.msra.mxu0 %v533
    %1437 = vmatprep.subr.mxu0 0.0
    %1438 = vmatpush1.msra.mxu0 %v536
    %1439 = vmatprep.subr.mxu0 0.0
    %1440 = vmatpush1.msra.mxu0 0.0
    %1441 = vmatprep.subr.mxu0 0.0
    %1442 = vmatpush1.msra.mxu0 0.0
    %1443 = vmatprep.subr.mxu0 0.0
    %1444 = vmatpush1.msra.mxu0 0.0
    %1445 = vmatprep.subr.mxu0 0.0
    %1446 = vmatpush1.msra.mxu0 0.0
    %1447 = vmatprep.subr.mxu0 0.0
    %1448 = vmatpush1.msra.mxu0 0.0
    %1449 = vmatprep.subr.mxu0 0.0
    %1450 = vmatpush1.msra.mxu0 0.0
    %1451 = vmatprep.subr.mxu0 0.0
    %1452 = vmatpush1.msra.mxu0 0.0
    %1453 = vmatprep.subr.mxu0 0.0
    %1454 = vmatpush1.msra.mxu0 0.0
    %1455 = vmatprep.subr.mxu0 0.0
    %1456 = vmatpush1.msra.mxu0 0.0
    %1457 = vmatprep.subr.mxu0 0.0
    %1458 = vmatpush1.msra.mxu0 0.0
    %1459 = vmatprep.subr.mxu0 0.0
    %1460 = vmatpush1.msra.mxu0 0.0
    %1461 = vmatprep.subr.mxu0 0.0
    %1462 = vmatpush1.msra.mxu0 0.0
    %1463 = vmatprep.subr.mxu0 0.0
    %1464 = vmatpush1.msra.mxu0 0.0
    %1465 = vmatprep.subr.mxu0 0.0
    %1466 = vmatpush1.msra.mxu0 0.0
    %1467 = vmatprep.subr.mxu0 0.0
    %1468 = vmatpush1.msra.mxu0 0.0
    %1469 = vmatprep.subr.mxu0 0.0
    %1470 = vmatpush1.msra.mxu0 0.0
    %1471 = vmatprep.mubr.f32.mxu0 0.0
    %1472 = vmatmul.mubr.f32.gmra.mrb[0].mxu0 %v1028
    %v1473 = vpop.f32.mrb[0].mxu0
    %v1474 = vadd.f32 0.0, %v1473
    %v1475 = vpop.f32.mrb[0].mxu0
    %1476 = vdwg.mxu0
    %v1477 = vadd.f32 %v1262, %v1403
    %v1478 = vxor.u32 %v1477, 2147483648
    %v1479 = vmul.f32 %v1478, 1.442695
    %v1480 = vpow.pop %v1479
    %v1481 = vadd.f32 %v1480, 1.0
    %v1482 = vrcp.pop %v1481
    %v1483 = vmul.f32 1.0, %v1482
    %v1484 = vadd.f32 %v1264, %v1405
    %v1485 = vxor.u32 %v1484, 2147483648
    %v1486 = vmul.f32 %v1485, 1.442695
    %v1487 = vpow.pop %v1486
    %v1488 = vadd.f32 %v1487, 1.0
    %v1489 = vrcp.pop %v1488
    %v1490 = vmul.f32 1.0, %v1489
    %v1491 = vadd.f32 %v1474, %v559
    %v1492 = vmul.f32 %v1483, %v1491
    %v1493 = vadd.f32 %v1333, %v1492
    %v1494 = vtanh.pop %v1493
    %v1495 = vsub.f32 %v1028, %v1494
    %v1496 = vmul.f32 %v1490, %v1495
    %v1497 = vadd.f32 %v1494, %v1496
    %1498 = vst [vmem:[#allocation3 + $0x8] sm:$0xff] %v1497
    %v1499 = vld [vmem:[#allocation2 + $0x30] sm:$0xff]
    %v1500 = vld [vmem:[#allocation2 + $0x38] sm:$0xff]
    %v1501 = vld [vmem:[#allocation2 + $0x40] sm:$0xff]
    %1502 = vmatprep.subr.mxu0 %v387
    %1503 = vmatpush1.msra.mxu0 %v386
    %1504 = vmatprep.subr.mxu0 %v390
    %1505 = vmatpush1.msra.mxu0 %v389
    %1506 = vmatprep.subr.mxu0 %v393
    %1507 = vmatpush1.msra.mxu0 %v392
    %1508 = vmatprep.subr.mxu0 %v396
    %1509 = vmatpush1.msra.mxu0 %v395
    %1510 = vmatprep.subr.mxu0 %v399
    %1511 = vmatpush1.msra.mxu0 %v398
    %1512 = vmatprep.subr.mxu0 %v402
    %1513 = vmatpush1.msra.mxu0 %v401
    %1514 = vmatprep.subr.mxu0 %v405
    %1515 = vmatpush1.msra.mxu0 %v404
    %1516 = vmatprep.subr.mxu0 %v408
    %1517 = vmatpush1.msra.mxu0 %v407
    %1518 = vmatprep.subr.mxu0 %v411
    %1519 = vmatpush1.msra.mxu0 %v410
    %1520 = vmatprep.subr.mxu0 %v414
    %1521 = vmatpush1.msra.mxu0 %v413
    %1522 = vmatprep.subr.mxu0 %v417
    %1523 = vmatpush1.msra.mxu0 %v416
    %1524 = vmatprep.subr.mxu0 %v420
    %1525 = vmatpush1.msra.mxu0 %v419
    %1526 = vmatprep.subr.mxu0 %v423
    %1527 = vmatpush1.msra.mxu0 %v422
    %1528 = vmatprep.subr.mxu0 %v426
    %1529 = vmatpush1.msra.mxu0 %v425
    %1530 = vmatprep.subr.mxu0 %v429
    %1531 = vmatpush1.msra.mxu0 %v428
    %1532 = vmatprep.subr.mxu0 %v432
    %1533 = vmatpush1.msra.mxu0 %v431
    %1534 = vmatprep.subr.mxu0 0.0
    %1535 = vmatpush1.msra.mxu0 0.0
    %1536 = vmatprep.subr.mxu0 0.0
    %1537 = vmatpush1.msra.mxu0 0.0
    %1538 = vmatprep.subr.mxu0 0.0
    %1539 = vmatpush1.msra.mxu0 0.0
    %1540 = vmatprep.subr.mxu0 0.0
    %1541 = vmatpush1.msra.mxu0 0.0
    %1542 = vmatprep.subr.mxu0 0.0
    %1543 = vmatpush1.msra.mxu0 0.0
    %1544 = vmatprep.subr.mxu0 0.0
    %1545 = vmatpush1.msra.mxu0 0.0
    %1546 = vmatprep.subr.mxu0 0.0
    %1547 = vmatpush1.msra.mxu0 0.0
    %1548 = vmatprep.subr.mxu0 0.0
    %1549 = vmatpush1.msra.mxu0 0.0
    %1550 = vmatprep.subr.mxu0 0.0
    %1551 = vmatpush1.msra.mxu0 0.0
    %1552 = vmatprep.subr.mxu0 0.0
    %1553 = vmatpush1.msra.mxu0 0.0
    %1554 = vmatprep.subr.mxu0 0.0
    %1555 = vmatpush1.msra.mxu0 0.0
    %1556 = vmatprep.subr.mxu0 0.0
    %1557 = vmatpush1.msra.mxu0 0.0
    %1558 = vmatprep.subr.mxu0 0.0
    %1559 = vmatpush1.msra.mxu0 0.0
    %1560 = vmatprep.subr.mxu0 0.0
    %1561 = vmatpush1.msra.mxu0 0.0
    %1562 = vmatprep.subr.mxu0 0.0
    %1563 = vmatpush1.msra.mxu0 0.0
    %1564 = vmatprep.subr.mxu0 0.0
    %1565 = vmatpush1.msra.mxu0 0.0
    %1566 = vmatprep.mubr.f32.mxu0 0.0
    %1567 = vmatmul.mubr.f32.gmra.mrb[0].mxu0 %v1194
    %v1568 = vpop.f32.mrb[0].mxu0
    %v1569 = vadd.f32 0.0, %v1568
    %v1570 = vpop.f32.mrb[0].mxu0
    %v1571 = vadd.f32 0.0, %v1570
    %1572 = vdwg.mxu0
    %1573 = vmatprep.subr.mxu0 0.0
    %1574 = vmatpush1.msra.mxu0 %v388
    %1575 = vmatprep.subr.mxu0 0.0
    %1576 = vmatpush1.msra.mxu0 %v391
    %1577 = vmatprep.subr.mxu0 0.0
    %1578 = vmatpush1.msra.mxu0 %v394
    %1579 = vmatprep.subr.mxu0 0.0
    %1580 = vmatpush1.msra.mxu0 %v397
    %1581 = vmatprep.subr.mxu0 0.0
    %1582 = vmatpush1.msra.mxu0 %v400
    %1583 = vmatprep.subr.mxu0 0.0
    %1584 = vmatpush1.msra.mxu0 %v403
    %1585 = vmatprep.subr.mxu0 0.0
    %1586 = vmatpush1.msra.mxu0 %v406
    %1587 = vmatprep.subr.mxu0 0.0
    %1588 = vmatpush1.msra.mxu0 %v409
    %1589 = vmatprep.subr.mxu0 0.0
    %1590 = vmatpush1.msra.mxu0 %v412
    %1591 = vmatprep.subr.mxu0 0.0
    %1592 = vmatpush1.msra.mxu0 %v415
    %1593 = vmatprep.subr.mxu0 0.0
    %1594 = vmatpush1.msra.mxu0 %v418
    %1595 = vmatprep.subr.mxu0 0.0
    %1596 = vmatpush1.msra.mxu0 %v421
    %1597 = vmatprep.subr.mxu0 0.0
    %1598 = vmatpush1.msra.mxu0 %v424
    %1599 = vmatprep.subr.mxu0 0.0
    %1600 = vmatpush1.msra.mxu0 %v427
    %1601 = vmatprep.subr.mxu0 0.0
    %1602 = vmatpush1.msra.mxu0 %v430
    %1603 = vmatprep.subr.mxu0 0.0
    %1604 = vmatpush1.msra.mxu0 %v433
    %1605 = vmatprep.subr.mxu0 0.0
    %1606 = vmatpush1.msra.mxu0 0.0
    %1607 = vmatprep.subr.mxu0 0.0
    %1608 = vmatpush1.msra.mxu0 0.0
    %1609 = vmatprep.subr.mxu0 0.0
    %1610 = vmatpush1.msra.mxu0 0.0
    %1611 = vmatprep.subr.mxu0 0.0
    %1612 = vmatpush1.msra.mxu0 0.0
    %1613 = vmatprep.subr.mxu0 0.0
    %1614 = vmatpush1.msra.mxu0 0.0
    %1615 = vmatprep.subr.mxu0 0.0
    %1616 = vmatpush1.msra.mxu0 0.0
    %1617 = vmatprep.subr.mxu0 0.0
    %1618 = vmatpush1.msra.mxu0 0.0
    %1619 = vmatprep.subr.mxu0 0.0
    %1620 = vmatpush1.msra.mxu0 0.0
    %1621 = vmatprep.subr.mxu0 0.0
    %1622 = vmatpush1.msra.mxu0 0.0
    %1623 = vmatprep.subr.mxu0 0.0
    %1624 = vmatpush1.msra.mxu0 0.0
    %1625 = vmatprep.subr.mxu0 0.0
    %1626 = vmatpush1.msra.mxu0 0.0
    %1627 = vmatprep.subr.mxu0 0.0
    %1628 = vmatpush1.msra.mxu0 0.0
    %1629 = vmatprep.subr.mxu0 0.0
    %1630 = vmatpush1.msra.mxu0 0.0
    %1631 = vmatprep.subr.mxu0 0.0
    %1632 = vmatpush1.msra.mxu0 0.0
    %1633 = vmatprep.subr.mxu0 0.0
    %1634 = vmatpush1.msra.mxu0 0.0
    %1635 = vmatprep.subr.mxu0 0.0
    %1636 = vmatpush1.msra.mxu0 0.0
    %1637 = vmatprep.mubr.f32.mxu0 0.0
    %1638 = vmatmul.mubr.f32.gmra.mrb[0].mxu0 %v1194
    %v1639 = vpop.f32.mrb[0].mxu0
    %v1640 = vadd.f32 0.0, %v1639
    %v1641 = vpop.f32.mrb[0].mxu0
    %1642 = vdwg.mxu0
    %v1643 = vadd.f32 %v1499, %v1569
    %v1644 = vxor.u32 %v1643, 2147483648
    %v1645 = vmul.f32 %v1644, 1.442695
    %v1646 = vpow.pop %v1645
    %v1647 = vadd.f32 %v1646, 1.0
    %v1648 = vrcp.pop %v1647
    %v1649 = vmul.f32 1.0, %v1648
    %v1650 = vadd.f32 %v1500, %v1571
    %v1651 = vxor.u32 %v1650, 2147483648
    %v1652 = vmul.f32 %v1651, 1.442695
    %v1653 = vpow.pop %v1652
    %v1654 = vadd.f32 %v1653, 1.0
    %v1655 = vrcp.pop %v1654
    %v1656 = vmul.f32 1.0, %v1655
    %v1657 = vadd.f32 %v1640, %v439
    %v1658 = vmul.f32 %v1649, %v1657
    %v1659 = vadd.f32 %v1501, %v1658
    %v1660 = vtanh.pop %v1659
    %v1661 = vsub.f32 %v1194, %v1660
    %v1662 = vmul.f32 %v1656, %v1661
    %v1663 = vadd.f32 %v1660, %v1662
    %1664 = vmatprep.subr.mxu0 %v442
    %1665 = vmatpush1.msra.mxu0 %v441
    %1666 = vmatprep.subr.mxu0 %v445
    %1667 = vmatpush1.msra.mxu0 %v444
    %1668 = vmatprep.subr.mxu0 %v448
    %1669 = vmatpush1.msra.mxu0 %v447
    %1670 = vmatprep.subr.mxu0 %v451
    %1671 = vmatpush1.msra.mxu0 %v450
    %1672 = vmatprep.subr.mxu0 %v454
    %1673 = vmatpush1.msra.mxu0 %v453
    %1674 = vmatprep.subr.mxu0 %v457
    %1675 = vmatpush1.msra.mxu0 %v456
    %1676 = vmatprep.subr.mxu0 %v460
    %1677 = vmatpush1.msra.mxu0 %v459
    %1678 = vmatprep.subr.mxu0 %v463
    %1679 = vmatpush1.msra.mxu0 %v462
    %1680 = vmatprep.subr.mxu0 %v466
    %1681 = vmatpush1.msra.mxu0 %v465
    %1682 = vmatprep.subr.mxu0 %v469
    %1683 = vmatpush1.msra.mxu0 %v468
    %1684 = vmatprep.subr.mxu0 %v472
    %1685 = vmatpush1.msra.mxu0 %v471
    %1686 = vmatprep.subr.mxu0 %v475
    %1687 = vmatpush1.msra.mxu0 %v474
    %1688 = vmatprep.subr.mxu0 %v478
    %1689 = vmatpush1.msra.mxu0 %v477
    %1690 = vmatprep.subr.mxu0 %v481
    %1691 = vmatpush1.msra.mxu0 %v480
    %1692 = vmatprep.subr.mxu0 %v484
    %1693 = vmatpush1.msra.mxu0 %v483
    %1694 = vmatprep.subr.mxu0 %v487
    %1695 = vmatpush1.msra.mxu0 %v486
    %1696 = vmatprep.subr.mxu0 0.0
    %1697 = vmatpush1.msra.mxu0 0.0
    %1698 = vmatprep.subr.mxu0 0.0
    %1699 = vmatpush1.msra.mxu0 0.0
    %1700 = vmatprep.subr.mxu0 0.0
    %1701 = vmatpush1.msra.mxu0 0.0
    %1702 = vmatprep.subr.mxu0 0.0
    %1703 = vmatpush1.msra.mxu0 0.0
    %1704 = vmatprep.subr.mxu0 0.0
    %1705 = vmatpush1.msra.mxu0 0.0
    %1706 = vmatprep.subr.mxu0 0.0
    %1707 = vmatpush1.msra.mxu0 0.0
    %1708 = vmatprep.subr.mxu0 0.0
    %1709 = vmatpush1.msra.mxu0 0.0
    %1710 = vmatprep.subr.mxu0 0.0
    %1711 = vmatpush1.msra.mxu0 0.0
    %1712 = vmatprep.subr.mxu0 0.0
    %1713 = vmatpush1.msra.mxu0 0.0
    %1714 = vmatprep.subr.mxu0 0.0
    %1715 = vmatpush1.msra.mxu0 0.0
    %1716 = vmatprep.subr.mxu0 0.0
    %1717 = vmatpush1.msra.mxu0 0.0
    %1718 = vmatprep.subr.mxu0 0.0
    %1719 = vmatpush1.msra.mxu0 0.0
    %1720 = vmatprep.subr.mxu0 0.0
    %1721 = vmatpush1.msra.mxu0 0.0
    %1722 = vmatprep.subr.mxu0 0.0
    %1723 = vmatpush1.msra.mxu0 0.0
    %1724 = vmatprep.subr.mxu0 0.0
    %1725 = vmatpush1.msra.mxu0 0.0
    %1726 = vmatprep.subr.mxu0 0.0
    %1727 = vmatpush1.msra.mxu0 0.0
    %1728 = vmatprep.mubr.f32.mxu0 0.0
    %1729 = vmatmul.mubr.f32.gmra.mrb[0].mxu0 %v1663
    %v1730 = vpop.f32.mrb[0].mxu0
    %v1731 = vadd.f32 %v542, %v1730
    %v1732 = vpop.f32.mrb[0].mxu0
    %v1733 = vadd.f32 %v546, %v1732
    %1734 = vdwg.mxu0
    %1735 = vmatprep.subr.mxu0 0.0
    %1736 = vmatpush1.msra.mxu0 %v443
    %1737 = vmatprep.subr.mxu0 0.0
    %1738 = vmatpush1.msra.mxu0 %v446
    %1739 = vmatprep.subr.mxu0 0.0
    %1740 = vmatpush1.msra.mxu0 %v449
    %1741 = vmatprep.subr.mxu0 0.0
    %1742 = vmatpush1.msra.mxu0 %v452
    %1743 = vmatprep.subr.mxu0 0.0
    %1744 = vmatpush1.msra.mxu0 %v455
    %1745 = vmatprep.subr.mxu0 0.0
    %1746 = vmatpush1.msra.mxu0 %v458
    %1747 = vmatprep.subr.mxu0 0.0
    %1748 = vmatpush1.msra.mxu0 %v461
    %1749 = vmatprep.subr.mxu0 0.0
    %1750 = vmatpush1.msra.mxu0 %v464
    %1751 = vmatprep.subr.mxu0 0.0
    %1752 = vmatpush1.msra.mxu0 %v467
    %1753 = vmatprep.subr.mxu0 0.0
    %1754 = vmatpush1.msra.mxu0 %v470
    %1755 = vmatprep.subr.mxu0 0.0
    %1756 = vmatpush1.msra.mxu0 %v473
    %1757 = vmatprep.subr.mxu0 0.0
    %1758 = vmatpush1.msra.mxu0 %v476
    %1759 = vmatprep.subr.mxu0 0.0
    %1760 = vmatpush1.msra.mxu0 %v479
    %1761 = vmatprep.subr.mxu0 0.0
    %1762 = vmatpush1.msra.mxu0 %v482
    %1763 = vmatprep.subr.mxu0 0.0
    %1764 = vmatpush1.msra.mxu0 %v485
    %1765 = vmatprep.subr.mxu0 0.0
    %1766 = vmatpush1.msra.mxu0 %v488
    %1767 = vmatprep.subr.mxu0 0.0
    %1768 = vmatpush1.msra.mxu0 0.0
    %1769 = vmatprep.subr.mxu0 0.0
    %1770 = vmatpush1.msra.mxu0 0.0
    %1771 = vmatprep.subr.mxu0 0.0
    %1772 = vmatpush1.msra.mxu0 0.0
    %1773 = vmatprep.subr.mxu0 0.0
    %1774 = vmatpush1.msra.mxu0 0.0
    %1775 = vmatprep.subr.mxu0 0.0
    %1776 = vmatpush1.msra.mxu0 0.0
    %1777 = vmatprep.subr.mxu0 0.0
    %1778 = vmatpush1.msra.mxu0 0.0
    %1779 = vmatprep.subr.mxu0 0.0
    %1780 = vmatpush1.msra.mxu0 0.0
    %1781 = vmatprep.subr.mxu0 0.0
    %1782 = vmatpush1.msra.mxu0 0.0
    %1783 = vmatprep.subr.mxu0 0.0
    %1784 = vmatpush1.msra.mxu0 0.0
    %1785 = vmatprep.subr.mxu0 0.0
    %1786 = vmatpush1.msra.mxu0 0.0
    %1787 = vmatprep.subr.mxu0 0.0
    %1788 = vmatpush1.msra.mxu0 0.0
    %1789 = vmatprep.subr.mxu0 0.0
    %1790 = vmatpush1.msra.mxu0 0.0
    %1791 = vmatprep.subr.mxu0 0.0
    %1792 = vmatpush1.msra.mxu0 0.0
    %1793 = vmatprep.subr.mxu0 0.0
    %1794 = vmatpush1.msra.mxu0 0.0
    %1795 = vmatprep.subr.mxu0 0.0
    %1796 = vmatpush1.msra.mxu0 0.0
    %1797 = vmatprep.subr.mxu0 0.0
    %1798 = vmatpush1.msra.mxu0 0.0
    %1799 = vmatprep.mubr.f32.mxu0 0.0
    %1800 = vmatmul.mubr.f32.gmra.mrb[0].mxu0 %v1663
    %v1801 = vpop.f32.mrb[0].mxu0
    %v1802 = vadd.f32 %v550, %v1801
    %v1803 = vpop.f32.mrb[0].mxu0
    %1804 = vdwg.mxu0
    %1805 = vmatprep.subr.mxu0 %v490
    %1806 = vmatpush1.msra.mxu0 %v489
    %1807 = vmatprep.subr.mxu0 %v493
    %1808 = vmatpush1.msra.mxu0 %v492
    %1809 = vmatprep.subr.mxu0 %v496
    %1810 = vmatpush1.msra.mxu0 %v495
    %1811 = vmatprep.subr.mxu0 %v499
    %1812 = vmatpush1.msra.mxu0 %v498
    %1813 = vmatprep.subr.mxu0 %v502
    %1814 = vmatpush1.msra.mxu0 %v501
    %1815 = vmatprep.subr.mxu0 %v505
    %1816 = vmatpush1.msra.mxu0 %v504
    %1817 = vmatprep.subr.mxu0 %v508
    %1818 = vmatpush1.msra.mxu0 %v507
    %1819 = vmatprep.subr.mxu0 %v511
    %1820 = vmatpush1.msra.mxu0 %v510
    %1821 = vmatprep.subr.mxu0 %v514
    %1822 = vmatpush1.msra.mxu0 %v513
    %1823 = vmatprep.subr.mxu0 %v517
    %1824 = vmatpush1.msra.mxu0 %v516
    %1825 = vmatprep.subr.mxu0 %v520
    %1826 = vmatpush1.msra.mxu0 %v519
    %1827 = vmatprep.subr.mxu0 %v523
    %1828 = vmatpush1.msra.mxu0 %v522
    %1829 = vmatprep.subr.mxu0 %v526
    %1830 = vmatpush1.msra.mxu0 %v525
    %1831 = vmatprep.subr.mxu0 %v529
    %1832 = vmatpush1.msra.mxu0 %v528
    %1833 = vmatprep.subr.mxu0 %v532
    %1834 = vmatpush1.msra.mxu0 %v531
    %1835 = vmatprep.subr.mxu0 %v535
    %1836 = vmatpush1.msra.mxu0 %v534
    %1837 = vmatprep.subr.mxu0 0.0
    %1838 = vmatpush1.msra.mxu0 0.0
    %1839 = vmatprep.subr.mxu0 0.0
    %1840 = vmatpush1.msra.mxu0 0.0
    %1841 = vmatprep.subr.mxu0 0.0
    %1842 = vmatpush1.msra.mxu0 0.0
    %1843 = vmatprep.subr.mxu0 0.0
    %1844 = vmatpush1.msra.mxu0 0.0
    %1845 = vmatprep.subr.mxu0 0.0
    %1846 = vmatpush1.msra.mxu0 0.0
    %1847 = vmatprep.subr.mxu0 0.0
    %1848 = vmatpush1.msra.mxu0 0.0
    %1849 = vmatprep.subr.mxu0 0.0
    %1850 = vmatpush1.msra.mxu0 0.0
    %1851 = vmatprep.subr.mxu0 0.0
    %1852 = vmatpush1.msra.mxu0 0.0
    %1853 = vmatprep.subr.mxu0 0.0
    %1854 = vmatpush1.msra.mxu0 0.0
    %1855 = vmatprep.subr.mxu0 0.0
    %1856 = vmatpush1.msra.mxu0 0.0
    %1857 = vmatprep.subr.mxu0 0.0
    %1858 = vmatpush1.msra.mxu0 0.0
    %1859 = vmatprep.subr.mxu0 0.0
    %1860 = vmatpush1.msra.mxu0 0.0
    %1861 = vmatprep.subr.mxu0 0.0
    %1862 = vmatpush1.msra.mxu0 0.0
    %1863 = vmatprep.subr.mxu0 0.0
    %1864 = vmatpush1.msra.mxu0 0.0
    %1865 = vmatprep.subr.mxu0 0.0
    %1866 = vmatpush1.msra.mxu0 0.0
    %1867 = vmatprep.subr.mxu0 0.0
    %1868 = vmatpush1.msra.mxu0 0.0
    %1869 = vmatprep.mubr.f32.mxu0 0.0
    %1870 = vmatmul.mubr.f32.gmra.mrb[0].mxu0 %v1497
    %v1871 = vpop.f32.mrb[0].mxu0
    %v1872 = vadd.f32 0.0, %v1871
    %v1873 = vpop.f32.mrb[0].mxu0
    %v1874 = vadd.f32 0.0, %v1873
    %1875 = vdwg.mxu0
    %1876 = vmatprep.subr.mxu0 0.0
    %1877 = vmatpush1.msra.mxu0 %v491
    %1878 = vmatprep.subr.mxu0 0.0
    %1879 = vmatpush1.msra.mxu0 %v494
    %1880 = vmatprep.subr.mxu0 0.0
    %1881 = vmatpush1.msra.mxu0 %v497
    %1882 = vmatprep.subr.mxu0 0.0
    %1883 = vmatpush1.msra.mxu0 %v500
    %1884 = vmatprep.subr.mxu0 0.0
    %1885 = vmatpush1.msra.mxu0 %v503
    %1886 = vmatprep.subr.mxu0 0.0
    %1887 = vmatpush1.msra.mxu0 %v506
    %1888 = vmatprep.subr.mxu0 0.0
    %1889 = vmatpush1.msra.mxu0 %v509
    %1890 = vmatprep.subr.mxu0 0.0
    %1891 = vmatpush1.msra.mxu0 %v512
    %1892 = vmatprep.subr.mxu0 0.0
    %1893 = vmatpush1.msra.mxu0 %v515
    %1894 = vmatprep.subr.mxu0 0.0
    %1895 = vmatpush1.msra.mxu0 %v518
    %1896 = vmatprep.subr.mxu0 0.0
    %1897 = vmatpush1.msra.mxu0 %v521
    %1898 = vmatprep.subr.mxu0 0.0
    %1899 = vmatpush1.msra.mxu0 %v524
    %1900 = vmatprep.subr.mxu0 0.0
    %1901 = vmatpush1.msra.mxu0 %v527
    %1902 = vmatprep.subr.mxu0 0.0
    %1903 = vmatpush1.msra.mxu0 %v530
    %1904 = vmatprep.subr.mxu0 0.0
    %1905 = vmatpush1.msra.mxu0 %v533
    %1906 = vmatprep.subr.mxu0 0.0
    %1907 = vmatpush1.msra.mxu0 %v536
    %1908 = vmatprep.subr.mxu0 0.0
    %1909 = vmatpush1.msra.mxu0 0.0
    %1910 = vmatprep.subr.mxu0 0.0
    %1911 = vmatpush1.msra.mxu0 0.0
    %1912 = vmatprep.subr.mxu0 0.0
    %1913 = vmatpush1.msra.mxu0 0.0
    %1914 = vmatprep.subr.mxu0 0.0
    %1915 = vmatpush1.msra.mxu0 0.0
    %1916 = vmatprep.subr.mxu0 0.0
    %1917 = vmatpush1.msra.mxu0 0.0
    %1918 = vmatprep.subr.mxu0 0.0
    %1919 = vmatpush1.msra.mxu0 0.0
    %1920 = vmatprep.subr.mxu0 0.0
    %1921 = vmatpush1.msra.mxu0 0.0
    %1922 = vmatprep.subr.mxu0 0.0
    %1923 = vmatpush1.msra.mxu0 0.0
    %1924 = vmatprep.subr.mxu0 0.0
    %1925 = vmatpush1.msra.mxu0 0.0
    %1926 = vmatprep.subr.mxu0 0.0
    %1927 = vmatpush1.msra.mxu0 0.0
    %1928 = vmatprep.subr.mxu0 0.0
    %1929 = vmatpush1.msra.mxu0 0.0
    %1930 = vmatprep.subr.mxu0 0.0
    %1931 = vmatpush1.msra.mxu0 0.0
    %1932 = vmatprep.subr.mxu0 0.0
    %1933 = vmatpush1.msra.mxu0 0.0
    %1934 = vmatprep.subr.mxu0 0.0
    %1935 = vmatpush1.msra.mxu0 0.0
    %1936 = vmatprep.subr.mxu0 0.0
    %1937 = vmatpush1.msra.mxu0 0.0
    %1938 = vmatprep.subr.mxu0 0.0
    %1939 = vmatpush1.msra.mxu0 0.0
    %1940 = vmatprep.mubr.f32.mxu0 0.0
    %1941 = vmatmul.mubr.f32.gmra.mrb[0].mxu0 %v1497
    %v1942 = vpop.f32.mrb[0].mxu0
    %v1943 = vadd.f32 0.0, %v1942
    %v1944 = vpop.f32.mrb[0].mxu0
    %1945 = vdwg.mxu0
    %v1946 = vadd.f32 %v1731, %v1872
    %v1947 = vxor.u32 %v1946, 2147483648
    %v1948 = vmul.f32 %v1947, 1.442695
    %v1949 = vpow.pop %v1948
    %v1950 = vadd.f32 %v1949, 1.0
    %v1951 = vrcp.pop %v1950
    %v1952 = vmul.f32 1.0, %v1951
    %v1953 = vadd.f32 %v1733, %v1874
    %v1954 = vxor.u32 %v1953, 2147483648
    %v1955 = vmul.f32 %v1954, 1.442695
    %v1956 = vpow.pop %v1955
    %v1957 = vadd.f32 %v1956, 1.0
    %v1958 = vrcp.pop %v1957
    %v1959 = vmul.f32 1.0, %v1958
    %v1960 = vadd.f32 %v1943, %v559
    %v1961 = vmul.f32 %v1952, %v1960
    %v1962 = vadd.f32 %v1802, %v1961
    %v1963 = vtanh.pop %v1962
    %v1964 = vsub.f32 %v1497, %v1963
    %v1965 = vmul.f32 %v1959, %v1964
    %v1966 = vadd.f32 %v1963, %v1965
    %1967 = vst [vmem:[#allocation3 + $0x10] sm:$0xff] %v1966
    %v1968 = vld [vmem:[#allocation2 + $0x48] sm:$0xff]
    %v1969 = vld [vmem:[#allocation2 + $0x50] sm:$0xff]
    %v1970 = vld [vmem:[#allocation2 + $0x58] sm:$0xff]
    %1971 = vmatprep.subr.mxu0 %v387
    %1972 = vmatpush1.msra.mxu0 %v386
    %1973 = vmatprep.subr.mxu0 %v390
    %1974 = vmatpush1.msra.mxu0 %v389
    %1975 = vmatprep.subr.mxu0 %v393
    %1976 = vmatpush1.msra.mxu0 %v392
    %1977 = vmatprep.subr.mxu0 %v396
    %1978 = vmatpush1.msra.mxu0 %v395
    %1979 = vmatprep.subr.mxu0 %v399
    %1980 = vmatpush1.msra.mxu0 %v398
    %1981 = vmatprep.subr.mxu0 %v402
    %1982 = vmatpush1.msra.mxu0 %v401
    %1983 = vmatprep.subr.mxu0 %v405
    %1984 = vmatpush1.msra.mxu0 %v404
    %1985 = vmatprep.subr.mxu0 %v408
    %1986 = vmatpush1.msra.mxu0 %v407
    %1987 = vmatprep.subr.mxu0 %v411
    %1988 = vmatpush1.msra.mxu0 %v410
    %1989 = vmatprep.subr.mxu0 %v414
    %1990 = vmatpush1.msra.mxu0 %v413
    %1991 = vmatprep.subr.mxu0 %v417
    %1992 = vmatpush1.msra.mxu0 %v416
    %1993 = vmatprep.subr.mxu0 %v420
    %1994 = vmatpush1.msra.mxu0 %v419
    %1995 = vmatprep.subr.mxu0 %v423
    %1996 = vmatpush1.msra.mxu0 %v422
    %1997 = vmatprep.subr.mxu0 %v426
    %1998 = vmatpush1.msra.mxu0 %v425
    %1999 = vmatprep.subr.mxu0 %v429
    %2000 = vmatpush1.msra.mxu0 %v428
    %2001 = vmatprep.subr.mxu0 %v432
    %2002 = vmatpush1.msra.mxu0 %v431
    %2003 = vmatprep.subr.mxu0 0.0
    %2004 = vmatpush1.msra.mxu0 0.0
    %2005 = vmatprep.subr.mxu0 0.0
    %2006 = vmatpush1.msra.mxu0 0.0
    %2007 = vmatprep.subr.mxu0 0.0
    %2008 = vmatpush1.msra.mxu0 0.0
    %2009 = vmatprep.subr.mxu0 0.0
    %2010 = vmatpush1.msra.mxu0 0.0
    %2011 = vmatprep.subr.mxu0 0.0
    %2012 = vmatpush1.msra.mxu0 0.0
    %2013 = vmatprep.subr.mxu0 0.0
    %2014 = vmatpush1.msra.mxu0 0.0
    %2015 = vmatprep.subr.mxu0 0.0
    %2016 = vmatpush1.msra.mxu0 0.0
    %2017 = vmatprep.subr.mxu0 0.0
    %2018 = vmatpush1.msra.mxu0 0.0
    %2019 = vmatprep.subr.mxu0 0.0
    %2020 = vmatpush1.msra.mxu0 0.0
    %2021 = vmatprep.subr.mxu0 0.0
    %2022 = vmatpush1.msra.mxu0 0.0
    %2023 = vmatprep.subr.mxu0 0.0
    %2024 = vmatpush1.msra.mxu0 0.0
    %2025 = vmatprep.subr.mxu0 0.0
    %2026 = vmatpush1.msra.mxu0 0.0
    %2027 = vmatprep.subr.mxu0 0.0
    %2028 = vmatpush1.msra.mxu0 0.0
    %2029 = vmatprep.subr.mxu0 0.0
    %2030 = vmatpush1.msra.mxu0 0.0
    %2031 = vmatprep.subr.mxu0 0.0
    %2032 = vmatpush1.msra.mxu0 0.0
    %2033 = vmatprep.subr.mxu0 0.0
    %2034 = vmatpush1.msra.mxu0 0.0
    %2035 = vmatprep.mubr.f32.mxu0 0.0
    %2036 = vmatmul.mubr.f32.gmra.mrb[0].mxu0 %v1663
    %v2037 = vpop.f32.mrb[0].mxu0
    %v2038 = vadd.f32 0.0, %v2037
    %v2039 = vpop.f32.mrb[0].mxu0
    %v2040 = vadd.f32 0.0, %v2039
    %2041 = vdwg.mxu0
    %2042 = vmatprep.subr.mxu0 0.0
    %2043 = vmatpush1.msra.mxu0 %v388
    %2044 = vmatprep.subr.mxu0 0.0
    %2045 = vmatpush1.msra.mxu0 %v391
    %2046 = vmatprep.subr.mxu0 0.0
    %2047 = vmatpush1.msra.mxu0 %v394
    %2048 = vmatprep.subr.mxu0 0.0
    %2049 = vmatpush1.msra.mxu0 %v397
    %2050 = vmatprep.subr.mxu0 0.0
    %2051 = vmatpush1.msra.mxu0 %v400
    %2052 = vmatprep.subr.mxu0 0.0
    %2053 = vmatpush1.msra.mxu0 %v403
    %2054 = vmatprep.subr.mxu0 0.0
    %2055 = vmatpush1.msra.mxu0 %v406
    %2056 = vmatprep.subr.mxu0 0.0
    %2057 = vmatpush1.msra.mxu0 %v409
    %2058 = vmatprep.subr.mxu0 0.0
    %2059 = vmatpush1.msra.mxu0 %v412
    %2060 = vmatprep.subr.mxu0 0.0
    %2061 = vmatpush1.msra.mxu0 %v415
    %2062 = vmatprep.subr.mxu0 0.0
    %2063 = vmatpush1.msra.mxu0 %v418
    %2064 = vmatprep.subr.mxu0 0.0
    %2065 = vmatpush1.msra.mxu0 %v421
    %2066 = vmatprep.subr.mxu0 0.0
    %2067 = vmatpush1.msra.mxu0 %v424
    %2068 = vmatprep.subr.mxu0 0.0
    %2069 = vmatpush1.msra.mxu0 %v427
    %2070 = vmatprep.subr.mxu0 0.0
    %2071 = vmatpush1.msra.mxu0 %v430
    %2072 = vmatprep.subr.mxu0 0.0
    %2073 = vmatpush1.msra.mxu0 %v433
    %2074 = vmatprep.subr.mxu0 0.0
    %2075 = vmatpush1.msra.mxu0 0.0
    %2076 = vmatprep.subr.mxu0 0.0
    %2077 = vmatpush1.msra.mxu0 0.0
    %2078 = vmatprep.subr.mxu0 0.0
    %2079 = vmatpush1.msra.mxu0 0.0
    %2080 = vmatprep.subr.mxu0 0.0
    %2081 = vmatpush1.msra.mxu0 0.0
    %2082 = vmatprep.subr.mxu0 0.0
    %2083 = vmatpush1.msra.mxu0 0.0
    %2084 = vmatprep.subr.mxu0 0.0
    %2085 = vmatpush1.msra.mxu0 0.0
    %2086 = vmatprep.subr.mxu0 0.0
    %2087 = vmatpush1.msra.mxu0 0.0
    %2088 = vmatprep.subr.mxu0 0.0
    %2089 = vmatpush1.msra.mxu0 0.0
    %2090 = vmatprep.subr.mxu0 0.0
    %2091 = vmatpush1.msra.mxu0 0.0
    %2092 = vmatprep.subr.mxu0 0.0
    %2093 = vmatpush1.msra.mxu0 0.0
    %2094 = vmatprep.subr.mxu0 0.0
    %2095 = vmatpush1.msra.mxu0 0.0
    %2096 = vmatprep.subr.mxu0 0.0
    %2097 = vmatpush1.msra.mxu0 0.0
    %2098 = vmatprep.subr.mxu0 0.0
    %2099 = vmatpush1.msra.mxu0 0.0
    %2100 = vmatprep.subr.mxu0 0.0
    %2101 = vmatpush1.msra.mxu0 0.0
    %2102 = vmatprep.subr.mxu0 0.0
    %2103 = vmatpush1.msra.mxu0 0.0
    %2104 = vmatprep.subr.mxu0 0.0
    %2105 = vmatpush1.msra.mxu0 0.0
    %2106 = vmatprep.mubr.f32.mxu0 0.0
    %2107 = vmatmul.mubr.f32.gmra.mrb[0].mxu0 %v1663
    %v2108 = vpop.f32.mrb[0].mxu0
    %v2109 = vadd.f32 0.0, %v2108
    %v2110 = vpop.f32.mrb[0].mxu0
    %2111 = vdwg.mxu0
    %v2112 = vadd.f32 %v1968, %v2038
    %v2113 = vxor.u32 %v2112, 2147483648
    %v2114 = vmul.f32 %v2113, 1.442695
    %v2115 = vpow.pop %v2114
    %v2116 = vadd.f32 %v2115, 1.0
    %v2117 = vrcp.pop %v2116
    %v2118 = vmul.f32 1.0, %v2117
    %v2119 = vadd.f32 %v1969, %v2040
    %v2120 = vxor.u32 %v2119, 2147483648
    %v2121 = vmul.f32 %v2120, 1.442695
    %v2122 = vpow.pop %v2121
    %v2123 = vadd.f32 %v2122, 1.0
    %v2124 = vrcp.pop %v2123
    %v2125 = vmul.f32 1.0, %v2124
    %v2126 = vadd.f32 %v2109, %v439
    %v2127 = vmul.f32 %v2118, %v2126
    %v2128 = vadd.f32 %v1970, %v2127
    %v2129 = vtanh.pop %v2128
    %v2130 = vsub.f32 %v1663, %v2129
    %v2131 = vmul.f32 %v2125, %v2130
    %v2132 = vadd.f32 %v2129, %v2131
    %2133 = vmatprep.subr.mxu0 %v442
    %2134 = vmatpush1.msra.mxu0 %v441
    %2135 = vmatprep.subr.mxu0 %v445
    %2136 = vmatpush1.msra.mxu0 %v444
    %2137 = vmatprep.subr.mxu0 %v448
    %2138 = vmatpush1.msra.mxu0 %v447
    %2139 = vmatprep.subr.mxu0 %v451
    %2140 = vmatpush1.msra.mxu0 %v450
    %2141 = vmatprep.subr.mxu0 %v454
    %2142 = vmatpush1.msra.mxu0 %v453
    %2143 = vmatprep.subr.mxu0 %v457
    %2144 = vmatpush1.msra.mxu0 %v456
    %2145 = vmatprep.subr.mxu0 %v460
    %2146 = vmatpush1.msra.mxu0 %v459
    %2147 = vmatprep.subr.mxu0 %v463
    %2148 = vmatpush1.msra.mxu0 %v462
    %2149 = vmatprep.subr.mxu0 %v466
    %2150 = vmatpush1.msra.mxu0 %v465
    %2151 = vmatprep.subr.mxu0 %v469
    %2152 = vmatpush1.msra.mxu0 %v468
    %2153 = vmatprep.subr.mxu0 %v472
    %2154 = vmatpush1.msra.mxu0 %v471
    %2155 = vmatprep.subr.mxu0 %v475
    %2156 = vmatpush1.msra.mxu0 %v474
    %2157 = vmatprep.subr.mxu0 %v478
    %2158 = vmatpush1.msra.mxu0 %v477
    %2159 = vmatprep.subr.mxu0 %v481
    %2160 = vmatpush1.msra.mxu0 %v480
    %2161 = vmatprep.subr.mxu0 %v484
    %2162 = vmatpush1.msra.mxu0 %v483
    %2163 = vmatprep.subr.mxu0 %v487
    %2164 = vmatpush1.msra.mxu0 %v486
    %2165 = vmatprep.subr.mxu0 0.0
    %2166 = vmatpush1.msra.mxu0 0.0
    %2167 = vmatprep.subr.mxu0 0.0
    %2168 = vmatpush1.msra.mxu0 0.0
    %2169 = vmatprep.subr.mxu0 0.0
    %2170 = vmatpush1.msra.mxu0 0.0
    %2171 = vmatprep.subr.mxu0 0.0
    %2172 = vmatpush1.msra.mxu0 0.0
    %2173 = vmatprep.subr.mxu0 0.0
    %2174 = vmatpush1.msra.mxu0 0.0
    %2175 = vmatprep.subr.mxu0 0.0
    %2176 = vmatpush1.msra.mxu0 0.0
    %2177 = vmatprep.subr.mxu0 0.0
    %2178 = vmatpush1.msra.mxu0 0.0
    %2179 = vmatprep.subr.mxu0 0.0
    %2180 = vmatpush1.msra.mxu0 0.0
    %2181 = vmatprep.subr.mxu0 0.0
    %2182 = vmatpush1.msra.mxu0 0.0
    %2183 = vmatprep.subr.mxu0 0.0
    %2184 = vmatpush1.msra.mxu0 0.0
    %2185 = vmatprep.subr.mxu0 0.0
    %2186 = vmatpush1.msra.mxu0 0.0
    %2187 = vmatprep.subr.mxu0 0.0
    %2188 = vmatpush1.msra.mxu0 0.0
    %2189 = vmatprep.subr.mxu0 0.0
    %2190 = vmatpush1.msra.mxu0 0.0
    %2191 = vmatprep.subr.mxu0 0.0
    %2192 = vmatpush1.msra.mxu0 0.0
    %2193 = vmatprep.subr.mxu0 0.0
    %2194 = vmatpush1.msra.mxu0 0.0
    %2195 = vmatprep.subr.mxu0 0.0
    %2196 = vmatpush1.msra.mxu0 0.0
    %2197 = vmatprep.mubr.f32.mxu0 0.0
    %2198 = vmatmul.mubr.f32.gmra.mrb[0].mxu0 %v2132
    %v2199 = vpop.f32.mrb[0].mxu0
    %v2200 = vadd.f32 %v542, %v2199
    %v2201 = vpop.f32.mrb[0].mxu0
    %v2202 = vadd.f32 %v546, %v2201
    %2203 = vdwg.mxu0
    %2204 = vmatprep.subr.mxu0 0.0
    %2205 = vmatpush1.msra.mxu0 %v443
    %2206 = vmatprep.subr.mxu0 0.0
    %2207 = vmatpush1.msra.mxu0 %v446
    %2208 = vmatprep.subr.mxu0 0.0
    %2209 = vmatpush1.msra.mxu0 %v449
    %2210 = vmatprep.subr.mxu0 0.0
    %2211 = vmatpush1.msra.mxu0 %v452
    %2212 = vmatprep.subr.mxu0 0.0
    %2213 = vmatpush1.msra.mxu0 %v455
    %2214 = vmatprep.subr.mxu0 0.0
    %2215 = vmatpush1.msra.mxu0 %v458
    %2216 = vmatprep.subr.mxu0 0.0
    %2217 = vmatpush1.msra.mxu0 %v461
    %2218 = vmatprep.subr.mxu0 0.0
    %2219 = vmatpush1.msra.mxu0 %v464
    %2220 = vmatprep.subr.mxu0 0.0
    %2221 = vmatpush1.msra.mxu0 %v467
    %2222 = vmatprep.subr.mxu0 0.0
    %2223 = vmatpush1.msra.mxu0 %v470
    %2224 = vmatprep.subr.mxu0 0.0
    %2225 = vmatpush1.msra.mxu0 %v473
    %2226 = vmatprep.subr.mxu0 0.0
    %2227 = vmatpush1.msra.mxu0 %v476
    %2228 = vmatprep.subr.mxu0 0.0
    %2229 = vmatpush1.msra.mxu0 %v479
    %2230 = vmatprep.subr.mxu0 0.0
    %2231 = vmatpush1.msra.mxu0 %v482
    %2232 = vmatprep.subr.mxu0 0.0
    %2233 = vmatpush1.msra.mxu0 %v485
    %2234 = vmatprep.subr.mxu0 0.0
    %2235 = vmatpush1.msra.mxu0 %v488
    %2236 = vmatprep.subr.mxu0 0.0
    %2237 = vmatpush1.msra.mxu0 0.0
    %2238 = vmatprep.subr.mxu0 0.0
    %2239 = vmatpush1.msra.mxu0 0.0
    %2240 = vmatprep.subr.mxu0 0.0
    %2241 = vmatpush1.msra.mxu0 0.0
    %2242 = vmatprep.subr.mxu0 0.0
    %2243 = vmatpush1.msra.mxu0 0.0
    %2244 = vmatprep.subr.mxu0 0.0
    %2245 = vmatpush1.msra.mxu0 0.0
    %2246 = vmatprep.subr.mxu0 0.0
    %2247 = vmatpush1.msra.mxu0 0.0
    %2248 = vmatprep.subr.mxu0 0.0
    %2249 = vmatpush1.msra.mxu0 0.0
    %2250 = vmatprep.subr.mxu0 0.0
    %2251 = vmatpush1.msra.mxu0 0.0
    %2252 = vmatprep.subr.mxu0 0.0
    %2253 = vmatpush1.msra.mxu0 0.0
    %2254 = vmatprep.subr.mxu0 0.0
    %2255 = vmatpush1.msra.mxu0 0.0
    %2256 = vmatprep.subr.mxu0 0.0
    %2257 = vmatpush1.msra.mxu0 0.0
    %2258 = vmatprep.subr.mxu0 0.0
    %2259 = vmatpush1.msra.mxu0 0.0
    %2260 = vmatprep.subr.mxu0 0.0
    %2261 = vmatpush1.msra.mxu0 0.0
    %2262 = vmatprep.subr.mxu0 0.0
    %2263 = vmatpush1.msra.mxu0 0.0
    %2264 = vmatprep.subr.mxu0 0.0
    %2265 = vmatpush1.msra.mxu0 0.0
    %2266 = vmatprep.subr.mxu0 0.0
    %2267 = vmatpush1.msra.mxu0 0.0
    %2268 = vmatprep.mubr.f32.mxu0 0.0
    %2269 = vmatmul.mubr.f32.gmra.mrb[0].mxu0 %v2132
    %v2270 = vpop.f32.mrb[0].mxu0
    %v2271 = vadd.f32 %v550, %v2270
    %v2272 = vpop.f32.mrb[0].mxu0
    %2273 = vdwg.mxu0
    %2274 = vmatprep.subr.mxu0 %v490
    %2275 = vmatpush1.msra.mxu0 %v489
    %2276 = vmatprep.subr.mxu0 %v493
    %2277 = vmatpush1.msra.mxu0 %v492
    %2278 = vmatprep.subr.mxu0 %v496
    %2279 = vmatpush1.msra.mxu0 %v495
    %2280 = vmatprep.subr.mxu0 %v499
    %2281 = vmatpush1.msra.mxu0 %v498
    %2282 = vmatprep.subr.mxu0 %v502
    %2283 = vmatpush1.msra.mxu0 %v501
    %2284 = vmatprep.subr.mxu0 %v505
    %2285 = vmatpush1.msra.mxu0 %v504
    %2286 = vmatprep.subr.mxu0 %v508
    %2287 = vmatpush1.msra.mxu0 %v507
    %2288 = vmatprep.subr.mxu0 %v511
    %2289 = vmatpush1.msra.mxu0 %v510
    %2290 = vmatprep.subr.mxu0 %v514
    %2291 = vmatpush1.msra.mxu0 %v513
    %2292 = vmatprep.subr.mxu0 %v517
    %2293 = vmatpush1.msra.mxu0 %v516
    %2294 = vmatprep.subr.mxu0 %v520
    %2295 = vmatpush1.msra.mxu0 %v519
    %2296 = vmatprep.subr.mxu0 %v523
    %2297 = vmatpush1.msra.mxu0 %v522
    %2298 = vmatprep.subr.mxu0 %v526
    %2299 = vmatpush1.msra.mxu0 %v525
    %2300 = vmatprep.subr.mxu0 %v529
    %2301 = vmatpush1.msra.mxu0 %v528
    %2302 = vmatprep.subr.mxu0 %v532
    %2303 = vmatpush1.msra.mxu0 %v531
    %2304 = vmatprep.subr.mxu0 %v535
    %2305 = vmatpush1.msra.mxu0 %v534
    %2306 = vmatprep.subr.mxu0 0.0
    %2307 = vmatpush1.msra.mxu0 0.0
    %2308 = vmatprep.subr.mxu0 0.0
    %2309 = vmatpush1.msra.mxu0 0.0
    %2310 = vmatprep.subr.mxu0 0.0
    %2311 = vmatpush1.msra.mxu0 0.0
    %2312 = vmatprep.subr.mxu0 0.0
    %2313 = vmatpush1.msra.mxu0 0.0
    %2314 = vmatprep.subr.mxu0 0.0
    %2315 = vmatpush1.msra.mxu0 0.0
    %2316 = vmatprep.subr.mxu0 0.0
    %2317 = vmatpush1.msra.mxu0 0.0
    %2318 = vmatprep.subr.mxu0 0.0
    %2319 = vmatpush1.msra.mxu0 0.0
    %2320 = vmatprep.subr.mxu0 0.0
    %2321 = vmatpush1.msra.mxu0 0.0
    %2322 = vmatprep.subr.mxu0 0.0
    %2323 = vmatpush1.msra.mxu0 0.0
    %2324 = vmatprep.subr.mxu0 0.0
    %2325 = vmatpush1.msra.mxu0 0.0
    %2326 = vmatprep.subr.mxu0 0.0
    %2327 = vmatpush1.msra.mxu0 0.0
    %2328 = vmatprep.subr.mxu0 0.0
    %2329 = vmatpush1.msra.mxu0 0.0
    %2330 = vmatprep.subr.mxu0 0.0
    %2331 = vmatpush1.msra.mxu0 0.0
    %2332 = vmatprep.subr.mxu0 0.0
    %2333 = vmatpush1.msra.mxu0 0.0
    %2334 = vmatprep.subr.mxu0 0.0
    %2335 = vmatpush1.msra.mxu0 0.0
    %2336 = vmatprep.subr.mxu0 0.0
    %2337 = vmatpush1.msra.mxu0 0.0
    %2338 = vmatprep.mubr.f32.mxu0 0.0
    %2339 = vmatmul.mubr.f32.gmra.mrb[0].mxu0 %v1966
    %v2340 = vpop.f32.mrb[0].mxu0
    %v2341 = vadd.f32 0.0, %v2340
    %v2342 = vpop.f32.mrb[0].mxu0
    %v2343 = vadd.f32 0.0, %v2342
    %2344 = vdwg.mxu0
    %2345 = vmatprep.subr.mxu0 0.0
    %2346 = vmatpush1.msra.mxu0 %v491
    %2347 = vmatprep.subr.mxu0 0.0
    %2348 = vmatpush1.msra.mxu0 %v494
    %2349 = vmatprep.subr.mxu0 0.0
    %2350 = vmatpush1.msra.mxu0 %v497
    %2351 = vmatprep.subr.mxu0 0.0
    %2352 = vmatpush1.msra.mxu0 %v500
    %2353 = vmatprep.subr.mxu0 0.0
    %2354 = vmatpush1.msra.mxu0 %v503
    %2355 = vmatprep.subr.mxu0 0.0
    %2356 = vmatpush1.msra.mxu0 %v506
    %2357 = vmatprep.subr.mxu0 0.0
    %2358 = vmatpush1.msra.mxu0 %v509
    %2359 = vmatprep.subr.mxu0 0.0
    %2360 = vmatpush1.msra.mxu0 %v512
    %2361 = vmatprep.subr.mxu0 0.0
    %2362 = vmatpush1.msra.mxu0 %v515
    %2363 = vmatprep.subr.mxu0 0.0
    %2364 = vmatpush1.msra.mxu0 %v518
    %2365 = vmatprep.subr.mxu0 0.0
    %2366 = vmatpush1.msra.mxu0 %v521
    %2367 = vmatprep.subr.mxu0 0.0
    %2368 = vmatpush1.msra.mxu0 %v524
    %2369 = vmatprep.subr.mxu0 0.0
    %2370 = vmatpush1.msra.mxu0 %v527
    %2371 = vmatprep.subr.mxu0 0.0
    %2372 = vmatpush1.msra.mxu0 %v530
    %2373 = vmatprep.subr.mxu0 0.0
    %2374 = vmatpush1.msra.mxu0 %v533
    %2375 = vmatprep.subr.mxu0 0.0
    %2376 = vmatpush1.msra.mxu0 %v536
    %2377 = vmatprep.subr.mxu0 0.0
    %2378 = vmatpush1.msra.mxu0 0.0
    %2379 = vmatprep.subr.mxu0 0.0
    %2380 = vmatpush1.msra.mxu0 0.0
    %2381 = vmatprep.subr.mxu0 0.0
    %2382 = vmatpush1.msra.mxu0 0.0
    %2383 = vmatprep.subr.mxu0 0.0
    %2384 = vmatpush1.msra.mxu0 0.0
    %2385 = vmatprep.subr.mxu0 0.0
    %2386 = vmatpush1.msra.mxu0 0.0
    %2387 = vmatprep.subr.mxu0 0.0
    %2388 = vmatpush1.msra.mxu0 0.0
    %2389 = vmatprep.subr.mxu0 0.0
    %2390 = vmatpush1.msra.mxu0 0.0
    %2391 = vmatprep.subr.mxu0 0.0
    %2392 = vmatpush1.msra.mxu0 0.0
    %2393 = vmatprep.subr.mxu0 0.0
    %2394 = vmatpush1.msra.mxu0 0.0
    %2395 = vmatprep.subr.mxu0 0.0
    %2396 = vmatpush1.msra.mxu0 0.0
    %2397 = vmatprep.subr.mxu0 0.0
    %2398 = vmatpush1.msra.mxu0 0.0
    %2399 = vmatprep.subr.mxu0 0.0
    %2400 = vmatpush1.msra.mxu0 0.0
    %2401 = vmatprep.subr.mxu0 0.0
    %2402 = vmatpush1.msra.mxu0 0.0
    %2403 = vmatprep.subr.mxu0 0.0
    %2404 = vmatpush1.msra.mxu0 0.0
    %2405 = vmatprep.subr.mxu0 0.0
    %2406 = vmatpush1.msra.mxu0 0.0
    %2407 = vmatprep.subr.mxu0 0.0
    %2408 = vmatpush1.msra.mxu0 0.0
    %2409 = vmatprep.mubr.f32.mxu0 0.0
    %2410 = vmatmul.mubr.f32.gmra.mrb[0].mxu0 %v1966
    %v2411 = vpop.f32.mrb[0].mxu0
    %v2412 = vadd.f32 0.0, %v2411
    %v2413 = vpop.f32.mrb[0].mxu0
    %2414 = vdwg.mxu0
    %v2415 = vadd.f32 %v2200, %v2341
    %v2416 = vxor.u32 %v2415, 2147483648
    %v2417 = vmul.f32 %v2416, 1.442695
    %v2418 = vpow.pop %v2417
    %v2419 = vadd.f32 %v2418, 1.0
    %v2420 = vrcp.pop %v2419
    %v2421 = vmul.f32 1.0, %v2420
    %v2422 = vadd.f32 %v2202, %v2343
    %v2423 = vxor.u32 %v2422, 2147483648
    %v2424 = vmul.f32 %v2423, 1.442695
    %v2425 = vpow.pop %v2424
    %v2426 = vadd.f32 %v2425, 1.0
    %v2427 = vrcp.pop %v2426
    %v2428 = vmul.f32 1.0, %v2427
    %v2429 = vadd.f32 %v2412, %v559
    %v2430 = vmul.f32 %v2421, %v2429
    %v2431 = vadd.f32 %v2271, %v2430
    %v2432 = vtanh.pop %v2431
    %v2433 = vsub.f32 %v1966, %v2432
    %v2434 = vmul.f32 %v2428, %v2433
    %v2435 = vadd.f32 %v2432, %v2434
    %2436 = vst [vmem:[#allocation3 + $0x18] sm:$0xff] %v2435
    %v2437 = vld [vmem:[#allocation2 + $0x60] sm:$0xff]
    %v2438 = vld [vmem:[#allocation2 + $0x68] sm:$0xff]
    %v2439 = vld [vmem:[#allocation2 + $0x70] sm:$0xff]
    %2440 = vmatprep.subr.mxu0 %v387
    %2441 = vmatpush1.msra.mxu0 %v386
    %2442 = vmatprep.subr.mxu0 %v390
    %2443 = vmatpush1.msra.mxu0 %v389
    %2444 = vmatprep.subr.mxu0 %v393
    %2445 = vmatpush1.msra.mxu0 %v392
    %2446 = vmatprep.subr.mxu0 %v396
    %2447 = vmatpush1.msra.mxu0 %v395
    %2448 = vmatprep.subr.mxu0 %v399
    %2449 = vmatpush1.msra.mxu0 %v398
    %2450 = vmatprep.subr.mxu0 %v402
    %2451 = vmatpush1.msra.mxu0 %v401
    %2452 = vmatprep.subr.mxu0 %v405
    %2453 = vmatpush1.msra.mxu0 %v404
    %2454 = vmatprep.subr.mxu0 %v408
    %2455 = vmatpush1.msra.mxu0 %v407
    %2456 = vmatprep.subr.mxu0 %v411
    %2457 = vmatpush1.msra.mxu0 %v410
    %2458 = vmatprep.subr.mxu0 %v414
    %2459 = vmatpush1.msra.mxu0 %v413
    %2460 = vmatprep.subr.mxu0 %v417
    %2461 = vmatpush1.msra.mxu0 %v416
    %2462 = vmatprep.subr.mxu0 %v420
    %2463 = vmatpush1.msra.mxu0 %v419
    %2464 = vmatprep.subr.mxu0 %v423
    %2465 = vmatpush1.msra.mxu0 %v422
    %2466 = vmatprep.subr.mxu0 %v426
    %2467 = vmatpush1.msra.mxu0 %v425
    %2468 = vmatprep.subr.mxu0 %v429
    %2469 = vmatpush1.msra.mxu0 %v428
    %2470 = vmatprep.subr.mxu0 %v432
    %2471 = vmatpush1.msra.mxu0 %v431
    %2472 = vmatprep.subr.mxu0 0.0
    %2473 = vmatpush1.msra.mxu0 0.0
    %2474 = vmatprep.subr.mxu0 0.0
    %2475 = vmatpush1.msra.mxu0 0.0
    %2476 = vmatprep.subr.mxu0 0.0
    %2477 = vmatpush1.msra.mxu0 0.0
    %2478 = vmatprep.subr.mxu0 0.0
    %2479 = vmatpush1.msra.mxu0 0.0
    %2480 = vmatprep.subr.mxu0 0.0
    %2481 = vmatpush1.msra.mxu0 0.0
    %2482 = vmatprep.subr.mxu0 0.0
    %2483 = vmatpush1.msra.mxu0 0.0
    %2484 = vmatprep.subr.mxu0 0.0
    %2485 = vmatpush1.msra.mxu0 0.0
    %2486 = vmatprep.subr.mxu0 0.0
    %2487 = vmatpush1.msra.mxu0 0.0
    %2488 = vmatprep.subr.mxu0 0.0
    %2489 = vmatpush1.msra.mxu0 0.0
    %2490 = vmatprep.subr.mxu0 0.0
    %2491 = vmatpush1.msra.mxu0 0.0
    %2492 = vmatprep.subr.mxu0 0.0
    %2493 = vmatpush1.msra.mxu0 0.0
    %2494 = vmatprep.subr.mxu0 0.0
    %2495 = vmatpush1.msra.mxu0 0.0
    %2496 = vmatprep.subr.mxu0 0.0
    %2497 = vmatpush1.msra.mxu0 0.0
    %2498 = vmatprep.subr.mxu0 0.0
    %2499 = vmatpush1.msra.mxu0 0.0
    %2500 = vmatprep.subr.mxu0 0.0
    %2501 = vmatpush1.msra.mxu0 0.0
    %2502 = vmatprep.subr.mxu0 0.0
    %2503 = vmatpush1.msra.mxu0 0.0
    %2504 = vmatprep.mubr.f32.mxu0 0.0
    %2505 = vmatmul.mubr.f32.gmra.mrb[0].mxu0 %v2132
    %v2506 = vpop.f32.mrb[0].mxu0
    %v2507 = vadd.f32 0.0, %v2506
    %v2508 = vpop.f32.mrb[0].mxu0
    %v2509 = vadd.f32 0.0, %v2508
    %2510 = vdwg.mxu0
    %2511 = vmatprep.subr.mxu0 0.0
    %2512 = vmatpush1.msra.mxu0 %v388
    %2513 = vmatprep.subr.mxu0 0.0
    %2514 = vmatpush1.msra.mxu0 %v391
    %2515 = vmatprep.subr.mxu0 0.0
    %2516 = vmatpush1.msra.mxu0 %v394
    %2517 = vmatprep.subr.mxu0 0.0
    %2518 = vmatpush1.msra.mxu0 %v397
    %2519 = vmatprep.subr.mxu0 0.0
    %2520 = vmatpush1.msra.mxu0 %v400
    %2521 = vmatprep.subr.mxu0 0.0
    %2522 = vmatpush1.msra.mxu0 %v403
    %2523 = vmatprep.subr.mxu0 0.0
    %2524 = vmatpush1.msra.mxu0 %v406
    %2525 = vmatprep.subr.mxu0 0.0
    %2526 = vmatpush1.msra.mxu0 %v409
    %2527 = vmatprep.subr.mxu0 0.0
    %2528 = vmatpush1.msra.mxu0 %v412
    %2529 = vmatprep.subr.mxu0 0.0
    %2530 = vmatpush1.msra.mxu0 %v415
    %2531 = vmatprep.subr.mxu0 0.0
    %2532 = vmatpush1.msra.mxu0 %v418
    %2533 = vmatprep.subr.mxu0 0.0
    %2534 = vmatpush1.msra.mxu0 %v421
    %2535 = vmatprep.subr.mxu0 0.0
    %2536 = vmatpush1.msra.mxu0 %v424
    %2537 = vmatprep.subr.mxu0 0.0
    %2538 = vmatpush1.msra.mxu0 %v427
    %2539 = vmatprep.subr.mxu0 0.0
    %2540 = vmatpush1.msra.mxu0 %v430
    %2541 = vmatprep.subr.mxu0 0.0
    %2542 = vmatpush1.msra.mxu0 %v433
    %2543 = vmatprep.subr.mxu0 0.0
    %2544 = vmatpush1.msra.mxu0 0.0
    %2545 = vmatprep.subr.mxu0 0.0
    %2546 = vmatpush1.msra.mxu0 0.0
    %2547 = vmatprep.subr.mxu0 0.0
    %2548 = vmatpush1.msra.mxu0 0.0
    %2549 = vmatprep.subr.mxu0 0.0
    %2550 = vmatpush1.msra.mxu0 0.0
    %2551 = vmatprep.subr.mxu0 0.0
    %2552 = vmatpush1.msra.mxu0 0.0
    %2553 = vmatprep.subr.mxu0 0.0
    %2554 = vmatpush1.msra.mxu0 0.0
    %2555 = vmatprep.subr.mxu0 0.0
    %2556 = vmatpush1.msra.mxu0 0.0
    %2557 = vmatprep.subr.mxu0 0.0
    %2558 = vmatpush1.msra.mxu0 0.0
    %2559 = vmatprep.subr.mxu0 0.0
    %2560 = vmatpush1.msra.mxu0 0.0
    %2561 = vmatprep.subr.mxu0 0.0
    %2562 = vmatpush1.msra.mxu0 0.0
    %2563 = vmatprep.subr.mxu0 0.0
    %2564 = vmatpush1.msra.mxu0 0.0
    %2565 = vmatprep.subr.mxu0 0.0
    %2566 = vmatpush1.msra.mxu0 0.0
    %2567 = vmatprep.subr.mxu0 0.0
    %2568 = vmatpush1.msra.mxu0 0.0
    %2569 = vmatprep.subr.mxu0 0.0
    %2570 = vmatpush1.msra.mxu0 0.0
    %2571 = vmatprep.subr.mxu0 0.0
    %2572 = vmatpush1.msra.mxu0 0.0
    %2573 = vmatprep.subr.mxu0 0.0
    %2574 = vmatpush1.msra.mxu0 0.0
    %2575 = vmatprep.mubr.f32.mxu0 0.0
    %2576 = vmatmul.mubr.f32.gmra.mrb[0].mxu0 %v2132
    %v2577 = vpop.f32.mrb[0].mxu0
    %v2578 = vadd.f32 0.0, %v2577
    %v2579 = vpop.f32.mrb[0].mxu0
    %2580 = vdwg.mxu0
    %v2581 = vadd.f32 %v2437, %v2507
    %v2582 = vxor.u32 %v2581, 2147483648
    %v2583 = vmul.f32 %v2582, 1.442695
    %v2584 = vpow.pop %v2583
    %v2585 = vadd.f32 %v2584, 1.0
    %v2586 = vrcp.pop %v2585
    %v2587 = vmul.f32 1.0, %v2586
    %v2588 = vadd.f32 %v2438, %v2509
    %v2589 = vxor.u32 %v2588, 2147483648
    %v2590 = vmul.f32 %v2589, 1.442695
    %v2591 = vpow.pop %v2590
    %v2592 = vadd.f32 %v2591, 1.0
    %v2593 = vrcp.pop %v2592
    %v2594 = vmul.f32 1.0, %v2593
    %v2595 = vadd.f32 %v2578, %v439
    %v2596 = vmul.f32 %v2587, %v2595
    %v2597 = vadd.f32 %v2439, %v2596
    %v2598 = vtanh.pop %v2597
    %v2599 = vsub.f32 %v2132, %v2598
    %v2600 = vmul.f32 %v2594, %v2599
    %v2601 = vadd.f32 %v2598, %v2600
    %2602 = vmatprep.subr.mxu0 %v442
    %2603 = vmatpush1.msra.mxu0 %v441
    %2604 = vmatprep.subr.mxu0 %v445
    %2605 = vmatpush1.msra.mxu0 %v444
    %2606 = vmatprep.subr.mxu0 %v448
    %2607 = vmatpush1.msra.mxu0 %v447
    %2608 = vmatprep.subr.mxu0 %v451
    %2609 = vmatpush1.msra.mxu0 %v450
    %2610 = vmatprep.subr.mxu0 %v454
    %2611 = vmatpush1.msra.mxu0 %v453
    %2612 = vmatprep.subr.mxu0 %v457
    %2613 = vmatpush1.msra.mxu0 %v456
    %2614 = vmatprep.subr.mxu0 %v460
    %2615 = vmatpush1.msra.mxu0 %v459
    %2616 = vmatprep.subr.mxu0 %v463
    %2617 = vmatpush1.msra.mxu0 %v462
    %2618 = vmatprep.subr.mxu0 %v466
    %2619 = vmatpush1.msra.mxu0 %v465
    %2620 = vmatprep.subr.mxu0 %v469
    %2621 = vmatpush1.msra.mxu0 %v468
    %2622 = vmatprep.subr.mxu0 %v472
    %2623 = vmatpush1.msra.mxu0 %v471
    %2624 = vmatprep.subr.mxu0 %v475
    %2625 = vmatpush1.msra.mxu0 %v474
    %2626 = vmatprep.subr.mxu0 %v478
    %2627 = vmatpush1.msra.mxu0 %v477
    %2628 = vmatprep.subr.mxu0 %v481
    %2629 = vmatpush1.msra.mxu0 %v480
    %2630 = vmatprep.subr.mxu0 %v484
    %2631 = vmatpush1.msra.mxu0 %v483
    %2632 = vmatprep.subr.mxu0 %v487
    %2633 = vmatpush1.msra.mxu0 %v486
    %2634 = vmatprep.subr.mxu0 0.0
    %2635 = vmatpush1.msra.mxu0 0.0
    %2636 = vmatprep.subr.mxu0 0.0
    %2637 = vmatpush1.msra.mxu0 0.0
    %2638 = vmatprep.subr.mxu0 0.0
    %2639 = vmatpush1.msra.mxu0 0.0
    %2640 = vmatprep.subr.mxu0 0.0
    %2641 = vmatpush1.msra.mxu0 0.0
    %2642 = vmatprep.subr.mxu0 0.0
    %2643 = vmatpush1.msra.mxu0 0.0
    %2644 = vmatprep.subr.mxu0 0.0
    %2645 = vmatpush1.msra.mxu0 0.0
    %2646 = vmatprep.subr.mxu0 0.0
    %2647 = vmatpush1.msra.mxu0 0.0
    %2648 = vmatprep.subr.mxu0 0.0
    %2649 = vmatpush1.msra.mxu0 0.0
    %2650 = vmatprep.subr.mxu0 0.0
    %2651 = vmatpush1.msra.mxu0 0.0
    %2652 = vmatprep.subr.mxu0 0.0
    %2653 = vmatpush1.msra.mxu0 0.0
    %2654 = vmatprep.subr.mxu0 0.0
    %2655 = vmatpush1.msra.mxu0 0.0
    %2656 = vmatprep.subr.mxu0 0.0
    %2657 = vmatpush1.msra.mxu0 0.0
    %2658 = vmatprep.subr.mxu0 0.0
    %2659 = vmatpush1.msra.mxu0 0.0
    %2660 = vmatprep.subr.mxu0 0.0
    %2661 = vmatpush1.msra.mxu0 0.0
    %2662 = vmatprep.subr.mxu0 0.0
    %2663 = vmatpush1.msra.mxu0 0.0
    %2664 = vmatprep.subr.mxu0 0.0
    %2665 = vmatpush1.msra.mxu0 0.0
    %2666 = vmatprep.mubr.f32.mxu0 0.0
    %2667 = vmatmul.mubr.f32.gmra.mrb[0].mxu0 %v2601
    %v2668 = vpop.f32.mrb[0].mxu0
    %v2669 = vadd.f32 %v542, %v2668
    %v2670 = vpop.f32.mrb[0].mxu0
    %v2671 = vadd.f32 %v546, %v2670
    %2672 = vdwg.mxu0
    %2673 = vmatprep.subr.mxu0 0.0
    %2674 = vmatpush1.msra.mxu0 %v443
    %2675 = vmatprep.subr.mxu0 0.0
    %2676 = vmatpush1.msra.mxu0 %v446
    %2677 = vmatprep.subr.mxu0 0.0
    %2678 = vmatpush1.msra.mxu0 %v449
    %2679 = vmatprep.subr.mxu0 0.0
    %2680 = vmatpush1.msra.mxu0 %v452
    %2681 = vmatprep.subr.mxu0 0.0
    %2682 = vmatpush1.msra.mxu0 %v455
    %2683 = vmatprep.subr.mxu0 0.0
    %2684 = vmatpush1.msra.mxu0 %v458
    %2685 = vmatprep.subr.mxu0 0.0
    %2686 = vmatpush1.msra.mxu0 %v461
    %2687 = vmatprep.subr.mxu0 0.0
    %2688 = vmatpush1.msra.mxu0 %v464
    %2689 = vmatprep.subr.mxu0 0.0
    %2690 = vmatpush1.msra.mxu0 %v467
    %2691 = vmatprep.subr.mxu0 0.0
    %2692 = vmatpush1.msra.mxu0 %v470
    %2693 = vmatprep.subr.mxu0 0.0
    %2694 = vmatpush1.msra.mxu0 %v473
    %2695 = vmatprep.subr.mxu0 0.0
    %2696 = vmatpush1.msra.mxu0 %v476
    %2697 = vmatprep.subr.mxu0 0.0
    %2698 = vmatpush1.msra.mxu0 %v479
    %2699 = vmatprep.subr.mxu0 0.0
    %2700 = vmatpush1.msra.mxu0 %v482
    %2701 = vmatprep.subr.mxu0 0.0
    %2702 = vmatpush1.msra.mxu0 %v485
    %2703 = vmatprep.subr.mxu0 0.0
    %2704 = vmatpush1.msra.mxu0 %v488
    %2705 = vmatprep.subr.mxu0 0.0
    %2706 = vmatpush1.msra.mxu0 0.0
    %2707 = vmatprep.subr.mxu0 0.0
    %2708 = vmatpush1.msra.mxu0 0.0
    %2709 = vmatprep.subr.mxu0 0.0
    %2710 = vmatpush1.msra.mxu0 0.0
    %2711 = vmatprep.subr.mxu0 0.0
    %2712 = vmatpush1.msra.mxu0 0.0
    %2713 = vmatprep.subr.mxu0 0.0
    %2714 = vmatpush1.msra.mxu0 0.0
    %2715 = vmatprep.subr.mxu0 0.0
    %2716 = vmatpush1.msra.mxu0 0.0
    %2717 = vmatprep.subr.mxu0 0.0
    %2718 = vmatpush1.msra.mxu0 0.0
    %2719 = vmatprep.subr.mxu0 0.0
    %2720 = vmatpush1.msra.mxu0 0.0
    %2721 = vmatprep.subr.mxu0 0.0
    %2722 = vmatpush1.msra.mxu0 0.0
    %2723 = vmatprep.subr.mxu0 0.0
    %2724 = vmatpush1.msra.mxu0 0.0
    %2725 = vmatprep.subr.mxu0 0.0
    %2726 = vmatpush1.msra.mxu0 0.0
    %2727 = vmatprep.subr.mxu0 0.0
    %2728 = vmatpush1.msra.mxu0 0.0
    %2729 = vmatprep.subr.mxu0 0.0
    %2730 = vmatpush1.msra.mxu0 0.0
    %2731 = vmatprep.subr.mxu0 0.0
    %2732 = vmatpush1.msra.mxu0 0.0
    %2733 = vmatprep.subr.mxu0 0.0
    %2734 = vmatpush1.msra.mxu0 0.0
    %2735 = vmatprep.subr.mxu0 0.0
    %2736 = vmatpush1.msra.mxu0 0.0
    %2737 = vmatprep.mubr.f32.mxu0 0.0
    %2738 = vmatmul.mubr.f32.gmra.mrb[0].mxu0 %v2601
    %v2739 = vpop.f32.mrb[0].mxu0
    %v2740 = vadd.f32 %v550, %v2739
    %v2741 = vpop.f32.mrb[0].mxu0
    %2742 = vdwg.mxu0
    %2743 = vmatprep.subr.mxu0 %v490
    %2744 = vmatpush1.msra.mxu0 %v489
    %2745 = vmatprep.subr.mxu0 %v493
    %2746 = vmatpush1.msra.mxu0 %v492
    %2747 = vmatprep.subr.mxu0 %v496
    %2748 = vmatpush1.msra.mxu0 %v495
    %2749 = vmatprep.subr.mxu0 %v499
    %2750 = vmatpush1.msra.mxu0 %v498
    %2751 = vmatprep.subr.mxu0 %v502
    %2752 = vmatpush1.msra.mxu0 %v501
    %2753 = vmatprep.subr.mxu0 %v505
    %2754 = vmatpush1.msra.mxu0 %v504
    %2755 = vmatprep.subr.mxu0 %v508
    %2756 = vmatpush1.msra.mxu0 %v507
    %2757 = vmatprep.subr.mxu0 %v511
    %2758 = vmatpush1.msra.mxu0 %v510
    %2759 = vmatprep.subr.mxu0 %v514
    %2760 = vmatpush1.msra.mxu0 %v513
    %2761 = vmatprep.subr.mxu0 %v517
    %2762 = vmatpush1.msra.mxu0 %v516
    %2763 = vmatprep.subr.mxu0 %v520
    %2764 = vmatpush1.msra.mxu0 %v519
    %2765 = vmatprep.subr.mxu0 %v523
    %2766 = vmatpush1.msra.mxu0 %v522
    %2767 = vmatprep.subr.mxu0 %v526
    %2768 = vmatpush1.msra.mxu0 %v525
    %2769 = vmatprep.subr.mxu0 %v529
    %2770 = vmatpush1.msra.mxu0 %v528
    %2771 = vmatprep.subr.mxu0 %v532
    %2772 = vmatpush1.msra.mxu0 %v531
    %2773 = vmatprep.subr.mxu0 %v535
    %2774 = vmatpush1.msra.mxu0 %v534
    %2775 = vmatprep.subr.mxu0 0.0
    %2776 = vmatpush1.msra.mxu0 0.0
    %2777 = vmatprep.subr.mxu0 0.0
    %2778 = vmatpush1.msra.mxu0 0.0
    %2779 = vmatprep.subr.mxu0 0.0
    %2780 = vmatpush1.msra.mxu0 0.0
    %2781 = vmatprep.subr.mxu0 0.0
    %2782 = vmatpush1.msra.mxu0 0.0
    %2783 = vmatprep.subr.mxu0 0.0
    %2784 = vmatpush1.msra.mxu0 0.0
    %2785 = vmatprep.subr.mxu0 0.0
    %2786 = vmatpush1.msra.mxu0 0.0
    %2787 = vmatprep.subr.mxu0 0.0
    %2788 = vmatpush1.msra.mxu0 0.0
    %2789 = vmatprep.subr.mxu0 0.0
    %2790 = vmatpush1.msra.mxu0 0.0
    %2791 = vmatprep.subr.mxu0 0.0
    %2792 = vmatpush1.msra.mxu0 0.0
    %2793 = vmatprep.subr.mxu0 0.0
    %2794 = vmatpush1.msra.mxu0 0.0
    %2795 = vmatprep.subr.mxu0 0.0
    %2796 = vmatpush1.msra.mxu0 0.0
    %2797 = vmatprep.subr.mxu0 0.0
    %2798 = vmatpush1.msra.mxu0 0.0
    %2799 = vmatprep.subr.mxu0 0.0
    %2800 = vmatpush1.msra.mxu0 0.0
    %2801 = vmatprep.subr.mxu0 0.0
    %2802 = vmatpush1.msra.mxu0 0.0
    %2803 = vmatprep.subr.mxu0 0.0
    %2804 = vmatpush1.msra.mxu0 0.0
    %2805 = vmatprep.subr.mxu0 0.0
    %2806 = vmatpush1.msra.mxu0 0.0
    %2807 = vmatprep.mubr.f32.mxu0 0.0
    %2808 = vmatmul.mubr.f32.gmra.mrb[0].mxu0 %v2435
    %v2809 = vpop.f32.mrb[0].mxu0
    %v2810 = vadd.f32 0.0, %v2809
    %v2811 = vpop.f32.mrb[0].mxu0
    %v2812 = vadd.f32 0.0, %v2811
    %2813 = vdwg.mxu0
    %2814 = vmatprep.subr.mxu0 0.0
    %2815 = vmatpush1.msra.mxu0 %v491
    %2816 = vmatprep.subr.mxu0 0.0
    %2817 = vmatpush1.msra.mxu0 %v494
    %2818 = vmatprep.subr.mxu0 0.0
    %2819 = vmatpush1.msra.mxu0 %v497
    %2820 = vmatprep.subr.mxu0 0.0
    %2821 = vmatpush1.msra.mxu0 %v500
    %2822 = vmatprep.subr.mxu0 0.0
    %2823 = vmatpush1.msra.mxu0 %v503
    %2824 = vmatprep.subr.mxu0 0.0
    %2825 = vmatpush1.msra.mxu0 %v506
    %2826 = vmatprep.subr.mxu0 0.0
    %2827 = vmatpush1.msra.mxu0 %v509
    %2828 = vmatprep.subr.mxu0 0.0
    %2829 = vmatpush1.msra.mxu0 %v512
    %2830 = vmatprep.subr.mxu0 0.0
    %2831 = vmatpush1.msra.mxu0 %v515
    %2832 = vmatprep.subr.mxu0 0.0
    %2833 = vmatpush1.msra.mxu0 %v518
    %2834 = vmatprep.subr.mxu0 0.0
    %2835 = vmatpush1.msra.mxu0 %v521
    %2836 = vmatprep.subr.mxu0 0.0
    %2837 = vmatpush1.msra.mxu0 %v524
    %2838 = vmatprep.subr.mxu0 0.0
    %2839 = vmatpush1.msra.mxu0 %v527
    %2840 = vmatprep.subr.mxu0 0.0
    %2841 = vmatpush1.msra.mxu0 %v530
    %2842 = vmatprep.subr.mxu0 0.0
    %2843 = vmatpush1.msra.mxu0 %v533
    %2844 = vmatprep.subr.mxu0 0.0
    %2845 = vmatpush1.msra.mxu0 %v536
    %2846 = vmatprep.subr.mxu0 0.0
    %2847 = vmatpush1.msra.mxu0 0.0
    %2848 = vmatprep.subr.mxu0 0.0
    %2849 = vmatpush1.msra.mxu0 0.0
    %2850 = vmatprep.subr.mxu0 0.0
    %2851 = vmatpush1.msra.mxu0 0.0
    %2852 = vmatprep.subr.mxu0 0.0
    %2853 = vmatpush1.msra.mxu0 0.0
    %2854 = vmatprep.subr.mxu0 0.0
    %2855 = vmatpush1.msra.mxu0 0.0
    %2856 = vmatprep.subr.mxu0 0.0
    %2857 = vmatpush1.msra.mxu0 0.0
    %2858 = vmatprep.subr.mxu0 0.0
    %2859 = vmatpush1.msra.mxu0 0.0
    %2860 = vmatprep.subr.mxu0 0.0
    %2861 = vmatpush1.msra.mxu0 0.0
    %2862 = vmatprep.subr.mxu0 0.0
    %2863 = vmatpush1.msra.mxu0 0.0
    %2864 = vmatprep.subr.mxu0 0.0
    %2865 = vmatpush1.msra.mxu0 0.0
    %2866 = vmatprep.subr.mxu0 0.0
    %2867 = vmatpush1.msra.mxu0 0.0
    %2868 = vmatprep.subr.mxu0 0.0
    %2869 = vmatpush1.msra.mxu0 0.0
    %2870 = vmatprep.subr.mxu0 0.0
    %2871 = vmatpush1.msra.mxu0 0.0
    %2872 = vmatprep.subr.mxu0 0.0
    %2873 = vmatpush1.msra.mxu0 0.0
    %2874 = vmatprep.subr.mxu0 0.0
    %2875 = vmatpush1.msra.mxu0 0.0
    %2876 = vmatprep.subr.mxu0 0.0
    %2877 = vmatpush1.msra.mxu0 0.0
    %2878 = vmatprep.mubr.f32.mxu0 0.0
    %2879 = vmatmul.mubr.f32.gmra.mrb[0].mxu0 %v2435
    %v2880 = vpop.f32.mrb[0].mxu0
    %v2881 = vadd.f32 0.0, %v2880
    %v2882 = vpop.f32.mrb[0].mxu0
    %2883 = vdwg.mxu0
    %v2884 = vadd.f32 %v2669, %v2810
    %v2885 = vxor.u32 %v2884, 2147483648
    %v2886 = vmul.f32 %v2885, 1.442695
    %v2887 = vpow.pop %v2886
    %v2888 = vadd.f32 %v2887, 1.0
    %v2889 = vrcp.pop %v2888
    %v2890 = vmul.f32 1.0, %v2889
    %v2891 = vadd.f32 %v2671, %v2812
    %v2892 = vxor.u32 %v2891, 2147483648
    %v2893 = vmul.f32 %v2892, 1.442695
    %v2894 = vpow.pop %v2893
    %v2895 = vadd.f32 %v2894, 1.0
    %v2896 = vrcp.pop %v2895
    %v2897 = vmul.f32 1.0, %v2896
    %v2898 = vadd.f32 %v2881, %v559
    %v2899 = vmul.f32 %v2890, %v2898
    %v2900 = vadd.f32 %v2740, %v2899
    %v2901 = vtanh.pop %v2900
    %v2902 = vsub.f32 %v2435, %v2901
    %v2903 = vmul.f32 %v2897, %v2902
    %v2904 = vadd.f32 %v2901, %v2903
    %2905 = vst [vmem:[#allocation3 + $0x20] sm:$0xff] %v2904
    %v2906 = vld [vmem:[#allocation2 + $0x78] sm:$0xff]
    %v2907 = vld [vmem:[#allocation2 + $0x80] sm:$0xff]
    %v2908 = vld [vmem:[#allocation2 + $0x88] sm:$0xff]
    %2909 = vmatprep.subr.mxu0 %v387
    %2910 = vmatpush1.msra.mxu0 %v386
    %2911 = vmatprep.subr.mxu0 %v390
    %2912 = vmatpush1.msra.mxu0 %v389
    %2913 = vmatprep.subr.mxu0 %v393
    %2914 = vmatpush1.msra.mxu0 %v392
    %2915 = vmatprep.subr.mxu0 %v396
    %2916 = vmatpush1.msra.mxu0 %v395
    %2917 = vmatprep.subr.mxu0 %v399
    %2918 = vmatpush1.msra.mxu0 %v398
    %2919 = vmatprep.subr.mxu0 %v402
    %2920 = vmatpush1.msra.mxu0 %v401
    %2921 = vmatprep.subr.mxu0 %v405
    %2922 = vmatpush1.msra.mxu0 %v404
    %2923 = vmatprep.subr.mxu0 %v408
    %2924 = vmatpush1.msra.mxu0 %v407
    %2925 = vmatprep.subr.mxu0 %v411
    %2926 = vmatpush1.msra.mxu0 %v410
    %2927 = vmatprep.subr.mxu0 %v414
    %2928 = vmatpush1.msra.mxu0 %v413
    %2929 = vmatprep.subr.mxu0 %v417
    %2930 = vmatpush1.msra.mxu0 %v416
    %2931 = vmatprep.subr.mxu0 %v420
    %2932 = vmatpush1.msra.mxu0 %v419
    %2933 = vmatprep.subr.mxu0 %v423
    %2934 = vmatpush1.msra.mxu0 %v422
    %2935 = vmatprep.subr.mxu0 %v426
    %2936 = vmatpush1.msra.mxu0 %v425
    %2937 = vmatprep.subr.mxu0 %v429
    %2938 = vmatpush1.msra.mxu0 %v428
    %2939 = vmatprep.subr.mxu0 %v432
    %2940 = vmatpush1.msra.mxu0 %v431
    %2941 = vmatprep.subr.mxu0 0.0
    %2942 = vmatpush1.msra.mxu0 0.0
    %2943 = vmatprep.subr.mxu0 0.0
    %2944 = vmatpush1.msra.mxu0 0.0
    %2945 = vmatprep.subr.mxu0 0.0
    %2946 = vmatpush1.msra.mxu0 0.0
    %2947 = vmatprep.subr.mxu0 0.0
    %2948 = vmatpush1.msra.mxu0 0.0
    %2949 = vmatprep.subr.mxu0 0.0
    %2950 = vmatpush1.msra.mxu0 0.0
    %2951 = vmatprep.subr.mxu0 0.0
    %2952 = vmatpush1.msra.mxu0 0.0
    %2953 = vmatprep.subr.mxu0 0.0
    %2954 = vmatpush1.msra.mxu0 0.0
    %2955 = vmatprep.subr.mxu0 0.0
    %2956 = vmatpush1.msra.mxu0 0.0
    %2957 = vmatprep.subr.mxu0 0.0
    %2958 = vmatpush1.msra.mxu0 0.0
    %2959 = vmatprep.subr.mxu0 0.0
    %2960 = vmatpush1.msra.mxu0 0.0
    %2961 = vmatprep.subr.mxu0 0.0
    %2962 = vmatpush1.msra.mxu0 0.0
    %2963 = vmatprep.subr.mxu0 0.0
    %2964 = vmatpush1.msra.mxu0 0.0
    %2965 = vmatprep.subr.mxu0 0.0
    %2966 = vmatpush1.msra.mxu0 0.0
    %2967 = vmatprep.subr.mxu0 0.0
    %2968 = vmatpush1.msra.mxu0 0.0
    %2969 = vmatprep.subr.mxu0 0.0
    %2970 = vmatpush1.msra.mxu0 0.0
    %2971 = vmatprep.subr.mxu0 0.0
    %2972 = vmatpush1.msra.mxu0 0.0
    %2973 = vmatprep.mubr.f32.mxu0 0.0
    %2974 = vmatmul.mubr.f32.gmra.mrb[0].mxu0 %v2601
    %v2975 = vpop.f32.mrb[0].mxu0
    %v2976 = vadd.f32 0.0, %v2975
    %v2977 = vpop.f32.mrb[0].mxu0
    %v2978 = vadd.f32 0.0, %v2977
    %2979 = vdwg.mxu0
    %2980 = vmatprep.subr.mxu0 0.0
    %2981 = vmatpush1.msra.mxu0 %v388
    %2982 = vmatprep.subr.mxu0 0.0
    %2983 = vmatpush1.msra.mxu0 %v391
    %2984 = vmatprep.subr.mxu0 0.0
    %2985 = vmatpush1.msra.mxu0 %v394
    %2986 = vmatprep.subr.mxu0 0.0
    %2987 = vmatpush1.msra.mxu0 %v397
    %2988 = vmatprep.subr.mxu0 0.0
    %2989 = vmatpush1.msra.mxu0 %v400
    %2990 = vmatprep.subr.mxu0 0.0
    %2991 = vmatpush1.msra.mxu0 %v403
    %2992 = vmatprep.subr.mxu0 0.0
    %2993 = vmatpush1.msra.mxu0 %v406
    %2994 = vmatprep.subr.mxu0 0.0
    %2995 = vmatpush1.msra.mxu0 %v409
    %2996 = vmatprep.subr.mxu0 0.0
    %2997 = vmatpush1.msra.mxu0 %v412
    %2998 = vmatprep.subr.mxu0 0.0
    %2999 = vmatpush1.msra.mxu0 %v415
    %3000 = vmatprep.subr.mxu0 0.0
    %3001 = vmatpush1.msra.mxu0 %v418
    %3002 = vmatprep.subr.mxu0 0.0
    %3003 = vmatpush1.msra.mxu0 %v421
    %3004 = vmatprep.subr.mxu0 0.0
    %3005 = vmatpush1.msra.mxu0 %v424
    %3006 = vmatprep.subr.mxu0 0.0
    %3007 = vmatpush1.msra.mxu0 %v427
    %3008 = vmatprep.subr.mxu0 0.0
    %3009 = vmatpush1.msra.mxu0 %v430
    %3010 = vmatprep.subr.mxu0 0.0
    %3011 = vmatpush1.msra.mxu0 %v433
    %3012 = vmatprep.subr.mxu0 0.0
    %3013 = vmatpush1.msra.mxu0 0.0
    %3014 = vmatprep.subr.mxu0 0.0
    %3015 = vmatpush1.msra.mxu0 0.0
    %3016 = vmatprep.subr.mxu0 0.0
    %3017 = vmatpush1.msra.mxu0 0.0
    %3018 = vmatprep.subr.mxu0 0.0
    %3019 = vmatpush1.msra.mxu0 0.0
    %3020 = vmatprep.subr.mxu0 0.0
    %3021 = vmatpush1.msra.mxu0 0.0
    %3022 = vmatprep.subr.mxu0 0.0
    %3023 = vmatpush1.msra.mxu0 0.0
    %3024 = vmatprep.subr.mxu0 0.0
    %3025 = vmatpush1.msra.mxu0 0.0
    %3026 = vmatprep.subr.mxu0 0.0
    %3027 = vmatpush1.msra.mxu0 0.0
    %3028 = vmatprep.subr.mxu0 0.0
    %3029 = vmatpush1.msra.mxu0 0.0
    %3030 = vmatprep.subr.mxu0 0.0
    %3031 = vmatpush1.msra.mxu0 0.0
    %3032 = vmatprep.subr.mxu0 0.0
    %3033 = vmatpush1.msra.mxu0 0.0
    %3034 = vmatprep.subr.mxu0 0.0
    %3035 = vmatpush1.msra.mxu0 0.0
    %3036 = vmatprep.subr.mxu0 0.0
    %3037 = vmatpush1.msra.mxu0 0.0
    %3038 = vmatprep.subr.mxu0 0.0
    %3039 = vmatpush1.msra.mxu0 0.0
    %3040 = vmatprep.subr.mxu0 0.0
    %3041 = vmatpush1.msra.mxu0 0.0
    %3042 = vmatprep.subr.mxu0 0.0
    %3043 = vmatpush1.msra.mxu0 0.0
    %3044 = vmatprep.mubr.f32.mxu0 0.0
    %3045 = vmatmul.mubr.f32.gmra.mrb[0].mxu0 %v2601
    %v3046 = vpop.f32.mrb[0].mxu0
    %v3047 = vadd.f32 0.0, %v3046
    %v3048 = vpop.f32.mrb[0].mxu0
    %3049 = vdwg.mxu0
    %v3050 = vadd.f32 %v2906, %v2976
    %v3051 = vxor.u32 %v3050, 2147483648
    %v3052 = vmul.f32 %v3051, 1.442695
    %v3053 = vpow.pop %v3052
    %v3054 = vadd.f32 %v3053, 1.0
    %v3055 = vrcp.pop %v3054
    %v3056 = vmul.f32 1.0, %v3055
    %v3057 = vadd.f32 %v2907, %v2978
    %v3058 = vxor.u32 %v3057, 2147483648
    %v3059 = vmul.f32 %v3058, 1.442695
    %v3060 = vpow.pop %v3059
    %v3061 = vadd.f32 %v3060, 1.0
    %v3062 = vrcp.pop %v3061
    %v3063 = vmul.f32 1.0, %v3062
    %v3064 = vadd.f32 %v3047, %v439
    %v3065 = vmul.f32 %v3056, %v3064
    %v3066 = vadd.f32 %v2908, %v3065
    %v3067 = vtanh.pop %v3066
    %v3068 = vsub.f32 %v2601, %v3067
    %v3069 = vmul.f32 %v3063, %v3068
    %v3070 = vadd.f32 %v3067, %v3069
    %3071 = vmatprep.subr.mxu0 %v442
    %3072 = vmatpush1.msra.mxu0 %v441
    %3073 = vmatprep.subr.mxu0 %v445
    %3074 = vmatpush1.msra.mxu0 %v444
    %3075 = vmatprep.subr.mxu0 %v448
    %3076 = vmatpush1.msra.mxu0 %v447
    %3077 = vmatprep.subr.mxu0 %v451
    %3078 = vmatpush1.msra.mxu0 %v450
    %3079 = vmatprep.subr.mxu0 %v454
    %3080 = vmatpush1.msra.mxu0 %v453
    %3081 = vmatprep.subr.mxu0 %v457
    %3082 = vmatpush1.msra.mxu0 %v456
    %3083 = vmatprep.subr.mxu0 %v460
    %3084 = vmatpush1.msra.mxu0 %v459
    %3085 = vmatprep.subr.mxu0 %v463
    %3086 = vmatpush1.msra.mxu0 %v462
    %3087 = vmatprep.subr.mxu0 %v466
    %3088 = vmatpush1.msra.mxu0 %v465
    %3089 = vmatprep.subr.mxu0 %v469
    %3090 = vmatpush1.msra.mxu0 %v468
    %3091 = vmatprep.subr.mxu0 %v472
    %3092 = vmatpush1.msra.mxu0 %v471
    %3093 = vmatprep.subr.mxu0 %v475
    %3094 = vmatpush1.msra.mxu0 %v474
    %3095 = vmatprep.subr.mxu0 %v478
    %3096 = vmatpush1.msra.mxu0 %v477
    %3097 = vmatprep.subr.mxu0 %v481
    %3098 = vmatpush1.msra.mxu0 %v480
    %3099 = vmatprep.subr.mxu0 %v484
    %3100 = vmatpush1.msra.mxu0 %v483
    %3101 = vmatprep.subr.mxu0 %v487
    %3102 = vmatpush1.msra.mxu0 %v486
    %3103 = vmatprep.subr.mxu0 0.0
    %3104 = vmatpush1.msra.mxu0 0.0
    %3105 = vmatprep.subr.mxu0 0.0
    %3106 = vmatpush1.msra.mxu0 0.0
    %3107 = vmatprep.subr.mxu0 0.0
    %3108 = vmatpush1.msra.mxu0 0.0
    %3109 = vmatprep.subr.mxu0 0.0
    %3110 = vmatpush1.msra.mxu0 0.0
    %3111 = vmatprep.subr.mxu0 0.0
    %3112 = vmatpush1.msra.mxu0 0.0
    %3113 = vmatprep.subr.mxu0 0.0
    %3114 = vmatpush1.msra.mxu0 0.0
    %3115 = vmatprep.subr.mxu0 0.0
    %3116 = vmatpush1.msra.mxu0 0.0
    %3117 = vmatprep.subr.mxu0 0.0
    %3118 = vmatpush1.msra.mxu0 0.0
    %3119 = vmatprep.subr.mxu0 0.0
    %3120 = vmatpush1.msra.mxu0 0.0
    %3121 = vmatprep.subr.mxu0 0.0
    %3122 = vmatpush1.msra.mxu0 0.0
    %3123 = vmatprep.subr.mxu0 0.0
    %3124 = vmatpush1.msra.mxu0 0.0
    %3125 = vmatprep.subr.mxu0 0.0
    %3126 = vmatpush1.msra.mxu0 0.0
    %3127 = vmatprep.subr.mxu0 0.0
    %3128 = vmatpush1.msra.mxu0 0.0
    %3129 = vmatprep.subr.mxu0 0.0
    %3130 = vmatpush1.msra.mxu0 0.0
    %3131 = vmatprep.subr.mxu0 0.0
    %3132 = vmatpush1.msra.mxu0 0.0
    %3133 = vmatprep.subr.mxu0 0.0
    %3134 = vmatpush1.msra.mxu0 0.0
    %3135 = vmatprep.mubr.f32.mxu0 0.0
    %3136 = vmatmul.mubr.f32.gmra.mrb[0].mxu0 %v3070
    %v3137 = vpop.f32.mrb[0].mxu0
    %v3138 = vadd.f32 %v542, %v3137
    %v3139 = vpop.f32.mrb[0].mxu0
    %v3140 = vadd.f32 %v546, %v3139
    %3141 = vdwg.mxu0
    %3142 = vmatprep.subr.mxu0 0.0
    %3143 = vmatpush1.msra.mxu0 %v443
    %3144 = vmatprep.subr.mxu0 0.0
    %3145 = vmatpush1.msra.mxu0 %v446
    %3146 = vmatprep.subr.mxu0 0.0
    %3147 = vmatpush1.msra.mxu0 %v449
    %3148 = vmatprep.subr.mxu0 0.0
    %3149 = vmatpush1.msra.mxu0 %v452
    %3150 = vmatprep.subr.mxu0 0.0
    %3151 = vmatpush1.msra.mxu0 %v455
    %3152 = vmatprep.subr.mxu0 0.0
    %3153 = vmatpush1.msra.mxu0 %v458
    %3154 = vmatprep.subr.mxu0 0.0
    %3155 = vmatpush1.msra.mxu0 %v461
    %3156 = vmatprep.subr.mxu0 0.0
    %3157 = vmatpush1.msra.mxu0 %v464
    %3158 = vmatprep.subr.mxu0 0.0
    %3159 = vmatpush1.msra.mxu0 %v467
    %3160 = vmatprep.subr.mxu0 0.0
    %3161 = vmatpush1.msra.mxu0 %v470
    %3162 = vmatprep.subr.mxu0 0.0
    %3163 = vmatpush1.msra.mxu0 %v473
    %3164 = vmatprep.subr.mxu0 0.0
    %3165 = vmatpush1.msra.mxu0 %v476
    %3166 = vmatprep.subr.mxu0 0.0
    %3167 = vmatpush1.msra.mxu0 %v479
    %3168 = vmatprep.subr.mxu0 0.0
    %3169 = vmatpush1.msra.mxu0 %v482
    %3170 = vmatprep.subr.mxu0 0.0
    %3171 = vmatpush1.msra.mxu0 %v485
    %3172 = vmatprep.subr.mxu0 0.0
    %3173 = vmatpush1.msra.mxu0 %v488
    %3174 = vmatprep.subr.mxu0 0.0
    %3175 = vmatpush1.msra.mxu0 0.0
    %3176 = vmatprep.subr.mxu0 0.0
    %3177 = vmatpush1.msra.mxu0 0.0
    %3178 = vmatprep.subr.mxu0 0.0
    %3179 = vmatpush1.msra.mxu0 0.0
    %3180 = vmatprep.subr.mxu0 0.0
    %3181 = vmatpush1.msra.mxu0 0.0
    %3182 = vmatprep.subr.mxu0 0.0
    %3183 = vmatpush1.msra.mxu0 0.0
    %3184 = vmatprep.subr.mxu0 0.0
    %3185 = vmatpush1.msra.mxu0 0.0
    %3186 = vmatprep.subr.mxu0 0.0
    %3187 = vmatpush1.msra.mxu0 0.0
    %3188 = vmatprep.subr.mxu0 0.0
    %3189 = vmatpush1.msra.mxu0 0.0
    %3190 = vmatprep.subr.mxu0 0.0
    %3191 = vmatpush1.msra.mxu0 0.0
    %3192 = vmatprep.subr.mxu0 0.0
    %3193 = vmatpush1.msra.mxu0 0.0
    %3194 = vmatprep.subr.mxu0 0.0
    %3195 = vmatpush1.msra.mxu0 0.0
    %3196 = vmatprep.subr.mxu0 0.0
    %3197 = vmatpush1.msra.mxu0 0.0
    %3198 = vmatprep.subr.mxu0 0.0
    %3199 = vmatpush1.msra.mxu0 0.0
    %3200 = vmatprep.subr.mxu0 0.0
    %3201 = vmatpush1.msra.mxu0 0.0
    %3202 = vmatprep.subr.mxu0 0.0
    %3203 = vmatpush1.msra.mxu0 0.0
    %3204 = vmatprep.subr.mxu0 0.0
    %3205 = vmatpush1.msra.mxu0 0.0
    %3206 = vmatprep.mubr.f32.mxu0 0.0
    %3207 = vmatmul.mubr.f32.gmra.mrb[0].mxu0 %v3070
    %v3208 = vpop.f32.mrb[0].mxu0
    %v3209 = vadd.f32 %v550, %v3208
    %v3210 = vpop.f32.mrb[0].mxu0
    %3211 = vdwg.mxu0
    %3212 = vmatprep.subr.mxu0 %v490
    %3213 = vmatpush1.msra.mxu0 %v489
    %3214 = vmatprep.subr.mxu0 %v493
    %3215 = vmatpush1.msra.mxu0 %v492
    %3216 = vmatprep.subr.mxu0 %v496
    %3217 = vmatpush1.msra.mxu0 %v495
    %3218 = vmatprep.subr.mxu0 %v499
    %3219 = vmatpush1.msra.mxu0 %v498
    %3220 = vmatprep.subr.mxu0 %v502
    %3221 = vmatpush1.msra.mxu0 %v501
    %3222 = vmatprep.subr.mxu0 %v505
    %3223 = vmatpush1.msra.mxu0 %v504
    %3224 = vmatprep.subr.mxu0 %v508
    %3225 = vmatpush1.msra.mxu0 %v507
    %3226 = vmatprep.subr.mxu0 %v511
    %3227 = vmatpush1.msra.mxu0 %v510
    %3228 = vmatprep.subr.mxu0 %v514
    %3229 = vmatpush1.msra.mxu0 %v513
    %3230 = vmatprep.subr.mxu0 %v517
    %3231 = vmatpush1.msra.mxu0 %v516
    %3232 = vmatprep.subr.mxu0 %v520
    %3233 = vmatpush1.msra.mxu0 %v519
    %3234 = vmatprep.subr.mxu0 %v523
    %3235 = vmatpush1.msra.mxu0 %v522
    %3236 = vmatprep.subr.mxu0 %v526
    %3237 = vmatpush1.msra.mxu0 %v525
    %3238 = vmatprep.subr.mxu0 %v529
    %3239 = vmatpush1.msra.mxu0 %v528
    %3240 = vmatprep.subr.mxu0 %v532
    %3241 = vmatpush1.msra.mxu0 %v531
    %3242 = vmatprep.subr.mxu0 %v535
    %3243 = vmatpush1.msra.mxu0 %v534
    %3244 = vmatprep.subr.mxu0 0.0
    %3245 = vmatpush1.msra.mxu0 0.0
    %3246 = vmatprep.subr.mxu0 0.0
    %3247 = vmatpush1.msra.mxu0 0.0
    %3248 = vmatprep.subr.mxu0 0.0
    %3249 = vmatpush1.msra.mxu0 0.0
    %3250 = vmatprep.subr.mxu0 0.0
    %3251 = vmatpush1.msra.mxu0 0.0
    %3252 = vmatprep.subr.mxu0 0.0
    %3253 = vmatpush1.msra.mxu0 0.0
    %3254 = vmatprep.subr.mxu0 0.0
    %3255 = vmatpush1.msra.mxu0 0.0
    %3256 = vmatprep.subr.mxu0 0.0
    %3257 = vmatpush1.msra.mxu0 0.0
    %3258 = vmatprep.subr.mxu0 0.0
    %3259 = vmatpush1.msra.mxu0 0.0
    %3260 = vmatprep.subr.mxu0 0.0
    %3261 = vmatpush1.msra.mxu0 0.0
    %3262 = vmatprep.subr.mxu0 0.0
    %3263 = vmatpush1.msra.mxu0 0.0
    %3264 = vmatprep.subr.mxu0 0.0
    %3265 = vmatpush1.msra.mxu0 0.0
    %3266 = vmatprep.subr.mxu0 0.0
    %3267 = vmatpush1.msra.mxu0 0.0
    %3268 = vmatprep.subr.mxu0 0.0
    %3269 = vmatpush1.msra.mxu0 0.0
    %3270 = vmatprep.subr.mxu0 0.0
    %3271 = vmatpush1.msra.mxu0 0.0
    %3272 = vmatprep.subr.mxu0 0.0
    %3273 = vmatpush1.msra.mxu0 0.0
    %3274 = vmatprep.subr.mxu0 0.0
    %3275 = vmatpush1.msra.mxu0 0.0
    %3276 = vmatprep.mubr.f32.mxu0 0.0
    %3277 = vmatmul.mubr.f32.gmra.mrb[0].mxu0 %v2904
    %v3278 = vpop.f32.mrb[0].mxu0
    %v3279 = vadd.f32 0.0, %v3278
    %v3280 = vpop.f32.mrb[0].mxu0
    %v3281 = vadd.f32 0.0, %v3280
    %3282 = vdwg.mxu0
    %3283 = vmatprep.subr.mxu0 0.0
    %3284 = vmatpush1.msra.mxu0 %v491
    %3285 = vmatprep.subr.mxu0 0.0
    %3286 = vmatpush1.msra.mxu0 %v494
    %3287 = vmatprep.subr.mxu0 0.0
    %3288 = vmatpush1.msra.mxu0 %v497
    %3289 = vmatprep.subr.mxu0 0.0
    %3290 = vmatpush1.msra.mxu0 %v500
    %3291 = vmatprep.subr.mxu0 0.0
    %3292 = vmatpush1.msra.mxu0 %v503
    %3293 = vmatprep.subr.mxu0 0.0
    %3294 = vmatpush1.msra.mxu0 %v506
    %3295 = vmatprep.subr.mxu0 0.0
    %3296 = vmatpush1.msra.mxu0 %v509
    %3297 = vmatprep.subr.mxu0 0.0
    %3298 = vmatpush1.msra.mxu0 %v512
    %3299 = vmatprep.subr.mxu0 0.0
    %3300 = vmatpush1.msra.mxu0 %v515
    %3301 = vmatprep.subr.mxu0 0.0
    %3302 = vmatpush1.msra.mxu0 %v518
    %3303 = vmatprep.subr.mxu0 0.0
    %3304 = vmatpush1.msra.mxu0 %v521
    %3305 = vmatprep.subr.mxu0 0.0
    %3306 = vmatpush1.msra.mxu0 %v524
    %3307 = vmatprep.subr.mxu0 0.0
    %3308 = vmatpush1.msra.mxu0 %v527
    %3309 = vmatprep.subr.mxu0 0.0
    %3310 = vmatpush1.msra.mxu0 %v530
    %3311 = vmatprep.subr.mxu0 0.0
    %3312 = vmatpush1.msra.mxu0 %v533
    %3313 = vmatprep.subr.mxu0 0.0
    %3314 = vmatpush1.msra.mxu0 %v536
    %3315 = vmatprep.subr.mxu0 0.0
    %3316 = vmatpush1.msra.mxu0 0.0
    %3317 = vmatprep.subr.mxu0 0.0
    %3318 = vmatpush1.msra.mxu0 0.0
    %3319 = vmatprep.subr.mxu0 0.0
    %3320 = vmatpush1.msra.mxu0 0.0
    %3321 = vmatprep.subr.mxu0 0.0
    %3322 = vmatpush1.msra.mxu0 0.0
    %3323 = vmatprep.subr.mxu0 0.0
    %3324 = vmatpush1.msra.mxu0 0.0
    %3325 = vmatprep.subr.mxu0 0.0
    %3326 = vmatpush1.msra.mxu0 0.0
    %3327 = vmatprep.subr.mxu0 0.0
    %3328 = vmatpush1.msra.mxu0 0.0
    %3329 = vmatprep.subr.mxu0 0.0
    %3330 = vmatpush1.msra.mxu0 0.0
    %3331 = vmatprep.subr.mxu0 0.0
    %3332 = vmatpush1.msra.mxu0 0.0
    %3333 = vmatprep.subr.mxu0 0.0
    %3334 = vmatpush1.msra.mxu0 0.0
    %3335 = vmatprep.subr.mxu0 0.0
    %3336 = vmatpush1.msra.mxu0 0.0
    %3337 = vmatprep.subr.mxu0 0.0
    %3338 = vmatpush1.msra.mxu0 0.0
    %3339 = vmatprep.subr.mxu0 0.0
    %3340 = vmatpush1.msra.mxu0 0.0
    %3341 = vmatprep.subr.mxu0 0.0
    %3342 = vmatpush1.msra.mxu0 0.0
    %3343 = vmatprep.subr.mxu0 0.0
    %3344 = vmatpush1.msra.mxu0 0.0
    %3345 = vmatprep.subr.mxu0 0.0
    %3346 = vmatpush1.msra.mxu0 0.0
    %3347 = vmatprep.mubr.f32.mxu0 0.0
    %3348 = vmatmul.mubr.f32.gmra.mrb[0].mxu0 %v2904
    %v3349 = vpop.f32.mrb[0].mxu0
    %v3350 = vadd.f32 0.0, %v3349
    %v3351 = vpop.f32.mrb[0].mxu0
    %3352 = vdwg.mxu0
    %v3353 = vadd.f32 %v3138, %v3279
    %v3354 = vxor.u32 %v3353, 2147483648
    %v3355 = vmul.f32 %v3354, 1.442695
    %v3356 = vpow.pop %v3355
    %v3357 = vadd.f32 %v3356, 1.0
    %v3358 = vrcp.pop %v3357
    %v3359 = vmul.f32 1.0, %v3358
    %v3360 = vadd.f32 %v3140, %v3281
    %v3361 = vxor.u32 %v3360, 2147483648
    %v3362 = vmul.f32 %v3361, 1.442695
    %v3363 = vpow.pop %v3362
    %v3364 = vadd.f32 %v3363, 1.0
    %v3365 = vrcp.pop %v3364
    %v3366 = vmul.f32 1.0, %v3365
    %v3367 = vadd.f32 %v3350, %v559
    %v3368 = vmul.f32 %v3359, %v3367
    %v3369 = vadd.f32 %v3209, %v3368
    %v3370 = vtanh.pop %v3369
    %v3371 = vsub.f32 %v2904, %v3370
    %v3372 = vmul.f32 %v3366, %v3371
    %v3373 = vadd.f32 %v3370, %v3372
    %3374 = vst [vmem:[#allocation3 + $0x28] sm:$0xff] %v3373
    %v3375 = vld [vmem:[#allocation2 + $0x90] sm:$0xff]
    %v3376 = vld [vmem:[#allocation2 + $0x98] sm:$0xff]
    %v3377 = vld [vmem:[#allocation2 + $0xa0] sm:$0xff]
    %3378 = vmatprep.subr.mxu0 %v387
    %3379 = vmatpush1.msra.mxu0 %v386
    %3380 = vmatprep.subr.mxu0 %v390
    %3381 = vmatpush1.msra.mxu0 %v389
    %3382 = vmatprep.subr.mxu0 %v393
    %3383 = vmatpush1.msra.mxu0 %v392
    %3384 = vmatprep.subr.mxu0 %v396
    %3385 = vmatpush1.msra.mxu0 %v395
    %3386 = vmatprep.subr.mxu0 %v399
    %3387 = vmatpush1.msra.mxu0 %v398
    %3388 = vmatprep.subr.mxu0 %v402
    %3389 = vmatpush1.msra.mxu0 %v401
    %3390 = vmatprep.subr.mxu0 %v405
    %3391 = vmatpush1.msra.mxu0 %v404
    %3392 = vmatprep.subr.mxu0 %v408
    %3393 = vmatpush1.msra.mxu0 %v407
    %3394 = vmatprep.subr.mxu0 %v411
    %3395 = vmatpush1.msra.mxu0 %v410
    %3396 = vmatprep.subr.mxu0 %v414
    %3397 = vmatpush1.msra.mxu0 %v413
    %3398 = vmatprep.subr.mxu0 %v417
    %3399 = vmatpush1.msra.mxu0 %v416
    %3400 = vmatprep.subr.mxu0 %v420
    %3401 = vmatpush1.msra.mxu0 %v419
    %3402 = vmatprep.subr.mxu0 %v423
    %3403 = vmatpush1.msra.mxu0 %v422
    %3404 = vmatprep.subr.mxu0 %v426
    %3405 = vmatpush1.msra.mxu0 %v425
    %3406 = vmatprep.subr.mxu0 %v429
    %3407 = vmatpush1.msra.mxu0 %v428
    %3408 = vmatprep.subr.mxu0 %v432
    %3409 = vmatpush1.msra.mxu0 %v431
    %3410 = vmatprep.subr.mxu0 0.0
    %3411 = vmatpush1.msra.mxu0 0.0
    %3412 = vmatprep.subr.mxu0 0.0
    %3413 = vmatpush1.msra.mxu0 0.0
    %3414 = vmatprep.subr.mxu0 0.0
    %3415 = vmatpush1.msra.mxu0 0.0
    %3416 = vmatprep.subr.mxu0 0.0
    %3417 = vmatpush1.msra.mxu0 0.0
    %3418 = vmatprep.subr.mxu0 0.0
    %3419 = vmatpush1.msra.mxu0 0.0
    %3420 = vmatprep.subr.mxu0 0.0
    %3421 = vmatpush1.msra.mxu0 0.0
    %3422 = vmatprep.subr.mxu0 0.0
    %3423 = vmatpush1.msra.mxu0 0.0
    %3424 = vmatprep.subr.mxu0 0.0
    %3425 = vmatpush1.msra.mxu0 0.0
    %3426 = vmatprep.subr.mxu0 0.0
    %3427 = vmatpush1.msra.mxu0 0.0
    %3428 = vmatprep.subr.mxu0 0.0
    %3429 = vmatpush1.msra.mxu0 0.0
    %3430 = vmatprep.subr.mxu0 0.0
    %3431 = vmatpush1.msra.mxu0 0.0
    %3432 = vmatprep.subr.mxu0 0.0
    %3433 = vmatpush1.msra.mxu0 0.0
    %3434 = vmatprep.subr.mxu0 0.0
    %3435 = vmatpush1.msra.mxu0 0.0
    %3436 = vmatprep.subr.mxu0 0.0
    %3437 = vmatpush1.msra.mxu0 0.0
    %3438 = vmatprep.subr.mxu0 0.0
    %3439 = vmatpush1.msra.mxu0 0.0
    %3440 = vmatprep.subr.mxu0 0.0
    %3441 = vmatpush1.msra.mxu0 0.0
    %3442 = vmatprep.mubr.f32.mxu0 0.0
    %3443 = vmatmul.mubr.f32.gmra.mrb[0].mxu0 %v3070
    %v3444 = vpop.f32.mrb[0].mxu0
    %v3445 = vadd.f32 0.0, %v3444
    %v3446 = vpop.f32.mrb[0].mxu0
    %v3447 = vadd.f32 0.0, %v3446
    %3448 = vdwg.mxu0
    %3449 = vmatprep.subr.mxu0 0.0
    %3450 = vmatpush1.msra.mxu0 %v388
    %3451 = vmatprep.subr.mxu0 0.0
    %3452 = vmatpush1.msra.mxu0 %v391
    %3453 = vmatprep.subr.mxu0 0.0
    %3454 = vmatpush1.msra.mxu0 %v394
    %3455 = vmatprep.subr.mxu0 0.0
    %3456 = vmatpush1.msra.mxu0 %v397
    %3457 = vmatprep.subr.mxu0 0.0
    %3458 = vmatpush1.msra.mxu0 %v400
    %3459 = vmatprep.subr.mxu0 0.0
    %3460 = vmatpush1.msra.mxu0 %v403
    %3461 = vmatprep.subr.mxu0 0.0
    %3462 = vmatpush1.msra.mxu0 %v406
    %3463 = vmatprep.subr.mxu0 0.0
    %3464 = vmatpush1.msra.mxu0 %v409
    %3465 = vmatprep.subr.mxu0 0.0
    %3466 = vmatpush1.msra.mxu0 %v412
    %3467 = vmatprep.subr.mxu0 0.0
    %3468 = vmatpush1.msra.mxu0 %v415
    %3469 = vmatprep.subr.mxu0 0.0
    %3470 = vmatpush1.msra.mxu0 %v418
    %3471 = vmatprep.subr.mxu0 0.0
    %3472 = vmatpush1.msra.mxu0 %v421
    %3473 = vmatprep.subr.mxu0 0.0
    %3474 = vmatpush1.msra.mxu0 %v424
    %3475 = vmatprep.subr.mxu0 0.0
    %3476 = vmatpush1.msra.mxu0 %v427
    %3477 = vmatprep.subr.mxu0 0.0
    %3478 = vmatpush1.msra.mxu0 %v430
    %3479 = vmatprep.subr.mxu0 0.0
    %3480 = vmatpush1.msra.mxu0 %v433
    %3481 = vmatprep.subr.mxu0 0.0
    %3482 = vmatpush1.msra.mxu0 0.0
    %3483 = vmatprep.subr.mxu0 0.0
    %3484 = vmatpush1.msra.mxu0 0.0
    %3485 = vmatprep.subr.mxu0 0.0
    %3486 = vmatpush1.msra.mxu0 0.0
    %3487 = vmatprep.subr.mxu0 0.0
    %3488 = vmatpush1.msra.mxu0 0.0
    %3489 = vmatprep.subr.mxu0 0.0
    %3490 = vmatpush1.msra.mxu0 0.0
    %3491 = vmatprep.subr.mxu0 0.0
    %3492 = vmatpush1.msra.mxu0 0.0
    %3493 = vmatprep.subr.mxu0 0.0
    %3494 = vmatpush1.msra.mxu0 0.0
    %3495 = vmatprep.subr.mxu0 0.0
    %3496 = vmatpush1.msra.mxu0 0.0
    %3497 = vmatprep.subr.mxu0 0.0
    %3498 = vmatpush1.msra.mxu0 0.0
    %3499 = vmatprep.subr.mxu0 0.0
    %3500 = vmatpush1.msra.mxu0 0.0
    %3501 = vmatprep.subr.mxu0 0.0
    %3502 = vmatpush1.msra.mxu0 0.0
    %3503 = vmatprep.subr.mxu0 0.0
    %3504 = vmatpush1.msra.mxu0 0.0
    %3505 = vmatprep.subr.mxu0 0.0
    %3506 = vmatpush1.msra.mxu0 0.0
    %3507 = vmatprep.subr.mxu0 0.0
    %3508 = vmatpush1.msra.mxu0 0.0
    %3509 = vmatprep.subr.mxu0 0.0
    %3510 = vmatpush1.msra.mxu0 0.0
    %3511 = vmatprep.subr.mxu0 0.0
    %3512 = vmatpush1.msra.mxu0 0.0
    %3513 = vmatprep.mubr.f32.mxu0 0.0
    %3514 = vmatmul.mubr.f32.gmra.mrb[0].mxu0 %v3070
    %v3515 = vpop.f32.mrb[0].mxu0
    %v3516 = vadd.f32 0.0, %v3515
    %v3517 = vpop.f32.mrb[0].mxu0
    %3518 = vdwg.mxu0
    %v3519 = vadd.f32 %v3375, %v3445
    %v3520 = vxor.u32 %v3519, 2147483648
    %v3521 = vmul.f32 %v3520, 1.442695
    %v3522 = vpow.pop %v3521
    %v3523 = vadd.f32 %v3522, 1.0
    %v3524 = vrcp.pop %v3523
    %v3525 = vmul.f32 1.0, %v3524
    %v3526 = vadd.f32 %v3376, %v3447
    %v3527 = vxor.u32 %v3526, 2147483648
    %v3528 = vmul.f32 %v3527, 1.442695
    %v3529 = vpow.pop %v3528
    %v3530 = vadd.f32 %v3529, 1.0
    %v3531 = vrcp.pop %v3530
    %v3532 = vmul.f32 1.0, %v3531
    %v3533 = vadd.f32 %v3516, %v439
    %v3534 = vmul.f32 %v3525, %v3533
    %v3535 = vadd.f32 %v3377, %v3534
    %v3536 = vtanh.pop %v3535
    %v3537 = vsub.f32 %v3070, %v3536
    %v3538 = vmul.f32 %v3532, %v3537
    %v3539 = vadd.f32 %v3536, %v3538
    %3540 = vmatprep.subr.mxu0 %v442
    %3541 = vmatpush1.msra.mxu0 %v441
    %3542 = vmatprep.subr.mxu0 %v445
    %3543 = vmatpush1.msra.mxu0 %v444
    %3544 = vmatprep.subr.mxu0 %v448
    %3545 = vmatpush1.msra.mxu0 %v447
    %3546 = vmatprep.subr.mxu0 %v451
    %3547 = vmatpush1.msra.mxu0 %v450
    %3548 = vmatprep.subr.mxu0 %v454
    %3549 = vmatpush1.msra.mxu0 %v453
    %3550 = vmatprep.subr.mxu0 %v457
    %3551 = vmatpush1.msra.mxu0 %v456
    %3552 = vmatprep.subr.mxu0 %v460
    %3553 = vmatpush1.msra.mxu0 %v459
    %3554 = vmatprep.subr.mxu0 %v463
    %3555 = vmatpush1.msra.mxu0 %v462
    %3556 = vmatprep.subr.mxu0 %v466
    %3557 = vmatpush1.msra.mxu0 %v465
    %3558 = vmatprep.subr.mxu0 %v469
    %3559 = vmatpush1.msra.mxu0 %v468
    %3560 = vmatprep.subr.mxu0 %v472
    %3561 = vmatpush1.msra.mxu0 %v471
    %3562 = vmatprep.subr.mxu0 %v475
    %3563 = vmatpush1.msra.mxu0 %v474
    %3564 = vmatprep.subr.mxu0 %v478
    %3565 = vmatpush1.msra.mxu0 %v477
    %3566 = vmatprep.subr.mxu0 %v481
    %3567 = vmatpush1.msra.mxu0 %v480
    %3568 = vmatprep.subr.mxu0 %v484
    %3569 = vmatpush1.msra.mxu0 %v483
    %3570 = vmatprep.subr.mxu0 %v487
    %3571 = vmatpush1.msra.mxu0 %v486
    %3572 = vmatprep.subr.mxu0 0.0
    %3573 = vmatpush1.msra.mxu0 0.0
    %3574 = vmatprep.subr.mxu0 0.0
    %3575 = vmatpush1.msra.mxu0 0.0
    %3576 = vmatprep.subr.mxu0 0.0
    %3577 = vmatpush1.msra.mxu0 0.0
    %3578 = vmatprep.subr.mxu0 0.0
    %3579 = vmatpush1.msra.mxu0 0.0
    %3580 = vmatprep.subr.mxu0 0.0
    %3581 = vmatpush1.msra.mxu0 0.0
    %3582 = vmatprep.subr.mxu0 0.0
    %3583 = vmatpush1.msra.mxu0 0.0
    %3584 = vmatprep.subr.mxu0 0.0
    %3585 = vmatpush1.msra.mxu0 0.0
    %3586 = vmatprep.subr.mxu0 0.0
    %3587 = vmatpush1.msra.mxu0 0.0
    %3588 = vmatprep.subr.mxu0 0.0
    %3589 = vmatpush1.msra.mxu0 0.0
    %3590 = vmatprep.subr.mxu0 0.0
    %3591 = vmatpush1.msra.mxu0 0.0
    %3592 = vmatprep.subr.mxu0 0.0
    %3593 = vmatpush1.msra.mxu0 0.0
    %3594 = vmatprep.subr.mxu0 0.0
    %3595 = vmatpush1.msra.mxu0 0.0
    %3596 = vmatprep.subr.mxu0 0.0
    %3597 = vmatpush1.msra.mxu0 0.0
    %3598 = vmatprep.subr.mxu0 0.0
    %3599 = vmatpush1.msra.mxu0 0.0
    %3600 = vmatprep.subr.mxu0 0.0
    %3601 = vmatpush1.msra.mxu0 0.0
    %3602 = vmatprep.subr.mxu0 0.0
    %3603 = vmatpush1.msra.mxu0 0.0
    %3604 = vmatprep.mubr.f32.mxu0 0.0
    %3605 = vmatmul.mubr.f32.gmra.mrb[0].mxu0 %v3539
    %v3606 = vpop.f32.mrb[0].mxu0
    %v3607 = vadd.f32 %v542, %v3606
    %v3608 = vpop.f32.mrb[0].mxu0
    %v3609 = vadd.f32 %v546, %v3608
    %3610 = vdwg.mxu0
    %3611 = vmatprep.subr.mxu0 0.0
    %3612 = vmatpush1.msra.mxu0 %v443
    %3613 = vmatprep.subr.mxu0 0.0
    %3614 = vmatpush1.msra.mxu0 %v446
    %3615 = vmatprep.subr.mxu0 0.0
    %3616 = vmatpush1.msra.mxu0 %v449
    %3617 = vmatprep.subr.mxu0 0.0
    %3618 = vmatpush1.msra.mxu0 %v452
    %3619 = vmatprep.subr.mxu0 0.0
    %3620 = vmatpush1.msra.mxu0 %v455
    %3621 = vmatprep.subr.mxu0 0.0
    %3622 = vmatpush1.msra.mxu0 %v458
    %3623 = vmatprep.subr.mxu0 0.0
    %3624 = vmatpush1.msra.mxu0 %v461
    %3625 = vmatprep.subr.mxu0 0.0
    %3626 = vmatpush1.msra.mxu0 %v464
    %3627 = vmatprep.subr.mxu0 0.0
    %3628 = vmatpush1.msra.mxu0 %v467
    %3629 = vmatprep.subr.mxu0 0.0
    %3630 = vmatpush1.msra.mxu0 %v470
    %3631 = vmatprep.subr.mxu0 0.0
    %3632 = vmatpush1.msra.mxu0 %v473
    %3633 = vmatprep.subr.mxu0 0.0
    %3634 = vmatpush1.msra.mxu0 %v476
    %3635 = vmatprep.subr.mxu0 0.0
    %3636 = vmatpush1.msra.mxu0 %v479
    %3637 = vmatprep.subr.mxu0 0.0
    %3638 = vmatpush1.msra.mxu0 %v482
    %3639 = vmatprep.subr.mxu0 0.0
    %3640 = vmatpush1.msra.mxu0 %v485
    %3641 = vmatprep.subr.mxu0 0.0
    %3642 = vmatpush1.msra.mxu0 %v488
    %3643 = vmatprep.subr.mxu0 0.0
    %3644 = vmatpush1.msra.mxu0 0.0
    %3645 = vmatprep.subr.mxu0 0.0
    %3646 = vmatpush1.msra.mxu0 0.0
    %3647 = vmatprep.subr.mxu0 0.0
    %3648 = vmatpush1.msra.mxu0 0.0
    %3649 = vmatprep.subr.mxu0 0.0
    %3650 = vmatpush1.msra.mxu0 0.0
    %3651 = vmatprep.subr.mxu0 0.0
    %3652 = vmatpush1.msra.mxu0 0.0
    %3653 = vmatprep.subr.mxu0 0.0
    %3654 = vmatpush1.msra.mxu0 0.0
    %3655 = vmatprep.subr.mxu0 0.0
    %3656 = vmatpush1.msra.mxu0 0.0
    %3657 = vmatprep.subr.mxu0 0.0
    %3658 = vmatpush1.msra.mxu0 0.0
    %3659 = vmatprep.subr.mxu0 0.0
    %3660 = vmatpush1.msra.mxu0 0.0
    %3661 = vmatprep.subr.mxu0 0.0
    %3662 = vmatpush1.msra.mxu0 0.0
    %3663 = vmatprep.subr.mxu0 0.0
    %3664 = vmatpush1.msra.mxu0 0.0
    %3665 = vmatprep.subr.mxu0 0.0
    %3666 = vmatpush1.msra.mxu0 0.0
    %3667 = vmatprep.subr.mxu0 0.0
    %3668 = vmatpush1.msra.mxu0 0.0
    %3669 = vmatprep.subr.mxu0 0.0
    %3670 = vmatpush1.msra.mxu0 0.0
    %3671 = vmatprep.subr.mxu0 0.0
    %3672 = vmatpush1.msra.mxu0 0.0
    %3673 = vmatprep.subr.mxu0 0.0
    %3674 = vmatpush1.msra.mxu0 0.0
    %3675 = vmatprep.mubr.f32.mxu0 0.0
    %3676 = vmatmul.mubr.f32.gmra.mrb[0].mxu0 %v3539
    %v3677 = vpop.f32.mrb[0].mxu0
    %v3678 = vadd.f32 %v550, %v3677
    %v3679 = vpop.f32.mrb[0].mxu0
    %3680 = vdwg.mxu0
    %3681 = vmatprep.subr.mxu0 %v490
    %3682 = vmatpush1.msra.mxu0 %v489
    %3683 = vmatprep.subr.mxu0 %v493
    %3684 = vmatpush1.msra.mxu0 %v492
    %3685 = vmatprep.subr.mxu0 %v496
    %3686 = vmatpush1.msra.mxu0 %v495
    %3687 = vmatprep.subr.mxu0 %v499
    %3688 = vmatpush1.msra.mxu0 %v498
    %3689 = vmatprep.subr.mxu0 %v502
    %3690 = vmatpush1.msra.mxu0 %v501
    %3691 = vmatprep.subr.mxu0 %v505
    %3692 = vmatpush1.msra.mxu0 %v504
    %3693 = vmatprep.subr.mxu0 %v508
    %3694 = vmatpush1.msra.mxu0 %v507
    %3695 = vmatprep.subr.mxu0 %v511
    %3696 = vmatpush1.msra.mxu0 %v510
    %3697 = vmatprep.subr.mxu0 %v514
    %3698 = vmatpush1.msra.mxu0 %v513
    %3699 = vmatprep.subr.mxu0 %v517
    %3700 = vmatpush1.msra.mxu0 %v516
    %3701 = vmatprep.subr.mxu0 %v520
    %3702 = vmatpush1.msra.mxu0 %v519
    %3703 = vmatprep.subr.mxu0 %v523
    %3704 = vmatpush1.msra.mxu0 %v522
    %3705 = vmatprep.subr.mxu0 %v526
    %3706 = vmatpush1.msra.mxu0 %v525
    %3707 = vmatprep.subr.mxu0 %v529
    %3708 = vmatpush1.msra.mxu0 %v528
    %3709 = vmatprep.subr.mxu0 %v532
    %3710 = vmatpush1.msra.mxu0 %v531
    %3711 = vmatprep.subr.mxu0 %v535
    %3712 = vmatpush1.msra.mxu0 %v534
    %3713 = vmatprep.subr.mxu0 0.0
    %3714 = vmatpush1.msra.mxu0 0.0
    %3715 = vmatprep.subr.mxu0 0.0
    %3716 = vmatpush1.msra.mxu0 0.0
    %3717 = vmatprep.subr.mxu0 0.0
    %3718 = vmatpush1.msra.mxu0 0.0
    %3719 = vmatprep.subr.mxu0 0.0
    %3720 = vmatpush1.msra.mxu0 0.0
    %3721 = vmatprep.subr.mxu0 0.0
    %3722 = vmatpush1.msra.mxu0 0.0
    %3723 = vmatprep.subr.mxu0 0.0
    %3724 = vmatpush1.msra.mxu0 0.0
    %3725 = vmatprep.subr.mxu0 0.0
    %3726 = vmatpush1.msra.mxu0 0.0
    %3727 = vmatprep.subr.mxu0 0.0
    %3728 = vmatpush1.msra.mxu0 0.0
    %3729 = vmatprep.subr.mxu0 0.0
    %3730 = vmatpush1.msra.mxu0 0.0
    %3731 = vmatprep.subr.mxu0 0.0
    %3732 = vmatpush1.msra.mxu0 0.0
    %3733 = vmatprep.subr.mxu0 0.0
    %3734 = vmatpush1.msra.mxu0 0.0
    %3735 = vmatprep.subr.mxu0 0.0
    %3736 = vmatpush1.msra.mxu0 0.0
    %3737 = vmatprep.subr.mxu0 0.0
    %3738 = vmatpush1.msra.mxu0 0.0
    %3739 = vmatprep.subr.mxu0 0.0
    %3740 = vmatpush1.msra.mxu0 0.0
    %3741 = vmatprep.subr.mxu0 0.0
    %3742 = vmatpush1.msra.mxu0 0.0
    %3743 = vmatprep.subr.mxu0 0.0
    %3744 = vmatpush1.msra.mxu0 0.0
    %3745 = vmatprep.mubr.f32.mxu0 0.0
    %3746 = vmatmul.mubr.f32.gmra.mrb[0].mxu0 %v3373
    %v3747 = vpop.f32.mrb[0].mxu0
    %v3748 = vadd.f32 0.0, %v3747
    %v3749 = vpop.f32.mrb[0].mxu0
    %v3750 = vadd.f32 0.0, %v3749
    %3751 = vdwg.mxu0
    %3752 = vmatprep.subr.mxu0 0.0
    %3753 = vmatpush1.msra.mxu0 %v491
    %3754 = vmatprep.subr.mxu0 0.0
    %3755 = vmatpush1.msra.mxu0 %v494
    %3756 = vmatprep.subr.mxu0 0.0
    %3757 = vmatpush1.msra.mxu0 %v497
    %3758 = vmatprep.subr.mxu0 0.0
    %3759 = vmatpush1.msra.mxu0 %v500
    %3760 = vmatprep.subr.mxu0 0.0
    %3761 = vmatpush1.msra.mxu0 %v503
    %3762 = vmatprep.subr.mxu0 0.0
    %3763 = vmatpush1.msra.mxu0 %v506
    %3764 = vmatprep.subr.mxu0 0.0
    %3765 = vmatpush1.msra.mxu0 %v509
    %3766 = vmatprep.subr.mxu0 0.0
    %3767 = vmatpush1.msra.mxu0 %v512
    %3768 = vmatprep.subr.mxu0 0.0
    %3769 = vmatpush1.msra.mxu0 %v515
    %3770 = vmatprep.subr.mxu0 0.0
    %3771 = vmatpush1.msra.mxu0 %v518
    %3772 = vmatprep.subr.mxu0 0.0
    %3773 = vmatpush1.msra.mxu0 %v521
    %3774 = vmatprep.subr.mxu0 0.0
    %3775 = vmatpush1.msra.mxu0 %v524
    %3776 = vmatprep.subr.mxu0 0.0
    %3777 = vmatpush1.msra.mxu0 %v527
    %3778 = vmatprep.subr.mxu0 0.0
    %3779 = vmatpush1.msra.mxu0 %v530
    %3780 = vmatprep.subr.mxu0 0.0
    %3781 = vmatpush1.msra.mxu0 %v533
    %3782 = vmatprep.subr.mxu0 0.0
    %3783 = vmatpush1.msra.mxu0 %v536
    %3784 = vmatprep.subr.mxu0 0.0
    %3785 = vmatpush1.msra.mxu0 0.0
    %3786 = vmatprep.subr.mxu0 0.0
    %3787 = vmatpush1.msra.mxu0 0.0
    %3788 = vmatprep.subr.mxu0 0.0
    %3789 = vmatpush1.msra.mxu0 0.0
    %3790 = vmatprep.subr.mxu0 0.0
    %3791 = vmatpush1.msra.mxu0 0.0
    %3792 = vmatprep.subr.mxu0 0.0
    %3793 = vmatpush1.msra.mxu0 0.0
    %3794 = vmatprep.subr.mxu0 0.0
    %3795 = vmatpush1.msra.mxu0 0.0
    %3796 = vmatprep.subr.mxu0 0.0
    %3797 = vmatpush1.msra.mxu0 0.0
    %3798 = vmatprep.subr.mxu0 0.0
    %3799 = vmatpush1.msra.mxu0 0.0
    %3800 = vmatprep.subr.mxu0 0.0
    %3801 = vmatpush1.msra.mxu0 0.0
    %3802 = vmatprep.subr.mxu0 0.0
    %3803 = vmatpush1.msra.mxu0 0.0
    %3804 = vmatprep.subr.mxu0 0.0
    %3805 = vmatpush1.msra.mxu0 0.0
    %3806 = vmatprep.subr.mxu0 0.0
    %3807 = vmatpush1.msra.mxu0 0.0
    %3808 = vmatprep.subr.mxu0 0.0
    %3809 = vmatpush1.msra.mxu0 0.0
    %3810 = vmatprep.subr.mxu0 0.0
    %3811 = vmatpush1.msra.mxu0 0.0
    %3812 = vmatprep.subr.mxu0 0.0
    %3813 = vmatpush1.msra.mxu0 0.0
    %3814 = vmatprep.subr.mxu0 0.0
    %3815 = vmatpush1.msra.mxu0 0.0
    %3816 = vmatprep.mubr.f32.mxu0 0.0
    %3817 = vmatmul.mubr.f32.gmra.mrb[0].mxu0 %v3373
    %v3818 = vpop.f32.mrb[0].mxu0
    %v3819 = vadd.f32 0.0, %v3818
    %v3820 = vpop.f32.mrb[0].mxu0
    %3821 = vdwg.mxu0
    %v3822 = vadd.f32 %v3607, %v3748
    %v3823 = vxor.u32 %v3822, 2147483648
    %v3824 = vmul.f32 %v3823, 1.442695
    %v3825 = vpow.pop %v3824
    %v3826 = vadd.f32 %v3825, 1.0
    %v3827 = vrcp.pop %v3826
    %v3828 = vmul.f32 1.0, %v3827
    %v3829 = vadd.f32 %v3609, %v3750
    %v3830 = vxor.u32 %v3829, 2147483648
    %v3831 = vmul.f32 %v3830, 1.442695
    %v3832 = vpow.pop %v3831
    %v3833 = vadd.f32 %v3832, 1.0
    %v3834 = vrcp.pop %v3833
    %v3835 = vmul.f32 1.0, %v3834
    %v3836 = vadd.f32 %v3819, %v559
    %v3837 = vmul.f32 %v3828, %v3836
    %v3838 = vadd.f32 %v3678, %v3837
    %v3839 = vtanh.pop %v3838
    %v3840 = vsub.f32 %v3373, %v3839
    %v3841 = vmul.f32 %v3835, %v3840
    %v3842 = vadd.f32 %v3839, %v3841
    %3843 = vst [vmem:[#allocation3 + $0x30] sm:$0xff] %v3842
    %v3844 = vld [vmem:[#allocation2 + $0xa8] sm:$0xff]
    %v3845 = vld [vmem:[#allocation2 + $0xb0] sm:$0xff]
    %v3846 = vld [vmem:[#allocation2 + $0xb8] sm:$0xff]
    %3847 = vmatprep.subr.mxu0 %v387
    %3848 = vmatpush1.msra.mxu0 %v386
    %3849 = vmatprep.subr.mxu0 %v390
    %3850 = vmatpush1.msra.mxu0 %v389
    %3851 = vmatprep.subr.mxu0 %v393
    %3852 = vmatpush1.msra.mxu0 %v392
    %3853 = vmatprep.subr.mxu0 %v396
    %3854 = vmatpush1.msra.mxu0 %v395
    %3855 = vmatprep.subr.mxu0 %v399
    %3856 = vmatpush1.msra.mxu0 %v398
    %3857 = vmatprep.subr.mxu0 %v402
    %3858 = vmatpush1.msra.mxu0 %v401
    %3859 = vmatprep.subr.mxu0 %v405
    %3860 = vmatpush1.msra.mxu0 %v404
    %3861 = vmatprep.subr.mxu0 %v408
    %3862 = vmatpush1.msra.mxu0 %v407
    %3863 = vmatprep.subr.mxu0 %v411
    %3864 = vmatpush1.msra.mxu0 %v410
    %3865 = vmatprep.subr.mxu0 %v414
    %3866 = vmatpush1.msra.mxu0 %v413
    %3867 = vmatprep.subr.mxu0 %v417
    %3868 = vmatpush1.msra.mxu0 %v416
    %3869 = vmatprep.subr.mxu0 %v420
    %3870 = vmatpush1.msra.mxu0 %v419
    %3871 = vmatprep.subr.mxu0 %v423
    %3872 = vmatpush1.msra.mxu0 %v422
    %3873 = vmatprep.subr.mxu0 %v426
    %3874 = vmatpush1.msra.mxu0 %v425
    %3875 = vmatprep.subr.mxu0 %v429
    %3876 = vmatpush1.msra.mxu0 %v428
    %3877 = vmatprep.subr.mxu0 %v432
    %3878 = vmatpush1.msra.mxu0 %v431
    %3879 = vmatprep.subr.mxu0 0.0
    %3880 = vmatpush1.msra.mxu0 0.0
    %3881 = vmatprep.subr.mxu0 0.0
    %3882 = vmatpush1.msra.mxu0 0.0
    %3883 = vmatprep.subr.mxu0 0.0
    %3884 = vmatpush1.msra.mxu0 0.0
    %3885 = vmatprep.subr.mxu0 0.0
    %3886 = vmatpush1.msra.mxu0 0.0
    %3887 = vmatprep.subr.mxu0 0.0
    %3888 = vmatpush1.msra.mxu0 0.0
    %3889 = vmatprep.subr.mxu0 0.0
    %3890 = vmatpush1.msra.mxu0 0.0
    %3891 = vmatprep.subr.mxu0 0.0
    %3892 = vmatpush1.msra.mxu0 0.0
    %3893 = vmatprep.subr.mxu0 0.0
    %3894 = vmatpush1.msra.mxu0 0.0
    %3895 = vmatprep.subr.mxu0 0.0
    %3896 = vmatpush1.msra.mxu0 0.0
    %3897 = vmatprep.subr.mxu0 0.0
    %3898 = vmatpush1.msra.mxu0 0.0
    %3899 = vmatprep.subr.mxu0 0.0
    %3900 = vmatpush1.msra.mxu0 0.0
    %3901 = vmatprep.subr.mxu0 0.0
    %3902 = vmatpush1.msra.mxu0 0.0
    %3903 = vmatprep.subr.mxu0 0.0
    %3904 = vmatpush1.msra.mxu0 0.0
    %3905 = vmatprep.subr.mxu0 0.0
    %3906 = vmatpush1.msra.mxu0 0.0
    %3907 = vmatprep.subr.mxu0 0.0
    %3908 = vmatpush1.msra.mxu0 0.0
    %3909 = vmatprep.subr.mxu0 0.0
    %3910 = vmatpush1.msra.mxu0 0.0
    %3911 = vmatprep.mubr.f32.mxu0 0.0
    %3912 = vmatmul.mubr.f32.gmra.mrb[0].mxu0 %v3539
    %v3913 = vpop.f32.mrb[0].mxu0
    %v3914 = vadd.f32 0.0, %v3913
    %v3915 = vpop.f32.mrb[0].mxu0
    %v3916 = vadd.f32 0.0, %v3915
    %3917 = vdwg.mxu0
    %3918 = vmatprep.subr.mxu0 0.0
    %3919 = vmatpush1.msra.mxu0 %v388
    %3920 = vmatprep.subr.mxu0 0.0
    %3921 = vmatpush1.msra.mxu0 %v391
    %3922 = vmatprep.subr.mxu0 0.0
    %3923 = vmatpush1.msra.mxu0 %v394
    %3924 = vmatprep.subr.mxu0 0.0
    %3925 = vmatpush1.msra.mxu0 %v397
    %3926 = vmatprep.subr.mxu0 0.0
    %3927 = vmatpush1.msra.mxu0 %v400
    %3928 = vmatprep.subr.mxu0 0.0
    %3929 = vmatpush1.msra.mxu0 %v403
    %3930 = vmatprep.subr.mxu0 0.0
    %3931 = vmatpush1.msra.mxu0 %v406
    %3932 = vmatprep.subr.mxu0 0.0
    %3933 = vmatpush1.msra.mxu0 %v409
    %3934 = vmatprep.subr.mxu0 0.0
    %3935 = vmatpush1.msra.mxu0 %v412
    %3936 = vmatprep.subr.mxu0 0.0
    %3937 = vmatpush1.msra.mxu0 %v415
    %3938 = vmatprep.subr.mxu0 0.0
    %3939 = vmatpush1.msra.mxu0 %v418
    %3940 = vmatprep.subr.mxu0 0.0
    %3941 = vmatpush1.msra.mxu0 %v421
    %3942 = vmatprep.subr.mxu0 0.0
    %3943 = vmatpush1.msra.mxu0 %v424
    %3944 = vmatprep.subr.mxu0 0.0
    %3945 = vmatpush1.msra.mxu0 %v427
    %3946 = vmatprep.subr.mxu0 0.0
    %3947 = vmatpush1.msra.mxu0 %v430
    %3948 = vmatprep.subr.mxu0 0.0
    %3949 = vmatpush1.msra.mxu0 %v433
    %3950 = vmatprep.subr.mxu0 0.0
    %3951 = vmatpush1.msra.mxu0 0.0
    %3952 = vmatprep.subr.mxu0 0.0
    %3953 = vmatpush1.msra.mxu0 0.0
    %3954 = vmatprep.subr.mxu0 0.0
    %3955 = vmatpush1.msra.mxu0 0.0
    %3956 = vmatprep.subr.mxu0 0.0
    %3957 = vmatpush1.msra.mxu0 0.0
    %3958 = vmatprep.subr.mxu0 0.0
    %3959 = vmatpush1.msra.mxu0 0.0
    %3960 = vmatprep.subr.mxu0 0.0
    %3961 = vmatpush1.msra.mxu0 0.0
    %3962 = vmatprep.subr.mxu0 0.0
    %3963 = vmatpush1.msra.mxu0 0.0
    %3964 = vmatprep.subr.mxu0 0.0
    %3965 = vmatpush1.msra.mxu0 0.0
    %3966 = vmatprep.subr.mxu0 0.0
    %3967 = vmatpush1.msra.mxu0 0.0
    %3968 = vmatprep.subr.mxu0 0.0
    %3969 = vmatpush1.msra.mxu0 0.0
    %3970 = vmatprep.subr.mxu0 0.0
    %3971 = vmatpush1.msra.mxu0 0.0
    %3972 = vmatprep.subr.mxu0 0.0
    %3973 = vmatpush1.msra.mxu0 0.0
    %3974 = vmatprep.subr.mxu0 0.0
    %3975 = vmatpush1.msra.mxu0 0.0
    %3976 = vmatprep.subr.mxu0 0.0
    %3977 = vmatpush1.msra.mxu0 0.0
    %3978 = vmatprep.subr.mxu0 0.0
    %3979 = vmatpush1.msra.mxu0 0.0
    %3980 = vmatprep.subr.mxu0 0.0
    %3981 = vmatpush1.msra.mxu0 0.0
    %3982 = vmatprep.mubr.f32.mxu0 0.0
    %3983 = vmatmul.mubr.f32.gmra.mrb[0].mxu0 %v3539
    %v3984 = vpop.f32.mrb[0].mxu0
    %v3985 = vadd.f32 0.0, %v3984
    %v3986 = vpop.f32.mrb[0].mxu0
    %3987 = vdwg.mxu0
    %v3988 = vadd.f32 %v3844, %v3914
    %v3989 = vxor.u32 %v3988, 2147483648
    %v3990 = vmul.f32 %v3989, 1.442695
    %v3991 = vpow.pop %v3990
    %v3992 = vadd.f32 %v3991, 1.0
    %v3993 = vrcp.pop %v3992
    %v3994 = vmul.f32 1.0, %v3993
    %v3995 = vadd.f32 %v3845, %v3916
    %v3996 = vxor.u32 %v3995, 2147483648
    %v3997 = vmul.f32 %v3996, 1.442695
    %v3998 = vpow.pop %v3997
    %v3999 = vadd.f32 %v3998, 1.0
    %v4000 = vrcp.pop %v3999
    %v4001 = vmul.f32 1.0, %v4000
    %v4002 = vadd.f32 %v3985, %v439
    %v4003 = vmul.f32 %v3994, %v4002
    %v4004 = vadd.f32 %v3846, %v4003
    %v4005 = vtanh.pop %v4004
    %v4006 = vsub.f32 %v3539, %v4005
    %v4007 = vmul.f32 %v4001, %v4006
    %v4008 = vadd.f32 %v4005, %v4007
    %4009 = vmatprep.subr.mxu0 %v442
    %4010 = vmatpush1.msra.mxu0 %v441
    %4011 = vmatprep.subr.mxu0 %v445
    %4012 = vmatpush1.msra.mxu0 %v444
    %4013 = vmatprep.subr.mxu0 %v448
    %4014 = vmatpush1.msra.mxu0 %v447
    %4015 = vmatprep.subr.mxu0 %v451
    %4016 = vmatpush1.msra.mxu0 %v450
    %4017 = vmatprep.subr.mxu0 %v454
    %4018 = vmatpush1.msra.mxu0 %v453
    %4019 = vmatprep.subr.mxu0 %v457
    %4020 = vmatpush1.msra.mxu0 %v456
    %4021 = vmatprep.subr.mxu0 %v460
    %4022 = vmatpush1.msra.mxu0 %v459
    %4023 = vmatprep.subr.mxu0 %v463
    %4024 = vmatpush1.msra.mxu0 %v462
    %4025 = vmatprep.subr.mxu0 %v466
    %4026 = vmatpush1.msra.mxu0 %v465
    %4027 = vmatprep.subr.mxu0 %v469
    %4028 = vmatpush1.msra.mxu0 %v468
    %4029 = vmatprep.subr.mxu0 %v472
    %4030 = vmatpush1.msra.mxu0 %v471
    %4031 = vmatprep.subr.mxu0 %v475
    %4032 = vmatpush1.msra.mxu0 %v474
    %4033 = vmatprep.subr.mxu0 %v478
    %4034 = vmatpush1.msra.mxu0 %v477
    %4035 = vmatprep.subr.mxu0 %v481
    %4036 = vmatpush1.msra.mxu0 %v480
    %4037 = vmatprep.subr.mxu0 %v484
    %4038 = vmatpush1.msra.mxu0 %v483
    %4039 = vmatprep.subr.mxu0 %v487
    %4040 = vmatpush1.msra.mxu0 %v486
    %4041 = vmatprep.subr.mxu0 0.0
    %4042 = vmatpush1.msra.mxu0 0.0
    %4043 = vmatprep.subr.mxu0 0.0
    %4044 = vmatpush1.msra.mxu0 0.0
    %4045 = vmatprep.subr.mxu0 0.0
    %4046 = vmatpush1.msra.mxu0 0.0
    %4047 = vmatprep.subr.mxu0 0.0
    %4048 = vmatpush1.msra.mxu0 0.0
    %4049 = vmatprep.subr.mxu0 0.0
    %4050 = vmatpush1.msra.mxu0 0.0
    %4051 = vmatprep.subr.mxu0 0.0
    %4052 = vmatpush1.msra.mxu0 0.0
    %4053 = vmatprep.subr.mxu0 0.0
    %4054 = vmatpush1.msra.mxu0 0.0
    %4055 = vmatprep.subr.mxu0 0.0
    %4056 = vmatpush1.msra.mxu0 0.0
    %4057 = vmatprep.subr.mxu0 0.0
    %4058 = vmatpush1.msra.mxu0 0.0
    %4059 = vmatprep.subr.mxu0 0.0
    %4060 = vmatpush1.msra.mxu0 0.0
    %4061 = vmatprep.subr.mxu0 0.0
    %4062 = vmatpush1.msra.mxu0 0.0
    %4063 = vmatprep.subr.mxu0 0.0
    %4064 = vmatpush1.msra.mxu0 0.0
    %4065 = vmatprep.subr.mxu0 0.0
    %4066 = vmatpush1.msra.mxu0 0.0
    %4067 = vmatprep.subr.mxu0 0.0
    %4068 = vmatpush1.msra.mxu0 0.0
    %4069 = vmatprep.subr.mxu0 0.0
    %4070 = vmatpush1.msra.mxu0 0.0
    %4071 = vmatprep.subr.mxu0 0.0
    %4072 = vmatpush1.msra.mxu0 0.0
    %4073 = vmatprep.mubr.f32.mxu0 0.0
    %4074 = vmatmul.mubr.f32.gmra.mrb[0].mxu0 %v4008
    %v4075 = vpop.f32.mrb[0].mxu0
    %v4076 = vadd.f32 %v542, %v4075
    %v4077 = vpop.f32.mrb[0].mxu0
    %v4078 = vadd.f32 %v546, %v4077
    %4079 = vdwg.mxu0
    %4080 = vmatprep.subr.mxu0 0.0
    %4081 = vmatpush1.msra.mxu0 %v443
    %4082 = vmatprep.subr.mxu0 0.0
    %4083 = vmatpush1.msra.mxu0 %v446
    %4084 = vmatprep.subr.mxu0 0.0
    %4085 = vmatpush1.msra.mxu0 %v449
    %4086 = vmatprep.subr.mxu0 0.0
    %4087 = vmatpush1.msra.mxu0 %v452
    %4088 = vmatprep.subr.mxu0 0.0
    %4089 = vmatpush1.msra.mxu0 %v455
    %4090 = vmatprep.subr.mxu0 0.0
    %4091 = vmatpush1.msra.mxu0 %v458
    %4092 = vmatprep.subr.mxu0 0.0
    %4093 = vmatpush1.msra.mxu0 %v461
    %4094 = vmatprep.subr.mxu0 0.0
    %4095 = vmatpush1.msra.mxu0 %v464
    %4096 = vmatprep.subr.mxu0 0.0
    %4097 = vmatpush1.msra.mxu0 %v467
    %4098 = vmatprep.subr.mxu0 0.0
    %4099 = vmatpush1.msra.mxu0 %v470
    %4100 = vmatprep.subr.mxu0 0.0
    %4101 = vmatpush1.msra.mxu0 %v473
    %4102 = vmatprep.subr.mxu0 0.0
    %4103 = vmatpush1.msra.mxu0 %v476
    %4104 = vmatprep.subr.mxu0 0.0
    %4105 = vmatpush1.msra.mxu0 %v479
    %4106 = vmatprep.subr.mxu0 0.0
    %4107 = vmatpush1.msra.mxu0 %v482
    %4108 = vmatprep.subr.mxu0 0.0
    %4109 = vmatpush1.msra.mxu0 %v485
    %4110 = vmatprep.subr.mxu0 0.0
    %4111 = vmatpush1.msra.mxu0 %v488
    %4112 = vmatprep.subr.mxu0 0.0
    %4113 = vmatpush1.msra.mxu0 0.0
    %4114 = vmatprep.subr.mxu0 0.0
    %4115 = vmatpush1.msra.mxu0 0.0
    %4116 = vmatprep.subr.mxu0 0.0
    %4117 = vmatpush1.msra.mxu0 0.0
    %4118 = vmatprep.subr.mxu0 0.0
    %4119 = vmatpush1.msra.mxu0 0.0
    %4120 = vmatprep.subr.mxu0 0.0
    %4121 = vmatpush1.msra.mxu0 0.0
    %4122 = vmatprep.subr.mxu0 0.0
    %4123 = vmatpush1.msra.mxu0 0.0
    %4124 = vmatprep.subr.mxu0 0.0
    %4125 = vmatpush1.msra.mxu0 0.0
    %4126 = vmatprep.subr.mxu0 0.0
    %4127 = vmatpush1.msra.mxu0 0.0
    %4128 = vmatprep.subr.mxu0 0.0
    %4129 = vmatpush1.msra.mxu0 0.0
    %4130 = vmatprep.subr.mxu0 0.0
    %4131 = vmatpush1.msra.mxu0 0.0
    %4132 = vmatprep.subr.mxu0 0.0
    %4133 = vmatpush1.msra.mxu0 0.0
    %4134 = vmatprep.subr.mxu0 0.0
    %4135 = vmatpush1.msra.mxu0 0.0
    %4136 = vmatprep.subr.mxu0 0.0
    %4137 = vmatpush1.msra.mxu0 0.0
    %4138 = vmatprep.subr.mxu0 0.0
    %4139 = vmatpush1.msra.mxu0 0.0
    %4140 = vmatprep.subr.mxu0 0.0
    %4141 = vmatpush1.msra.mxu0 0.0
    %4142 = vmatprep.subr.mxu0 0.0
    %4143 = vmatpush1.msra.mxu0 0.0
    %4144 = vmatprep.mubr.f32.mxu0 0.0
    %4145 = vmatmul.mubr.f32.gmra.mrb[0].mxu0 %v4008
    %v4146 = vpop.f32.mrb[0].mxu0
    %v4147 = vadd.f32 %v550, %v4146
    %v4148 = vpop.f32.mrb[0].mxu0
    %4149 = vdwg.mxu0
    %4150 = vmatprep.subr.mxu0 %v490
    %4151 = vmatpush1.msra.mxu0 %v489
    %4152 = vmatprep.subr.mxu0 %v493
    %4153 = vmatpush1.msra.mxu0 %v492
    %4154 = vmatprep.subr.mxu0 %v496
    %4155 = vmatpush1.msra.mxu0 %v495
    %4156 = vmatprep.subr.mxu0 %v499
    %4157 = vmatpush1.msra.mxu0 %v498
    %4158 = vmatprep.subr.mxu0 %v502
    %4159 = vmatpush1.msra.mxu0 %v501
    %4160 = vmatprep.subr.mxu0 %v505
    %4161 = vmatpush1.msra.mxu0 %v504
    %4162 = vmatprep.subr.mxu0 %v508
    %4163 = vmatpush1.msra.mxu0 %v507
    %4164 = vmatprep.subr.mxu0 %v511
    %4165 = vmatpush1.msra.mxu0 %v510
    %4166 = vmatprep.subr.mxu0 %v514
    %4167 = vmatpush1.msra.mxu0 %v513
    %4168 = vmatprep.subr.mxu0 %v517
    %4169 = vmatpush1.msra.mxu0 %v516
    %4170 = vmatprep.subr.mxu0 %v520
    %4171 = vmatpush1.msra.mxu0 %v519
    %4172 = vmatprep.subr.mxu0 %v523
    %4173 = vmatpush1.msra.mxu0 %v522
    %4174 = vmatprep.subr.mxu0 %v526
    %4175 = vmatpush1.msra.mxu0 %v525
    %4176 = vmatprep.subr.mxu0 %v529
    %4177 = vmatpush1.msra.mxu0 %v528
    %4178 = vmatprep.subr.mxu0 %v532
    %4179 = vmatpush1.msra.mxu0 %v531
    %4180 = vmatprep.subr.mxu0 %v535
    %4181 = vmatpush1.msra.mxu0 %v534
    %4182 = vmatprep.subr.mxu0 0.0
    %4183 = vmatpush1.msra.mxu0 0.0
    %4184 = vmatprep.subr.mxu0 0.0
    %4185 = vmatpush1.msra.mxu0 0.0
    %4186 = vmatprep.subr.mxu0 0.0
    %4187 = vmatpush1.msra.mxu0 0.0
    %4188 = vmatprep.subr.mxu0 0.0
    %4189 = vmatpush1.msra.mxu0 0.0
    %4190 = vmatprep.subr.mxu0 0.0
    %4191 = vmatpush1.msra.mxu0 0.0
    %4192 = vmatprep.subr.mxu0 0.0
    %4193 = vmatpush1.msra.mxu0 0.0
    %4194 = vmatprep.subr.mxu0 0.0
    %4195 = vmatpush1.msra.mxu0 0.0
    %4196 = vmatprep.subr.mxu0 0.0
    %4197 = vmatpush1.msra.mxu0 0.0
    %4198 = vmatprep.subr.mxu0 0.0
    %4199 = vmatpush1.msra.mxu0 0.0
    %4200 = vmatprep.subr.mxu0 0.0
    %4201 = vmatpush1.msra.mxu0 0.0
    %4202 = vmatprep.subr.mxu0 0.0
    %4203 = vmatpush1.msra.mxu0 0.0
    %4204 = vmatprep.subr.mxu0 0.0
    %4205 = vmatpush1.msra.mxu0 0.0
    %4206 = vmatprep.subr.mxu0 0.0
    %4207 = vmatpush1.msra.mxu0 0.0
    %4208 = vmatprep.subr.mxu0 0.0
    %4209 = vmatpush1.msra.mxu0 0.0
    %4210 = vmatprep.subr.mxu0 0.0
    %4211 = vmatpush1.msra.mxu0 0.0
    %4212 = vmatprep.subr.mxu0 0.0
    %4213 = vmatpush1.msra.mxu0 0.0
    %4214 = vmatprep.mubr.f32.mxu0 0.0
    %4215 = vmatmul.mubr.f32.gmra.mrb[0].mxu0 %v3842
    %v4216 = vpop.f32.mrb[0].mxu0
    %v4217 = vadd.f32 0.0, %v4216
    %v4218 = vpop.f32.mrb[0].mxu0
    %v4219 = vadd.f32 0.0, %v4218
    %4220 = vdwg.mxu0
    %4221 = vmatprep.subr.mxu0 0.0
    %4222 = vmatpush1.msra.mxu0 %v491
    %4223 = vmatprep.subr.mxu0 0.0
    %4224 = vmatpush1.msra.mxu0 %v494
    %4225 = vmatprep.subr.mxu0 0.0
    %4226 = vmatpush1.msra.mxu0 %v497
    %4227 = vmatprep.subr.mxu0 0.0
    %4228 = vmatpush1.msra.mxu0 %v500
    %4229 = vmatprep.subr.mxu0 0.0
    %4230 = vmatpush1.msra.mxu0 %v503
    %4231 = vmatprep.subr.mxu0 0.0
    %4232 = vmatpush1.msra.mxu0 %v506
    %4233 = vmatprep.subr.mxu0 0.0
    %4234 = vmatpush1.msra.mxu0 %v509
    %4235 = vmatprep.subr.mxu0 0.0
    %4236 = vmatpush1.msra.mxu0 %v512
    %4237 = vmatprep.subr.mxu0 0.0
    %4238 = vmatpush1.msra.mxu0 %v515
    %4239 = vmatprep.subr.mxu0 0.0
    %4240 = vmatpush1.msra.mxu0 %v518
    %4241 = vmatprep.subr.mxu0 0.0
    %4242 = vmatpush1.msra.mxu0 %v521
    %4243 = vmatprep.subr.mxu0 0.0
    %4244 = vmatpush1.msra.mxu0 %v524
    %4245 = vmatprep.subr.mxu0 0.0
    %4246 = vmatpush1.msra.mxu0 %v527
    %4247 = vmatprep.subr.mxu0 0.0
    %4248 = vmatpush1.msra.mxu0 %v530
    %4249 = vmatprep.subr.mxu0 0.0
    %4250 = vmatpush1.msra.mxu0 %v533
    %4251 = vmatprep.subr.mxu0 0.0
    %4252 = vmatpush1.msra.mxu0 %v536
    %4253 = vmatprep.subr.mxu0 0.0
    %4254 = vmatpush1.msra.mxu0 0.0
    %4255 = vmatprep.subr.mxu0 0.0
    %4256 = vmatpush1.msra.mxu0 0.0
    %4257 = vmatprep.subr.mxu0 0.0
    %4258 = vmatpush1.msra.mxu0 0.0
    %4259 = vmatprep.subr.mxu0 0.0
    %4260 = vmatpush1.msra.mxu0 0.0
    %4261 = vmatprep.subr.mxu0 0.0
    %4262 = vmatpush1.msra.mxu0 0.0
    %4263 = vmatprep.subr.mxu0 0.0
    %4264 = vmatpush1.msra.mxu0 0.0
    %4265 = vmatprep.subr.mxu0 0.0
    %4266 = vmatpush1.msra.mxu0 0.0
    %4267 = vmatprep.subr.mxu0 0.0
    %4268 = vmatpush1.msra.mxu0 0.0
    %4269 = vmatprep.subr.mxu0 0.0
    %4270 = vmatpush1.msra.mxu0 0.0
    %4271 = vmatprep.subr.mxu0 0.0
    %4272 = vmatpush1.msra.mxu0 0.0
    %4273 = vmatprep.subr.mxu0 0.0
    %4274 = vmatpush1.msra.mxu0 0.0
    %4275 = vmatprep.subr.mxu0 0.0
    %4276 = vmatpush1.msra.mxu0 0.0
    %4277 = vmatprep.subr.mxu0 0.0
    %4278 = vmatpush1.msra.mxu0 0.0
    %4279 = vmatprep.subr.mxu0 0.0
    %4280 = vmatpush1.msra.mxu0 0.0
    %4281 = vmatprep.subr.mxu0 0.0
    %4282 = vmatpush1.msra.mxu0 0.0
    %4283 = vmatprep.subr.mxu0 0.0
    %4284 = vmatpush1.msra.mxu0 0.0
    %4285 = vmatprep.mubr.f32.mxu0 0.0
    %4286 = vmatmul.mubr.f32.gmra.mrb[0].mxu0 %v3842
    %v4287 = vpop.f32.mrb[0].mxu0
    %v4288 = vadd.f32 0.0, %v4287
    %v4289 = vpop.f32.mrb[0].mxu0
    %4290 = vdwg.mxu0
    %v4291 = vadd.f32 %v4076, %v4217
    %v4292 = vxor.u32 %v4291, 2147483648
    %v4293 = vmul.f32 %v4292, 1.442695
    %v4294 = vpow.pop %v4293
    %v4295 = vadd.f32 %v4294, 1.0
    %v4296 = vrcp.pop %v4295
    %v4297 = vmul.f32 1.0, %v4296
    %v4298 = vadd.f32 %v4078, %v4219
    %v4299 = vxor.u32 %v4298, 2147483648
    %v4300 = vmul.f32 %v4299, 1.442695
    %v4301 = vpow.pop %v4300
    %v4302 = vadd.f32 %v4301, 1.0
    %v4303 = vrcp.pop %v4302
    %v4304 = vmul.f32 1.0, %v4303
    %v4305 = vadd.f32 %v4288, %v559
    %v4306 = vmul.f32 %v4297, %v4305
    %v4307 = vadd.f32 %v4147, %v4306
    %v4308 = vtanh.pop %v4307
    %v4309 = vsub.f32 %v3842, %v4308
    %v4310 = vmul.f32 %v4304, %v4309
    %v4311 = vadd.f32 %v4308, %v4310
    %4312 = vst [vmem:[#allocation3 + $0x38] sm:$0xff] %v4311
    %s4313 = smul.u32 1024, 1
    %s4314 = sshll.u32 %s4313, 4
    %4315 = dma.done [#allocation5], %s4314
    %v4316 = vld [vmem:[#allocation3] sm:$0xff]
    %v4317 = vld [vmem:[#allocation3 + $0x8] sm:$0xff]
    %v4318 = vld [vmem:[#allocation3 + $0x10] sm:$0xff]
    %v4319 = vld [vmem:[#allocation3 + $0x18] sm:$0xff]
    %v4320 = vld [vmem:[#allocation3 + $0x20] sm:$0xff]
    %v4321 = vld [vmem:[#allocation3 + $0x28] sm:$0xff]
    %v4322 = vld [vmem:[#allocation3 + $0x30] sm:$0xff]
    %v4323 = vld [vmem:[#allocation3 + $0x38] sm:$0xff]
    %v4324 = vld [vmem:[#allocation4] sm:$0xff]
    %v4325 = vld [vmem:[#allocation4 + $0x8] sm:$0xff]
    %v4326 = vld [vmem:[#allocation4 + $0x10] sm:$0xff]
    %v4327 = vld [vmem:[#allocation4 + $0x18] sm:$0xff]
    %v4328 = vld [vmem:[#allocation4 + $0x20] sm:$0xff]
    %v4329 = vld [vmem:[#allocation4 + $0x28] sm:$0xff]
    %v4330 = vld [vmem:[#allocation4 + $0x30] sm:$0xff]
    %v4331 = vld [vmem:[#allocation4 + $0x38] sm:$0xff]
    %v4332 = vld [vmem:[#allocation4 + $0x40] sm:$0xff]
    %v4333 = vld [vmem:[#allocation4 + $0x48] sm:$0xff]
    %v4334 = vld [vmem:[#allocation4 + $0x50] sm:$0xff]
    %v4335 = vld [vmem:[#allocation4 + $0x58] sm:$0xff]
    %v4336 = vld [vmem:[#allocation4 + $0x60] sm:$0xff]
    %v4337 = vld [vmem:[#allocation4 + $0x68] sm:$0xff]
    %v4338 = vld [vmem:[#allocation4 + $0x70] sm:$0xff]
    %v4339 = vld [vmem:[#allocation4 + $0x78] sm:$0xff]
    %v4340 = vld [vmem:[#allocation4 + $0x80] sm:$0xff]
    %v4341 = vld [vmem:[#allocation4 + $0x88] sm:$0xff]
    %v4342 = vld [vmem:[#allocation4 + $0x90] sm:$0xff]
    %v4343 = vld [vmem:[#allocation4 + $0x98] sm:$0xff]
    %v4344 = vld [vmem:[#allocation4 + $0xa0] sm:$0xff]
    %v4345 = vld [vmem:[#allocation4 + $0xa8] sm:$0xff]
    %v4346 = vld [vmem:[#allocation4 + $0xb0] sm:$0xff]
    %v4347 = vld [vmem:[#allocation4 + $0xb8] sm:$0xff]
    %v4348 = vld [vmem:[#allocation4 + $0xc0] sm:$0xff]
    %v4349 = vld [vmem:[#allocation4 + $0xc8] sm:$0xff]
    %v4350 = vld [vmem:[#allocation4 + $0xd0] sm:$0xff]
    %v4351 = vld [vmem:[#allocation4 + $0xd8] sm:$0xff]
    %v4352 = vld [vmem:[#allocation4 + $0xe0] sm:$0xff]
    %v4353 = vld [vmem:[#allocation4 + $0xe8] sm:$0xff]
    %v4354 = vld [vmem:[#allocation4 + $0xf0] sm:$0xff]
    %v4355 = vld [vmem:[#allocation4 + $0xf8] sm:$0xff]
    %v4356 = vld [vmem:[#allocation4 + $0x100] sm:$0xff]
    %v4357 = vld [vmem:[#allocation4 + $0x108] sm:$0xff]
    %v4358 = vld [vmem:[#allocation4 + $0x110] sm:$0xff]
    %v4359 = vld [vmem:[#allocation4 + $0x118] sm:$0xff]
    %v4360 = vld [vmem:[#allocation4 + $0x120] sm:$0xff]
    %v4361 = vld [vmem:[#allocation4 + $0x128] sm:$0xff]
    %v4362 = vld [vmem:[#allocation4 + $0x130] sm:$0xff]
    %v4363 = vld [vmem:[#allocation4 + $0x138] sm:$0xff]
    %v4364 = vld [vmem:[#allocation4 + $0x140] sm:$0xff]
    %v4365 = vld [vmem:[#allocation4 + $0x148] sm:$0xff]
    %v4366 = vld [vmem:[#allocation4 + $0x150] sm:$0xff]
    %v4367 = vld [vmem:[#allocation4 + $0x158] sm:$0xff]
    %v4368 = vld [vmem:[#allocation4 + $0x160] sm:$0xff]
    %v4369 = vld [vmem:[#allocation4 + $0x168] sm:$0xff]
    %v4370 = vld [vmem:[#allocation4 + $0x170] sm:$0xff]
    %v4371 = vld [vmem:[#allocation4 + $0x178] sm:$0xff]
    %v4372 = vld [vmem:[#allocation4 + $0x180] sm:$0xff]
    %v4373 = vld [vmem:[#allocation4 + $0x188] sm:$0xff]
    %v4374 = vld [vmem:[#allocation4 + $0x190] sm:$0xff]
    %v4375 = vld [vmem:[#allocation4 + $0x198] sm:$0xff]
    %v4376 = vld [vmem:[#allocation4 + $0x1a0] sm:$0xff]
    %v4377 = vld [vmem:[#allocation4 + $0x1a8] sm:$0xff]
    %v4378 = vld [vmem:[#allocation4 + $0x1b0] sm:$0xff]
    %v4379 = vld [vmem:[#allocation4 + $0x1b8] sm:$0xff]
    %v4380 = vld [vmem:[#allocation4 + $0x1c0] sm:$0xff]
    %v4381 = vld [vmem:[#allocation4 + $0x1c8] sm:$0xff]
    %v4382 = vld [vmem:[#allocation4 + $0x1d0] sm:$0xff]
    %v4383 = vld [vmem:[#allocation4 + $0x1d8] sm:$0xff]
    %v4384 = vld [vmem:[#allocation4 + $0x1e0] sm:$0xff]
    %v4385 = vld [vmem:[#allocation4 + $0x1e8] sm:$0xff]
    %v4386 = vld [vmem:[#allocation4 + $0x1f0] sm:$0xff]
    %v4387 = vld [vmem:[#allocation4 + $0x1f8] sm:$0xff]
    %v4388 = vld [vmem:[#allocation4 + $0x200] sm:$0xff]
    %v4389 = vld [vmem:[#allocation4 + $0x208] sm:$0xff]
    %v4390 = vld [vmem:[#allocation4 + $0x210] sm:$0xff]
    %v4391 = vld [vmem:[#allocation4 + $0x218] sm:$0xff]
    %v4392 = vld [vmem:[#allocation4 + $0x220] sm:$0xff]
    %v4393 = vld [vmem:[#allocation4 + $0x228] sm:$0xff]
    %v4394 = vld [vmem:[#allocation4 + $0x230] sm:$0xff]
    %v4395 = vld [vmem:[#allocation4 + $0x238] sm:$0xff]
    %v4396 = vld [vmem:[#allocation4 + $0x240] sm:$0xff]
    %v4397 = vld [vmem:[#allocation4 + $0x248] sm:$0xff]
    %v4398 = vld [vmem:[#allocation4 + $0x250] sm:$0xff]
    %v4399 = vld [vmem:[#allocation4 + $0x258] sm:$0xff]
    %v4400 = vld [vmem:[#allocation4 + $0x260] sm:$0xff]
    %v4401 = vld [vmem:[#allocation4 + $0x268] sm:$0xff]
    %v4402 = vld [vmem:[#allocation4 + $0x270] sm:$0xff]
    %v4403 = vld [vmem:[#allocation4 + $0x278] sm:$0xff]
    %v4404 = vld [vmem:[#allocation4 + $0x280] sm:$0xff]
    %v4405 = vld [vmem:[#allocation4 + $0x288] sm:$0xff]
    %v4406 = vld [vmem:[#allocation4 + $0x290] sm:$0xff]
    %v4407 = vld [vmem:[#allocation4 + $0x298] sm:$0xff]
    %v4408 = vld [vmem:[#allocation4 + $0x2a0] sm:$0xff]
    %v4409 = vld [vmem:[#allocation4 + $0x2a8] sm:$0xff]
    %v4410 = vld [vmem:[#allocation4 + $0x2b0] sm:$0xff]
    %v4411 = vld [vmem:[#allocation4 + $0x2b8] sm:$0xff]
    %v4412 = vld [vmem:[#allocation4 + $0x2c0] sm:$0xff]
    %v4413 = vld [vmem:[#allocation4 + $0x2c8] sm:$0xff]
    %v4414 = vld [vmem:[#allocation4 + $0x2d0] sm:$0xff]
    %v4415 = vld [vmem:[#allocation4 + $0x2d8] sm:$0xff]
    %v4416 = vld [vmem:[#allocation4 + $0x2e0] sm:$0xff]
    %v4417 = vld [vmem:[#allocation4 + $0x2e8] sm:$0xff]
    %v4418 = vld [vmem:[#allocation4 + $0x2f0] sm:$0xff]
    %v4419 = vld [vmem:[#allocation4 + $0x2f8] sm:$0xff]
    %v4420 = vld [vmem:[#allocation4 + $0x300] sm:$0xff]
    %v4421 = vld [vmem:[#allocation4 + $0x308] sm:$0xff]
    %v4422 = vld [vmem:[#allocation4 + $0x310] sm:$0xff]
    %v4423 = vld [vmem:[#allocation4 + $0x318] sm:$0xff]
    %v4424 = vld [vmem:[#allocation4 + $0x320] sm:$0xff]
    %v4425 = vld [vmem:[#allocation4 + $0x328] sm:$0xff]
    %v4426 = vld [vmem:[#allocation4 + $0x330] sm:$0xff]
    %v4427 = vld [vmem:[#allocation4 + $0x338] sm:$0xff]
    %v4428 = vld [vmem:[#allocation4 + $0x340] sm:$0xff]
    %v4429 = vld [vmem:[#allocation4 + $0x348] sm:$0xff]
    %v4430 = vld [vmem:[#allocation4 + $0x350] sm:$0xff]
    %v4431 = vld [vmem:[#allocation4 + $0x358] sm:$0xff]
    %v4432 = vld [vmem:[#allocation4 + $0x360] sm:$0xff]
    %v4433 = vld [vmem:[#allocation4 + $0x368] sm:$0xff]
    %v4434 = vld [vmem:[#allocation4 + $0x370] sm:$0xff]
    %v4435 = vld [vmem:[#allocation4 + $0x378] sm:$0xff]
    %v4436 = vld [vmem:[#allocation4 + $0x380] sm:$0xff]
    %v4437 = vld [vmem:[#allocation4 + $0x388] sm:$0xff]
    %v4438 = vld [vmem:[#allocation4 + $0x390] sm:$0xff]
    %v4439 = vld [vmem:[#allocation4 + $0x398] sm:$0xff]
    %v4440 = vld [vmem:[#allocation4 + $0x3a0] sm:$0xff]
    %v4441 = vld [vmem:[#allocation4 + $0x3a8] sm:$0xff]
    %v4442 = vld [vmem:[#allocation4 + $0x3b0] sm:$0xff]
    %v4443 = vld [vmem:[#allocation4 + $0x3b8] sm:$0xff]
    %v4444 = vld [vmem:[#allocation4 + $0x3c0] sm:$0xff]
    %v4445 = vld [vmem:[#allocation4 + $0x3c8] sm:$0xff]
    %v4446 = vld [vmem:[#allocation4 + $0x3d0] sm:$0xff]
    %v4447 = vld [vmem:[#allocation4 + $0x3d8] sm:$0xff]
    %v4448 = vld [vmem:[#allocation4 + $0x3e0] sm:$0xff]
    %v4449 = vld [vmem:[#allocation4 + $0x3e8] sm:$0xff]
    %v4450 = vld [vmem:[#allocation4 + $0x3f0] sm:$0xff]
    %v4451 = vld [vmem:[#allocation4 + $0x3f8] sm:$0xff]
    %v4452 = vld [vmem:[%s9] sm:$0x1]
    %v4454 = vlaneseq
    %v4455 = vshrl.u32 %v4454, 7
    %v4456 = vsub.s32 0, %v4455
    %v4457 = vrot.slane %v4452, %v4456
    %4459 = vmatprep.subr.mxu0 0.0
    %4460 = vmatpush1.msra.mxu0 %v4324
    %4461 = vmatprep.subr.mxu0 0.0
    %4462 = vmatpush1.msra.mxu0 %v4325
    %4463 = vmatprep.subr.mxu0 0.0
    %4464 = vmatpush1.msra.mxu0 %v4326
    %4465 = vmatprep.subr.mxu0 0.0
    %4466 = vmatpush1.msra.mxu0 %v4327
    %4467 = vmatprep.subr.mxu0 0.0
    %4468 = vmatpush1.msra.mxu0 %v4328
    %4469 = vmatprep.subr.mxu0 0.0
    %4470 = vmatpush1.msra.mxu0 %v4329
    %4471 = vmatprep.subr.mxu0 0.0
    %4472 = vmatpush1.msra.mxu0 %v4330
    %4473 = vmatprep.subr.mxu0 0.0
    %4474 = vmatpush1.msra.mxu0 %v4331
    %4475 = vmatprep.subr.mxu0 0.0
    %4476 = vmatpush1.msra.mxu0 %v4332
    %4477 = vmatprep.subr.mxu0 0.0
    %4478 = vmatpush1.msra.mxu0 %v4333
    %4479 = vmatprep.subr.mxu0 0.0
    %4480 = vmatpush1.msra.mxu0 %v4334
    %4481 = vmatprep.subr.mxu0 0.0
    %4482 = vmatpush1.msra.mxu0 %v4335
    %4483 = vmatprep.subr.mxu0 0.0
    %4484 = vmatpush1.msra.mxu0 %v4336
    %4485 = vmatprep.subr.mxu0 0.0
    %4486 = vmatpush1.msra.mxu0 %v4337
    %4487 = vmatprep.subr.mxu0 0.0
    %4488 = vmatpush1.msra.mxu0 %v4338
    %4489 = vmatprep.subr.mxu0 0.0
    %4490 = vmatpush1.msra.mxu0 %v4339
    %4491 = vmatprep.subr.mxu0 0.0
    %4492 = vmatpush1.msra.mxu0 %v4340
    %4493 = vmatprep.subr.mxu0 0.0
    %4494 = vmatpush1.msra.mxu0 %v4341
    %4495 = vmatprep.subr.mxu0 0.0
    %4496 = vmatpush1.msra.mxu0 %v4342
    %4497 = vmatprep.subr.mxu0 0.0
    %4498 = vmatpush1.msra.mxu0 %v4343
    %4499 = vmatprep.subr.mxu0 0.0
    %4500 = vmatpush1.msra.mxu0 %v4344
    %4501 = vmatprep.subr.mxu0 0.0
    %4502 = vmatpush1.msra.mxu0 %v4345
    %4503 = vmatprep.subr.mxu0 0.0
    %4504 = vmatpush1.msra.mxu0 %v4346
    %4505 = vmatprep.subr.mxu0 0.0
    %4506 = vmatpush1.msra.mxu0 %v4347
    %4507 = vmatprep.subr.mxu0 0.0
    %4508 = vmatpush1.msra.mxu0 %v4348
    %4509 = vmatprep.subr.mxu0 0.0
    %4510 = vmatpush1.msra.mxu0 %v4349
    %4511 = vmatprep.subr.mxu0 0.0
    %4512 = vmatpush1.msra.mxu0 %v4350
    %4513 = vmatprep.subr.mxu0 0.0
    %4514 = vmatpush1.msra.mxu0 %v4351
    %4515 = vmatprep.subr.mxu0 0.0
    %4516 = vmatpush1.msra.mxu0 %v4352
    %4517 = vmatprep.subr.mxu0 0.0
    %4518 = vmatpush1.msra.mxu0 %v4353
    %4519 = vmatprep.subr.mxu0 0.0
    %4520 = vmatpush1.msra.mxu0 %v4354
    %4521 = vmatprep.subr.mxu0 0.0
    %4522 = vmatpush1.msra.mxu0 %v4355
    %4523 = vmatprep.mubr.f32.mxu0 %v4317
    %4524 = vmatmul.mubr.f32.gmra.mrb[0].mxu0 %v4316
    %v4525 = vpop.f32.mrb[0].mxu0
    %v4526 = vadd.f32 %v4457, %v4525
    %v4527 = vpop.f32.mrb[0].mxu0
    %4528 = vdwg.mxu0
    %4529 = vmatprep.subr.mxu0 0.0
    %4530 = vmatpush1.msra.mxu0 %v4356
    %4531 = vmatprep.subr.mxu0 0.0
    %4532 = vmatpush1.msra.mxu0 %v4357
    %4533 = vmatprep.subr.mxu0 0.0
    %4534 = vmatpush1.msra.mxu0 %v4358
    %4535 = vmatprep.subr.mxu0 0.0
    %4536 = vmatpush1.msra.mxu0 %v4359
    %4537 = vmatprep.subr.mxu0 0.0
    %4538 = vmatpush1.msra.mxu0 %v4360
    %4539 = vmatprep.subr.mxu0 0.0
    %4540 = vmatpush1.msra.mxu0 %v4361
    %4541 = vmatprep.subr.mxu0 0.0
    %4542 = vmatpush1.msra.mxu0 %v4362
    %4543 = vmatprep.subr.mxu0 0.0
    %4544 = vmatpush1.msra.mxu0 %v4363
    %4545 = vmatprep.subr.mxu0 0.0
    %4546 = vmatpush1.msra.mxu0 %v4364
    %4547 = vmatprep.subr.mxu0 0.0
    %4548 = vmatpush1.msra.mxu0 %v4365
    %4549 = vmatprep.subr.mxu0 0.0
    %4550 = vmatpush1.msra.mxu0 %v4366
    %4551 = vmatprep.subr.mxu0 0.0
    %4552 = vmatpush1.msra.mxu0 %v4367
    %4553 = vmatprep.subr.mxu0 0.0
    %4554 = vmatpush1.msra.mxu0 %v4368
    %4555 = vmatprep.subr.mxu0 0.0
    %4556 = vmatpush1.msra.mxu0 %v4369
    %4557 = vmatprep.subr.mxu0 0.0
    %4558 = vmatpush1.msra.mxu0 %v4370
    %4559 = vmatprep.subr.mxu0 0.0
    %4560 = vmatpush1.msra.mxu0 %v4371
    %4561 = vmatprep.subr.mxu0 0.0
    %4562 = vmatpush1.msra.mxu0 %v4372
    %4563 = vmatprep.subr.mxu0 0.0
    %4564 = vmatpush1.msra.mxu0 %v4373
    %4565 = vmatprep.subr.mxu0 0.0
    %4566 = vmatpush1.msra.mxu0 %v4374
    %4567 = vmatprep.subr.mxu0 0.0
    %4568 = vmatpush1.msra.mxu0 %v4375
    %4569 = vmatprep.subr.mxu0 0.0
    %4570 = vmatpush1.msra.mxu0 %v4376
    %4571 = vmatprep.subr.mxu0 0.0
    %4572 = vmatpush1.msra.mxu0 %v4377
    %4573 = vmatprep.subr.mxu0 0.0
    %4574 = vmatpush1.msra.mxu0 %v4378
    %4575 = vmatprep.subr.mxu0 0.0
    %4576 = vmatpush1.msra.mxu0 %v4379
    %4577 = vmatprep.subr.mxu0 0.0
    %4578 = vmatpush1.msra.mxu0 %v4380
    %4579 = vmatprep.subr.mxu0 0.0
    %4580 = vmatpush1.msra.mxu0 %v4381
    %4581 = vmatprep.subr.mxu0 0.0
    %4582 = vmatpush1.msra.mxu0 %v4382
    %4583 = vmatprep.subr.mxu0 0.0
    %4584 = vmatpush1.msra.mxu0 %v4383
    %4585 = vmatprep.subr.mxu0 0.0
    %4586 = vmatpush1.msra.mxu0 %v4384
    %4587 = vmatprep.subr.mxu0 0.0
    %4588 = vmatpush1.msra.mxu0 %v4385
    %4589 = vmatprep.subr.mxu0 0.0
    %4590 = vmatpush1.msra.mxu0 %v4386
    %4591 = vmatprep.subr.mxu0 0.0
    %4592 = vmatpush1.msra.mxu0 %v4387
    %4593 = vmatprep.mubr.f32.mxu0 %v4319
    %4594 = vmatmul.mubr.f32.gmra.mrb[0].mxu0 %v4318
    %v4595 = vpop.f32.mrb[0].mxu0
    %v4596 = vadd.f32 %v4526, %v4595
    %v4597 = vpop.f32.mrb[0].mxu0
    %4598 = vdwg.mxu0
    %4599 = vmatprep.subr.mxu0 0.0
    %4600 = vmatpush1.msra.mxu0 %v4388
    %4601 = vmatprep.subr.mxu0 0.0
    %4602 = vmatpush1.msra.mxu0 %v4389
    %4603 = vmatprep.subr.mxu0 0.0
    %4604 = vmatpush1.msra.mxu0 %v4390
    %4605 = vmatprep.subr.mxu0 0.0
    %4606 = vmatpush1.msra.mxu0 %v4391
    %4607 = vmatprep.subr.mxu0 0.0
    %4608 = vmatpush1.msra.mxu0 %v4392
    %4609 = vmatprep.subr.mxu0 0.0
    %4610 = vmatpush1.msra.mxu0 %v4393
    %4611 = vmatprep.subr.mxu0 0.0
    %4612 = vmatpush1.msra.mxu0 %v4394
    %4613 = vmatprep.subr.mxu0 0.0
    %4614 = vmatpush1.msra.mxu0 %v4395
    %4615 = vmatprep.subr.mxu0 0.0
    %4616 = vmatpush1.msra.mxu0 %v4396
    %4617 = vmatprep.subr.mxu0 0.0
    %4618 = vmatpush1.msra.mxu0 %v4397
    %4619 = vmatprep.subr.mxu0 0.0
    %4620 = vmatpush1.msra.mxu0 %v4398
    %4621 = vmatprep.subr.mxu0 0.0
    %4622 = vmatpush1.msra.mxu0 %v4399
    %4623 = vmatprep.subr.mxu0 0.0
    %4624 = vmatpush1.msra.mxu0 %v4400
    %4625 = vmatprep.subr.mxu0 0.0
    %4626 = vmatpush1.msra.mxu0 %v4401
    %4627 = vmatprep.subr.mxu0 0.0
    %4628 = vmatpush1.msra.mxu0 %v4402
    %4629 = vmatprep.subr.mxu0 0.0
    %4630 = vmatpush1.msra.mxu0 %v4403
    %4631 = vmatprep.subr.mxu0 0.0
    %4632 = vmatpush1.msra.mxu0 %v4404
    %4633 = vmatprep.subr.mxu0 0.0
    %4634 = vmatpush1.msra.mxu0 %v4405
    %4635 = vmatprep.subr.mxu0 0.0
    %4636 = vmatpush1.msra.mxu0 %v4406
    %4637 = vmatprep.subr.mxu0 0.0
    %4638 = vmatpush1.msra.mxu0 %v4407
    %4639 = vmatprep.subr.mxu0 0.0
    %4640 = vmatpush1.msra.mxu0 %v4408
    %4641 = vmatprep.subr.mxu0 0.0
    %4642 = vmatpush1.msra.mxu0 %v4409
    %4643 = vmatprep.subr.mxu0 0.0
    %4644 = vmatpush1.msra.mxu0 %v4410
    %4645 = vmatprep.subr.mxu0 0.0
    %4646 = vmatpush1.msra.mxu0 %v4411
    %4647 = vmatprep.subr.mxu0 0.0
    %4648 = vmatpush1.msra.mxu0 %v4412
    %4649 = vmatprep.subr.mxu0 0.0
    %4650 = vmatpush1.msra.mxu0 %v4413
    %4651 = vmatprep.subr.mxu0 0.0
    %4652 = vmatpush1.msra.mxu0 %v4414
    %4653 = vmatprep.subr.mxu0 0.0
    %4654 = vmatpush1.msra.mxu0 %v4415
    %4655 = vmatprep.subr.mxu0 0.0
    %4656 = vmatpush1.msra.mxu0 %v4416
    %4657 = vmatprep.subr.mxu0 0.0
    %4658 = vmatpush1.msra.mxu0 %v4417
    %4659 = vmatprep.subr.mxu0 0.0
    %4660 = vmatpush1.msra.mxu0 %v4418
    %4661 = vmatprep.subr.mxu0 0.0
    %4662 = vmatpush1.msra.mxu0 %v4419
    %4663 = vmatprep.mubr.f32.mxu0 %v4321
    %4664 = vmatmul.mubr.f32.gmra.mrb[0].mxu0 %v4320
    %v4665 = vpop.f32.mrb[0].mxu0
    %v4666 = vadd.f32 %v4596, %v4665
    %v4667 = vpop.f32.mrb[0].mxu0
    %4668 = vdwg.mxu0
    %4669 = vmatprep.subr.mxu0 0.0
    %4670 = vmatpush1.msra.mxu0 %v4420
    %4671 = vmatprep.subr.mxu0 0.0
    %4672 = vmatpush1.msra.mxu0 %v4421
    %4673 = vmatprep.subr.mxu0 0.0
    %4674 = vmatpush1.msra.mxu0 %v4422
    %4675 = vmatprep.subr.mxu0 0.0
    %4676 = vmatpush1.msra.mxu0 %v4423
    %4677 = vmatprep.subr.mxu0 0.0
    %4678 = vmatpush1.msra.mxu0 %v4424
    %4679 = vmatprep.subr.mxu0 0.0
    %4680 = vmatpush1.msra.mxu0 %v4425
    %4681 = vmatprep.subr.mxu0 0.0
    %4682 = vmatpush1.msra.mxu0 %v4426
    %4683 = vmatprep.subr.mxu0 0.0
    %4684 = vmatpush1.msra.mxu0 %v4427
    %4685 = vmatprep.subr.mxu0 0.0
    %4686 = vmatpush1.msra.mxu0 %v4428
    %4687 = vmatprep.subr.mxu0 0.0
    %4688 = vmatpush1.msra.mxu0 %v4429
    %4689 = vmatprep.subr.mxu0 0.0
    %4690 = vmatpush1.msra.mxu0 %v4430
    %4691 = vmatprep.subr.mxu0 0.0
    %4692 = vmatpush1.msra.mxu0 %v4431
    %4693 = vmatprep.subr.mxu0 0.0
    %4694 = vmatpush1.msra.mxu0 %v4432
    %4695 = vmatprep.subr.mxu0 0.0
    %4696 = vmatpush1.msra.mxu0 %v4433
    %4697 = vmatprep.subr.mxu0 0.0
    %4698 = vmatpush1.msra.mxu0 %v4434
    %4699 = vmatprep.subr.mxu0 0.0
    %4700 = vmatpush1.msra.mxu0 %v4435
    %4701 = vmatprep.subr.mxu0 0.0
    %4702 = vmatpush1.msra.mxu0 %v4436
    %4703 = vmatprep.subr.mxu0 0.0
    %4704 = vmatpush1.msra.mxu0 %v4437
    %4705 = vmatprep.subr.mxu0 0.0
    %4706 = vmatpush1.msra.mxu0 %v4438
    %4707 = vmatprep.subr.mxu0 0.0
    %4708 = vmatpush1.msra.mxu0 %v4439
    %4709 = vmatprep.subr.mxu0 0.0
    %4710 = vmatpush1.msra.mxu0 %v4440
    %4711 = vmatprep.subr.mxu0 0.0
    %4712 = vmatpush1.msra.mxu0 %v4441
    %4713 = vmatprep.subr.mxu0 0.0
    %4714 = vmatpush1.msra.mxu0 %v4442
    %4715 = vmatprep.subr.mxu0 0.0
    %4716 = vmatpush1.msra.mxu0 %v4443
    %4717 = vmatprep.subr.mxu0 0.0
    %4718 = vmatpush1.msra.mxu0 %v4444
    %4719 = vmatprep.subr.mxu0 0.0
    %4720 = vmatpush1.msra.mxu0 %v4445
    %4721 = vmatprep.subr.mxu0 0.0
    %4722 = vmatpush1.msra.mxu0 %v4446
    %4723 = vmatprep.subr.mxu0 0.0
    %4724 = vmatpush1.msra.mxu0 %v4447
    %4725 = vmatprep.subr.mxu0 0.0
    %4726 = vmatpush1.msra.mxu0 %v4448
    %4727 = vmatprep.subr.mxu0 0.0
    %4728 = vmatpush1.msra.mxu0 %v4449
    %4729 = vmatprep.subr.mxu0 0.0
    %4730 = vmatpush1.msra.mxu0 %v4450
    %4731 = vmatprep.subr.mxu0 0.0
    %4732 = vmatpush1.msra.mxu0 %v4451
    %4733 = vmatprep.mubr.f32.mxu0 %v4323
    %4734 = vmatmul.mubr.f32.gmra.mrb[0].mxu0 %v4322
    %v4735 = vpop.f32.mrb[0].mxu0
    %v4736 = vadd.f32 %v4666, %v4735
    %v4737 = vpop.f32.mrb[0].mxu0
    %4738 = vdwg.mxu0
    %4739 = vst [vmem:[%s11] sm:$0xff] %v4736
    // Predicated region
    $region58: #{forward.1} parent=1 // pred_check
      _
    $region59: #{forward.1} parent=1 // pred_check_branch
      %4741 = sbr.rel (0) target = $region61
    $region60: #{forward.1} parent=1 // pred_region
      _
    $region61: #{forward.1} parent=1 // pred_fallthru
      _
    // Predicated region
    $region62: #{forward.1} parent=1 // pred_check
      _
    $region63: #{forward.1} parent=1 // pred_check_branch
      %4743 = sbr.rel (0) target = $region65
    $region64: #{forward.1} parent=1 // pred_region
      _
    $region65: #{forward.1} parent=1 // pred_fallthru
      _
    %4744 = vsyncpa [#allocation7], 1
    %4745 = vsyncpa [#allocation9], 1
  %4746 = vsyncmov [#allocation5]
  %s4747 = vpop.sfrf %4746
  %p4748 = scmp.eq.s32.totalorder %s4747, 0
  %p4749 = pneg %p4748
  %4751 = shalt.err (%p4749)

</llo_original>
